<compile_context>
chip_gen: v5e
topology: v5e:2x2
jax: 0.10.0
libtpu: 0.0.40
codegen_flags: <defaults>
</compile_context>

<pallas_src>
import math

import jax
import jax.numpy as jnp
from jax.experimental import pallas as pl
from jax.experimental.pallas import tpu as pltpu

NUM_HEADS = 2
NEG_INF = -1e9

WEIGHT_NAMES = ("wqkv", "bqkv", "wo", "bo",
                "ln1g", "ln1b", "w1", "b1", "w2", "b2", "ln2g", "ln2b")


def _layer_norm(x, gamma, beta, eps=1e-12):
    x = x.astype(jnp.float32)
    mean = jnp.mean(x, axis=-1, keepdims=True)
    var = jnp.mean((x - mean) ** 2, axis=-1, keepdims=True)
    return (x - mean) * jax.lax.rsqrt(var + eps) * gamma + beta


def encoder_pool_kernel(x_ref, bias_ref,
                        wqkv_ref, bqkv_ref, wo_ref, bo_ref,
                        ln1g_ref, ln1b_ref,
                        w1_ref, b1_ref, w2_ref, b2_ref,
                        ln2g_ref, ln2b_ref,
                        out_ref):
    TB, S, H = x_ref.shape
    NH = NUM_HEADS
    hd = H // NH
    M = TB * S

    x_bf = x_ref[...].reshape(M, H)                      # bf16 activations

    # ---- fused QKV projection: single (M, H) @ (H, 3H) MXU pass ----------
    qkv = jnp.dot(x_bf, wqkv_ref[...], preferred_element_type=jnp.float32)
    qkv = (qkv + bqkv_ref[...]).astype(jnp.bfloat16)     # (M, 3H)

    def to_heads(t2d):                                   # (M, H) -> (NH*TB, S, hd)
        t3d = t2d.reshape(TB, S, H)
        return jnp.concatenate(
            [t3d[:, :, h * hd:(h + 1) * hd] for h in range(NH)], axis=0)

    q = to_heads(qkv[:, 0 * H:1 * H])                    # Q/K/V land on
    k = to_heads(qkv[:, 1 * H:2 * H])                    # H-aligned column
    v = to_heads(qkv[:, 2 * H:3 * H])                    # blocks of wqkv

    scale = 1.0 / math.sqrt(hd)
    scores = jnp.einsum('bqd,bkd->bqk', q, k,
                        preferred_element_type=jnp.float32) * scale

    # additive mask bias (precomputed in the wrapper), replicated per head;
    # head-batched order is (head, batch) = concatenation order of to_heads.
    bias = bias_ref[...]                                             # (TB, S)
    bias = jnp.broadcast_to(bias[None, :, None, :],
                            (NH, TB, 1, S)).reshape(NH * TB, 1, S)
    scores = scores + bias

    scores = scores - jnp.max(scores, axis=-1, keepdims=True)
    p = jnp.exp(scores)
    p = p * pl.reciprocal(jnp.sum(p, axis=-1, keepdims=True), approx=True)

    ctx = jnp.einsum('bqk,bkd->bqd', p.astype(jnp.bfloat16), v,
                     preferred_element_type=jnp.float32)   # (NH*TB, S, hd)

    # repack heads to a lane-dense (M, H) slab: one XLU lane concat
    ctx = ctx.reshape(NH, TB, S, hd)
    ctx = jnp.concatenate([ctx[h] for h in range(NH)], axis=-1)  # (TB, S, H)
    ctx = ctx.reshape(M, H).astype(jnp.bfloat16)

    # ---- output projection: single (M, H) @ (H, H) matmul ----------------
    attn = jnp.dot(ctx, wo_ref[...],
                   preferred_element_type=jnp.float32) + bo_ref[...]

    h1 = _layer_norm(x_bf.astype(jnp.float32) + attn,
                     ln1g_ref[...], ln1b_ref[...])
    h1_bf = h1.astype(jnp.bfloat16)                      # bf16 residual carry

    # ---- feed-forward -----------------------------------------------------
    ff = jnp.dot(h1_bf, w1_ref[...],
                 preferred_element_type=jnp.float32) + b1_ref[...]
    # TODO(synk): HF BERT default is the exact erf GELU; tanh approximation kept.
    ff = jax.nn.gelu(ff, approximate=True)
    ff = jnp.dot(ff.astype(jnp.bfloat16), w2_ref[...],
                 preferred_element_type=jnp.float32) + b2_ref[...]
    h2 = _layer_norm(h1_bf.astype(jnp.float32) + ff,
                     ln2g_ref[...], ln2b_ref[...])       # (M, H) f32

    # ---- torch.max(last_hidden_state, dim=1): max over sequence ----------
    out_ref[...] = jnp.max(h2.reshape(TB, S, H), axis=1)  # dense (TB, H) store


def _pack_weights(params):
    """Pack fused QKV weights as (H, 3H); bf16 for MXU operands, f32 elsewhere."""
    wqkv = jnp.concatenate([params["wq"], params["wk"], params["wv"]], axis=1)
    bqkv = jnp.concatenate([params["bq"], params["bk"], params["bv"]], axis=1)
    return {
        "wqkv": wqkv.astype(jnp.bfloat16),        # (H, 3H)
        "bqkv": bqkv.astype(jnp.float32),         # (1, 3H)
        "wo": params["wo"].astype(jnp.bfloat16),  # (H, H)
        "bo": params["bo"].astype(jnp.float32),
        "ln1g": params["ln1g"].astype(jnp.float32),
        "ln1b": params["ln1b"].astype(jnp.float32),
        "w1": params["w1"].astype(jnp.bfloat16),
        "b1": params["b1"].astype(jnp.float32),
        "w2": params["w2"].astype(jnp.bfloat16),
        "b2": params["b2"].astype(jnp.float32),
        "ln2g": params["ln2g"].astype(jnp.float32),
        "ln2b": params["ln2b"].astype(jnp.float32),
    }


def bert_seq_context(input_ids, attention_mask, params, tile_b=None):
    """JAX equivalent of BertSeqContext.forward: returns pooled_output [B, H]."""
    B, S = input_ids.shape
    H = params["word_emb"].shape[1]
    assert H % NUM_HEADS == 0

    # Embedding lookup + embedding layernorm (plain-JAX glue).
    # TODO(synk): fuse the row gather + embedding LN into the kernel via
    #             PrefetchScalarGridSpec + pl.Element row gather.
    emb = (params["word_emb"][input_ids]
           + params["pos_emb"][None, :S, :]
           + params["type_emb"][0][None, None, :])
    emb = _layer_norm(emb, params["emb_ln_g"], params["emb_ln_b"])
    x = emb.astype(jnp.bfloat16)                                   # (B, S, H)

    # Additive attention-mask bias, computed once in the wrapper.
    bias = (1.0 - attention_mask.astype(jnp.float32)) * NEG_INF    # (B, S)

    # Fold batch into the MXU M dimension: target M = TB*S >= 128 rows and
    # keep TB a multiple of 8 so the pooled (TB, H) output block is
    # sublane-dense.
    if tile_b is None:
        tile_b = max(8, -(-128 // S))
    TB = ((max(1, int(tile_b)) + 7) // 8) * 8
    Bp = -(-B // TB) * TB
    if Bp != B:
        x = jnp.pad(x, ((0, Bp - B), (0, 0), (0, 0)))
        bias = jnp.pad(bias, ((0, Bp - B), (0, 0)))

    packed = _pack_weights(params)
    weight_args = [packed[n] for n in WEIGHT_NAMES]

    def full_spec(a):
        # Grid-invariant block (index_map always 0): fetched once, stays in VMEM.
        return pl.BlockSpec(a.shape, lambda b, nd=a.ndim: (0,) * nd)

    in_specs = ([pl.BlockSpec((TB, S, H), lambda b: (b, 0, 0)),    # x block
                 pl.BlockSpec((TB, S), lambda b: (b, 0))]          # mask-bias block
                + [full_spec(a) for a in weight_args])

    # VMEM budget ~3/4 of physical: ~96 MiB on v5e/v6e (128 MiB), ~48 MiB on
    # v7x (64 MiB) — replaces the hard-coded 32 MiB cap.
    try:
        vmem_cap = int(pltpu.get_tpu_info().vmem_capacity_bytes)
    except Exception:
        vmem_cap = 64 * 1024 * 1024
    vmem_limit = min(vmem_cap * 3 // 4, 96 * 1024 * 1024)

    out = pl.pallas_call(
        encoder_pool_kernel,
        out_shape=jax.ShapeDtypeStruct((Bp, H), jnp.float32),
        grid=(Bp // TB,),
        in_specs=in_specs,
        out_specs=pl.BlockSpec((TB, H), lambda b: (b, 0)),
        compiler_params=pltpu.CompilerParams(
            dimension_semantics=("parallel",),
            vmem_limit_bytes=int(vmem_limit)),
    )(x, bias, *weight_args)

    return out[:B]                        # pooled_output (B, H)


def init_params(key, vocab_size, max_pos, hidden, ffn):
    ks = iter(jax.random.split(key, 32))

    def nrm(shape, scale=0.02):
        return (scale * jax.random.normal(next(ks), shape)).astype(jnp.float32)

    ones = lambda s: jnp.ones(s, jnp.float32)
    zeros = lambda s: jnp.zeros(s, jnp.float32)

    return {
        "word_emb": nrm((vocab_size, hidden)),
        "pos_emb": nrm((max_pos, hidden)),
        "type_emb": nrm((2, hidden)),
        "emb_ln_g": ones((1, hidden)), "emb_ln_b": zeros((1, hidden)),
        "wq": nrm((hidden, hidden)), "bq": zeros((1, hidden)),
        "wk": nrm((hidden, hidden)), "bk": zeros((1, hidden)),
        "wv": nrm((hidden, hidden)), "bv": zeros((1, hidden)),
        "wo": nrm((hidden, hidden)), "bo": zeros((1, hidden)),
        "ln1g": ones((1, hidden)), "ln1b": zeros((1, hidden)),
        "w1": nrm((hidden, ffn)), "b1": zeros((1, ffn)),
        "w2": nrm((ffn, hidden)), "b2": zeros((1, hidden)),
        "ln2g": ones((1, hidden)), "ln2b": zeros((1, hidden)),
    }


if __name__ == "__main__":
    B, S, H, FFN = 4, 8, 32, 64
    VOCAB, MAX_POS = 50, 64

    key = jax.random.PRNGKey(0)
    k_ids, k_params = jax.random.split(key)

    input_ids = jax.random.randint(k_ids, (B, S), 0, VOCAB, dtype=jnp.int32)
    attention_mask = jnp.array(
        [[1, 1, 1, 1, 1, 1, 1, 1],
         [1, 1, 1, 1, 1, 1, 0, 0],
         [1, 1, 1, 1, 1, 1, 1, 1],
         [1, 1, 1, 1, 0, 0, 0, 0]], dtype=jnp.int32)

    params = init_params(k_params, VOCAB, MAX_POS, H, FFN)

    pooled = bert_seq_context(input_ids, attention_mask, params)
    jax.block_until_ready(pooled)
    assert pooled.shape == (B, H)
    assert bool(jnp.all(jnp.isfinite(pooled)))
    print("KERNEL_OK")
</pallas_src>

<mosaic_0001>
module attributes {stable_mosaic.version = 11 : i64} {
  func.func @encoder_pool_kernel(%arg0: i32, %arg1: memref<16x8x32xbf16, #tpu.memory_space<vmem>>, %arg2: memref<16x8xf32, #tpu.memory_space<vmem>>, %arg3: memref<32x96xbf16, #tpu.memory_space<vmem>>, %arg4: memref<1x96xf32, #tpu.memory_space<vmem>>, %arg5: memref<32x32xbf16, #tpu.memory_space<vmem>>, %arg6: memref<1x32xf32, #tpu.memory_space<vmem>>, %arg7: memref<1x32xf32, #tpu.memory_space<vmem>>, %arg8: memref<1x32xf32, #tpu.memory_space<vmem>>, %arg9: memref<32x64xbf16, #tpu.memory_space<vmem>>, %arg10: memref<1x64xf32, #tpu.memory_space<vmem>>, %arg11: memref<64x32xbf16, #tpu.memory_space<vmem>>, %arg12: memref<1x32xf32, #tpu.memory_space<vmem>>, %arg13: memref<1x32xf32, #tpu.memory_space<vmem>>, %arg14: memref<1x32xf32, #tpu.memory_space<vmem>>, %arg15: memref<16x32xf32, #tpu.memory_space<vmem>>) attributes {dimension_semantics = [#tpu.dimension_semantics<parallel>], iteration_bounds = array<i64: 1>, scalar_prefetch = 0 : i64, scratch_operands = 0 : i64, tpu.core_type = #tpu.core_type<tc>, window_params = [{transform_indices = @transform_0, window_bounds = array<i64: 16, 8, 32>}, {transform_indices = @transform_1, window_bounds = array<i64: 16, 8>}, {pipeline_mode = #tpu.pipeline_mode<synchronous>, transform_indices = @transform_2, window_bounds = array<i64: 32, 96>}, {pipeline_mode = #tpu.pipeline_mode<synchronous>, transform_indices = @transform_3, window_bounds = array<i64: 1, 96>}, {pipeline_mode = #tpu.pipeline_mode<synchronous>, transform_indices = @transform_4, window_bounds = array<i64: 32, 32>}, {pipeline_mode = #tpu.pipeline_mode<synchronous>, transform_indices = @transform_5, window_bounds = array<i64: 1, 32>}, {pipeline_mode = #tpu.pipeline_mode<synchronous>, transform_indices = @transform_6, window_bounds = array<i64: 1, 32>}, {pipeline_mode = #tpu.pipeline_mode<synchronous>, transform_indices = @transform_7, window_bounds = array<i64: 1, 32>}, {pipeline_mode = #tpu.pipeline_mode<synchronous>, transform_indices = @transform_8, window_bounds = array<i64: 32, 64>}, {pipeline_mode = #tpu.pipeline_mode<synchronous>, transform_indices = @transform_9, window_bounds = array<i64: 1, 64>}, {pipeline_mode = #tpu.pipeline_mode<synchronous>, transform_indices = @transform_10, window_bounds = array<i64: 64, 32>}, {pipeline_mode = #tpu.pipeline_mode<synchronous>, transform_indices = @transform_11, window_bounds = array<i64: 1, 32>}, {pipeline_mode = #tpu.pipeline_mode<synchronous>, transform_indices = @transform_12, window_bounds = array<i64: 1, 32>}, {pipeline_mode = #tpu.pipeline_mode<synchronous>, transform_indices = @transform_13, window_bounds = array<i64: 1, 32>}, {transform_indices = @transform_14, window_bounds = array<i64: 16, 32>}]} {
    %c0 = arith.constant 0 : index
    %c0_0 = arith.constant 0 : index
    %c0_1 = arith.constant 0 : index
    %0 = vector.load %arg1[%c0, %c0_0, %c0_1] : memref<16x8x32xbf16, #tpu.memory_space<vmem>>, vector<16x8x32xbf16>
    %1 = vector.shape_cast %0 : vector<16x8x32xbf16> to vector<128x32xbf16>
    %c0_2 = arith.constant 0 : index
    %c0_3 = arith.constant 0 : index
    %2 = vector.load %arg3[%c0_2, %c0_3] : memref<32x96xbf16, #tpu.memory_space<vmem>>, vector<32x96xbf16>
    %cst = arith.constant dense<0.000000e+00> : vector<128x96xf32>
    %3 = tpu.matmul %1, %2, %cst {dimension_numbers = #tpu.dot_dimension_numbers<[1], [0], [0], [1], [0, 0, 1, 1], [], []>} : vector<128x32xbf16>, vector<32x96xbf16>, vector<128x96xf32> -> vector<128x96xf32>
    %c0_4 = arith.constant 0 : index
    %c0_5 = arith.constant 0 : index
    %4 = vector.load %arg4[%c0_4, %c0_5] : memref<1x96xf32, #tpu.memory_space<vmem>>, vector<1x96xf32>
    %5 = vector.broadcast %4 : vector<1x96xf32> to vector<128x96xf32>
    %6 = arith.addf %3, %5 : vector<128x96xf32>
    %7 = arith.truncf %6 : vector<128x96xf32> to vector<128x96xbf16>
    %8 = vector.extract_strided_slice %7 {offsets = [0, 0], sizes = [128, 32], strides = [1, 1]} : vector<128x96xbf16> to vector<128x32xbf16>
    %9 = vector.shape_cast %8 : vector<128x32xbf16> to vector<16x8x32xbf16>
    %10 = vector.extract_strided_slice %9 {offsets = [0, 0, 0], sizes = [16, 8, 16], strides = [1, 1, 1]} : vector<16x8x32xbf16> to vector<16x8x16xbf16>
    %11 = vector.extract_strided_slice %9 {offsets = [0, 0, 16], sizes = [16, 8, 16], strides = [1, 1, 1]} : vector<16x8x32xbf16> to vector<16x8x16xbf16>
    %12 = tpu.concatenate %10, %11 in 0 : vector<16x8x16xbf16>, vector<16x8x16xbf16> -> vector<32x8x16xbf16>
    %13 = vector.extract_strided_slice %7 {offsets = [0, 32], sizes = [128, 32], strides = [1, 1]} : vector<128x96xbf16> to vector<128x32xbf16>
    %14 = vector.shape_cast %13 : vector<128x32xbf16> to vector<16x8x32xbf16>
    %15 = vector.extract_strided_slice %14 {offsets = [0, 0, 0], sizes = [16, 8, 16], strides = [1, 1, 1]} : vector<16x8x32xbf16> to vector<16x8x16xbf16>
    %16 = vector.extract_strided_slice %14 {offsets = [0, 0, 16], sizes = [16, 8, 16], strides = [1, 1, 1]} : vector<16x8x32xbf16> to vector<16x8x16xbf16>
    %17 = tpu.concatenate %15, %16 in 0 : vector<16x8x16xbf16>, vector<16x8x16xbf16> -> vector<32x8x16xbf16>
    %18 = vector.extract_strided_slice %7 {offsets = [0, 64], sizes = [128, 32], strides = [1, 1]} : vector<128x96xbf16> to vector<128x32xbf16>
    %19 = vector.shape_cast %18 : vector<128x32xbf16> to vector<16x8x32xbf16>
    %20 = vector.extract_strided_slice %19 {offsets = [0, 0, 0], sizes = [16, 8, 16], strides = [1, 1, 1]} : vector<16x8x32xbf16> to vector<16x8x16xbf16>
    %21 = vector.extract_strided_slice %19 {offsets = [0, 0, 16], sizes = [16, 8, 16], strides = [1, 1, 1]} : vector<16x8x32xbf16> to vector<16x8x16xbf16>
    %22 = tpu.concatenate %20, %21 in 0 : vector<16x8x16xbf16>, vector<16x8x16xbf16> -> vector<32x8x16xbf16>
    "tpu.trace_start"() <{level = 10 : i32, message = "bqd,bkd->bqk"}> : () -> ()
    %cst_6 = arith.constant dense<0.000000e+00> : vector<32x8x8xf32>
    %23 = tpu.matmul %12, %17, %cst_6 {dimension_numbers = #tpu.dot_dimension_numbers<[2], [2], [1], [1], [0, 0, 0, 1, 1, 1], [0], [0]>} : vector<32x8x16xbf16>, vector<32x8x16xbf16>, vector<32x8x8xf32> -> vector<32x8x8xf32>
    "tpu.trace_stop"() : () -> ()
    %cst_7 = arith.constant 2.500000e-01 : f32
    %24 = vector.broadcast %cst_7 : f32 to vector<32x8x8xf32>
    %25 = arith.mulf %23, %24 : vector<32x8x8xf32>
    %c0_8 = arith.constant 0 : index
    %c0_9 = arith.constant 0 : index
    %26 = vector.load %arg2[%c0_8, %c0_9] : memref<16x8xf32, #tpu.memory_space<vmem>>, vector<16x8xf32>
    %27 = vector.shape_cast %26 : vector<16x8xf32> to vector<1x16x1x8xf32>
    %28 = vector.shape_cast %27 : vector<1x16x1x8xf32> to vector<1x16x1x8xf32>
    %29 = vector.broadcast %28 : vector<1x16x1x8xf32> to vector<2x16x1x8xf32>
    %30 = vector.shape_cast %29 : vector<2x16x1x8xf32> to vector<32x1x8xf32>
    %31 = vector.broadcast %30 : vector<32x1x8xf32> to vector<32x8x8xf32>
    %32 = arith.addf %25, %31 : vector<32x8x8xf32>
    %cst_10 = arith.constant dense<0xFF800000> : vector<32x8xf32>
    %33 = vector.multi_reduction <maximumf>, %32, %cst_10 [2] : vector<32x8x8xf32> to vector<32x8xf32>
    %34 = vector.shape_cast %33 : vector<32x8xf32> to vector<32x8x1xf32>
    %35 = vector.broadcast %34 : vector<32x8x1xf32> to vector<32x8x8xf32>
    %36 = arith.subf %32, %35 : vector<32x8x8xf32>
    %37 = math.exp %36 : vector<32x8x8xf32>
    %cst_11 = arith.constant dense<0.000000e+00> : vector<32x8xf32>
    %38 = vector.multi_reduction <add>, %37, %cst_11 [2] : vector<32x8x8xf32> to vector<32x8xf32>
    %39 = vector.shape_cast %38 : vector<32x8xf32> to vector<32x8x1xf32>
    %40 = tpu.reciprocal %39 {approx = true} : vector<32x8x1xf32> -> vector<32x8x1xf32>
    %41 = vector.broadcast %40 : vector<32x8x1xf32> to vector<32x8x8xf32>
    %42 = arith.mulf %37, %41 : vector<32x8x8xf32>
    %43 = arith.truncf %42 : vector<32x8x8xf32> to vector<32x8x8xbf16>
    "tpu.trace_start"() <{level = 10 : i32, message = "bqk,bkd->bqd"}> : () -> ()
    %cst_12 = arith.constant dense<0.000000e+00> : vector<32x8x16xf32>
    %44 = tpu.matmul %43, %22, %cst_12 {dimension_numbers = #tpu.dot_dimension_numbers<[2], [1], [1], [2], [0, 0, 0, 1, 1, 2], [0], [0]>} : vector<32x8x8xbf16>, vector<32x8x16xbf16>, vector<32x8x16xf32> -> vector<32x8x16xf32>
    "tpu.trace_stop"() : () -> ()
    %45 = vector.shape_cast %44 : vector<32x8x16xf32> to vector<2x16x8x16xf32>
    %46 = vector.extract_strided_slice %45 {offsets = [0, 0, 0, 0], sizes = [1, 16, 8, 16], strides = [1, 1, 1, 1]} : vector<2x16x8x16xf32> to vector<1x16x8x16xf32>
    %47 = vector.shape_cast %46 : vector<1x16x8x16xf32> to vector<16x8x16xf32>
    %48 = vector.extract_strided_slice %45 {offsets = [1, 0, 0, 0], sizes = [1, 16, 8, 16], strides = [1, 1, 1, 1]} : vector<2x16x8x16xf32> to vector<1x16x8x16xf32>
    %49 = vector.shape_cast %48 : vector<1x16x8x16xf32> to vector<16x8x16xf32>
    %50 = tpu.concatenate %47, %49 in 2 : vector<16x8x16xf32>, vector<16x8x16xf32> -> vector<16x8x32xf32>
    %51 = vector.shape_cast %50 : vector<16x8x32xf32> to vector<128x32xf32>
    %52 = arith.truncf %51 : vector<128x32xf32> to vector<128x32xbf16>
    %c0_13 = arith.constant 0 : index
    %c0_14 = arith.constant 0 : index
    %53 = vector.load %arg5[%c0_13, %c0_14] : memref<32x32xbf16, #tpu.memory_space<vmem>>, vector<32x32xbf16>
    %cst_15 = arith.constant dense<0.000000e+00> : vector<128x32xf32>
    %54 = tpu.matmul %52, %53, %cst_15 {dimension_numbers = #tpu.dot_dimension_numbers<[1], [0], [0], [1], [0, 0, 1, 1], [], []>} : vector<128x32xbf16>, vector<32x32xbf16>, vector<128x32xf32> -> vector<128x32xf32>
    %c0_16 = arith.constant 0 : index
    %c0_17 = arith.constant 0 : index
    %55 = vector.load %arg6[%c0_16, %c0_17] : memref<1x32xf32, #tpu.memory_space<vmem>>, vector<1x32xf32>
    %56 = vector.broadcast %55 : vector<1x32xf32> to vector<128x32xf32>
    %57 = arith.addf %54, %56 : vector<128x32xf32>
    %58 = arith.extf %1 : vector<128x32xbf16> to vector<128x32xf32>
    %59 = arith.addf %58, %57 : vector<128x32xf32>
    %c0_18 = arith.constant 0 : index
    %c0_19 = arith.constant 0 : index
    %60 = vector.load %arg7[%c0_18, %c0_19] : memref<1x32xf32, #tpu.memory_space<vmem>>, vector<1x32xf32>
    %c0_20 = arith.constant 0 : index
    %c0_21 = arith.constant 0 : index
    %61 = vector.load %arg8[%c0_20, %c0_21] : memref<1x32xf32, #tpu.memory_space<vmem>>, vector<1x32xf32>
    %cst_22 = arith.constant dense<0.000000e+00> : vector<128xf32>
    %62 = vector.multi_reduction <add>, %59, %cst_22 [1] : vector<128x32xf32> to vector<128xf32>
    %63 = vector.shape_cast %62 : vector<128xf32> to vector<128x1xf32>
    %cst_23 = arith.constant 3.200000e+01 : f32
    %64 = vector.broadcast %cst_23 : f32 to vector<128x1xf32>
    %65 = arith.divf %63, %64 : vector<128x1xf32>
    %66 = vector.broadcast %65 : vector<128x1xf32> to vector<128x32xf32>
    %67 = arith.subf %59, %66 : vector<128x32xf32>
    %68 = arith.mulf %67, %67 : vector<128x32xf32>
    %cst_24 = arith.constant dense<0.000000e+00> : vector<128xf32>
    %69 = vector.multi_reduction <add>, %68, %cst_24 [1] : vector<128x32xf32> to vector<128xf32>
    %70 = vector.shape_cast %69 : vector<128xf32> to vector<128x1xf32>
    %cst_25 = arith.constant 3.200000e+01 : f32
    %71 = vector.broadcast %cst_25 : f32 to vector<128x1xf32>
    %72 = arith.divf %70, %71 : vector<128x1xf32>
    %73 = vector.broadcast %65 : vector<128x1xf32> to vector<128x32xf32>
    %74 = arith.subf %59, %73 : vector<128x32xf32>
    %cst_26 = arith.constant 9.99999996E-13 : f32
    %75 = vector.broadcast %cst_26 : f32 to vector<128x1xf32>
    %76 = arith.addf %72, %75 : vector<128x1xf32>
    %77 = math.rsqrt %76 : vector<128x1xf32>
    %78 = vector.broadcast %77 : vector<128x1xf32> to vector<128x32xf32>
    %79 = arith.mulf %74, %78 : vector<128x32xf32>
    %80 = vector.broadcast %60 : vector<1x32xf32> to vector<128x32xf32>
    %81 = arith.mulf %79, %80 : vector<128x32xf32>
    %82 = vector.broadcast %61 : vector<1x32xf32> to vector<128x32xf32>
    %83 = arith.addf %81, %82 : vector<128x32xf32>
    %84 = arith.truncf %83 : vector<128x32xf32> to vector<128x32xbf16>
    %c0_27 = arith.constant 0 : index
    %c0_28 = arith.constant 0 : index
    %85 = vector.load %arg9[%c0_27, %c0_28] : memref<32x64xbf16, #tpu.memory_space<vmem>>, vector<32x64xbf16>
    %cst_29 = arith.constant dense<0.000000e+00> : vector<128x64xf32>
    %86 = tpu.matmul %84, %85, %cst_29 {dimension_numbers = #tpu.dot_dimension_numbers<[1], [0], [0], [1], [0, 0, 1, 1], [], []>} : vector<128x32xbf16>, vector<32x64xbf16>, vector<128x64xf32> -> vector<128x64xf32>
    %c0_30 = arith.constant 0 : index
    %c0_31 = arith.constant 0 : index
    %87 = vector.load %arg10[%c0_30, %c0_31] : memref<1x64xf32, #tpu.memory_space<vmem>>, vector<1x64xf32>
    %88 = vector.broadcast %87 : vector<1x64xf32> to vector<128x64xf32>
    %89 = arith.addf %86, %88 : vector<128x64xf32>
    %90 = arith.mulf %89, %89 : vector<128x64xf32>
    %91 = arith.mulf %89, %90 : vector<128x64xf32>
    %cst_32 = arith.constant 4.471500e-02 : f32
    %92 = vector.broadcast %cst_32 : f32 to vector<128x64xf32>
    %93 = arith.mulf %92, %91 : vector<128x64xf32>
    %94 = arith.addf %89, %93 : vector<128x64xf32>
    %cst_33 = arith.constant 0.797884583 : f32
    %95 = vector.broadcast %cst_33 : f32 to vector<128x64xf32>
    %96 = arith.mulf %95, %94 : vector<128x64xf32>
    %97 = math.tanh %96 : vector<128x64xf32>
    %cst_34 = arith.constant 1.000000e+00 : f32
    %98 = vector.broadcast %cst_34 : f32 to vector<128x64xf32>
    %99 = arith.addf %98, %97 : vector<128x64xf32>
    %cst_35 = arith.constant 5.000000e-01 : f32
    %100 = vector.broadcast %cst_35 : f32 to vector<128x64xf32>
    %101 = arith.mulf %100, %99 : vector<128x64xf32>
    %102 = arith.mulf %89, %101 : vector<128x64xf32>
    %103 = arith.truncf %102 : vector<128x64xf32> to vector<128x64xbf16>
    %c0_36 = arith.constant 0 : index
    %c0_37 = arith.constant 0 : index
    %104 = vector.load %arg11[%c0_36, %c0_37] : memref<64x32xbf16, #tpu.memory_space<vmem>>, vector<64x32xbf16>
    %cst_38 = arith.constant dense<0.000000e+00> : vector<128x32xf32>
    %105 = tpu.matmul %103, %104, %cst_38 {dimension_numbers = #tpu.dot_dimension_numbers<[1], [0], [0], [1], [0, 0, 1, 1], [], []>} : vector<128x64xbf16>, vector<64x32xbf16>, vector<128x32xf32> -> vector<128x32xf32>
    %c0_39 = arith.constant 0 : index
    %c0_40 = arith.constant 0 : index
    %106 = vector.load %arg12[%c0_39, %c0_40] : memref<1x32xf32, #tpu.memory_space<vmem>>, vector<1x32xf32>
    %107 = vector.broadcast %106 : vector<1x32xf32> to vector<128x32xf32>
    %108 = arith.addf %105, %107 : vector<128x32xf32>
    %109 = arith.extf %84 : vector<128x32xbf16> to vector<128x32xf32>
    %110 = arith.addf %109, %108 : vector<128x32xf32>
    %c0_41 = arith.constant 0 : index
    %c0_42 = arith.constant 0 : index
    %111 = vector.load %arg13[%c0_41, %c0_42] : memref<1x32xf32, #tpu.memory_space<vmem>>, vector<1x32xf32>
    %c0_43 = arith.constant 0 : index
    %c0_44 = arith.constant 0 : index
    %112 = vector.load %arg14[%c0_43, %c0_44] : memref<1x32xf32, #tpu.memory_space<vmem>>, vector<1x32xf32>
    %cst_45 = arith.constant dense<0.000000e+00> : vector<128xf32>
    %113 = vector.multi_reduction <add>, %110, %cst_45 [1] : vector<128x32xf32> to vector<128xf32>
    %114 = vector.shape_cast %113 : vector<128xf32> to vector<128x1xf32>
    %cst_46 = arith.constant 3.200000e+01 : f32
    %115 = vector.broadcast %cst_46 : f32 to vector<128x1xf32>
    %116 = arith.divf %114, %115 : vector<128x1xf32>
    %117 = vector.broadcast %116 : vector<128x1xf32> to vector<128x32xf32>
    %118 = arith.subf %110, %117 : vector<128x32xf32>
    %119 = arith.mulf %118, %118 : vector<128x32xf32>
    %cst_47 = arith.constant dense<0.000000e+00> : vector<128xf32>
    %120 = vector.multi_reduction <add>, %119, %cst_47 [1] : vector<128x32xf32> to vector<128xf32>
    %121 = vector.shape_cast %120 : vector<128xf32> to vector<128x1xf32>
    %cst_48 = arith.constant 3.200000e+01 : f32
    %122 = vector.broadcast %cst_48 : f32 to vector<128x1xf32>
    %123 = arith.divf %121, %122 : vector<128x1xf32>
    %124 = vector.broadcast %116 : vector<128x1xf32> to vector<128x32xf32>
    %125 = arith.subf %110, %124 : vector<128x32xf32>
    %cst_49 = arith.constant 9.99999996E-13 : f32
    %126 = vector.broadcast %cst_49 : f32 to vector<128x1xf32>
    %127 = arith.addf %123, %126 : vector<128x1xf32>
    %128 = math.rsqrt %127 : vector<128x1xf32>
    %129 = vector.broadcast %128 : vector<128x1xf32> to vector<128x32xf32>
    %130 = arith.mulf %125, %129 : vector<128x32xf32>
    %131 = vector.broadcast %111 : vector<1x32xf32> to vector<128x32xf32>
    %132 = arith.mulf %130, %131 : vector<128x32xf32>
    %133 = vector.broadcast %112 : vector<1x32xf32> to vector<128x32xf32>
    %134 = arith.addf %132, %133 : vector<128x32xf32>
    %135 = vector.shape_cast %134 : vector<128x32xf32> to vector<16x8x32xf32>
    %cst_50 = arith.constant dense<0xFF800000> : vector<16x32xf32>
    %136 = vector.multi_reduction <maximumf>, %135, %cst_50 [1] : vector<16x8x32xf32> to vector<16x32xf32>
    %c0_51 = arith.constant 0 : index
    %c0_52 = arith.constant 0 : index
    %137 = vector.load %arg15[%c0_51, %c0_52] : memref<16x32xf32, #tpu.memory_space<vmem>>, vector<16x32xf32>
    tpu.vector_store %arg15[%c0_51, %c0_52], %136 {strides = array<i32>} : memref<16x32xf32, #tpu.memory_space<vmem>>, vector<16x32xf32>,
    return
  }
  func.func @transform_0(%arg0: i32) -> (i32, i32, i32) {
    %c0_i32 = arith.constant 0 : i32
    %c0_i32_0 = arith.constant 0 : i32
    %c0_i32_1 = arith.constant 0 : i32
    return %arg0, %c0_i32, %c0_i32_0 : i32, i32, i32
  }
  func.func @transform_1(%arg0: i32) -> (i32, i32) {
    %c0_i32 = arith.constant 0 : i32
    %c0_i32_0 = arith.constant 0 : i32
    return %arg0, %c0_i32 : i32, i32
  }
  func.func @transform_2(%arg0: i32) -> (i32, i32) {
    %c0_i32 = arith.constant 0 : i32
    %c0_i32_0 = arith.constant 0 : i32
    %c0_i32_1 = arith.constant 0 : i32
    return %c0_i32, %c0_i32_0 : i32, i32
  }
  func.func @transform_3(%arg0: i32) -> (i32, i32) {
    %c0_i32 = arith.constant 0 : i32
    %c0_i32_0 = arith.constant 0 : i32
    %c0_i32_1 = arith.constant 0 : i32
    return %c0_i32, %c0_i32_0 : i32, i32
  }
  func.func @transform_4(%arg0: i32) -> (i32, i32) {
    %c0_i32 = arith.constant 0 : i32
    %c0_i32_0 = arith.constant 0 : i32
    %c0_i32_1 = arith.constant 0 : i32
    return %c0_i32, %c0_i32_0 : i32, i32
  }
  func.func @transform_5(%arg0: i32) -> (i32, i32) {
    %c0_i32 = arith.constant 0 : i32
    %c0_i32_0 = arith.constant 0 : i32
    %c0_i32_1 = arith.constant 0 : i32
    return %c0_i32, %c0_i32_0 : i32, i32
  }
  func.func @transform_6(%arg0: i32) -> (i32, i32) {
    %c0_i32 = arith.constant 0 : i32
    %c0_i32_0 = arith.constant 0 : i32
    %c0_i32_1 = arith.constant 0 : i32
    return %c0_i32, %c0_i32_0 : i32, i32
  }
  func.func @transform_7(%arg0: i32) -> (i32, i32) {
    %c0_i32 = arith.constant 0 : i32
    %c0_i32_0 = arith.constant 0 : i32
    %c0_i32_1 = arith.constant 0 : i32
    return %c0_i32, %c0_i32_0 : i32, i32
  }
  func.func @transform_8(%arg0: i32) -> (i32, i32) {
    %c0_i32 = arith.constant 0 : i32
    %c0_i32_0 = arith.constant 0 : i32
    %c0_i32_1 = arith.constant 0 : i32
    return %c0_i32, %c0_i32_0 : i32, i32
  }
  func.func @transform_9(%arg0: i32) -> (i32, i32) {
    %c0_i32 = arith.constant 0 : i32
    %c0_i32_0 = arith.constant 0 : i32
    %c0_i32_1 = arith.constant 0 : i32
    return %c0_i32, %c0_i32_0 : i32, i32
  }
  func.func @transform_10(%arg0: i32) -> (i32, i32) {
    %c0_i32 = arith.constant 0 : i32
    %c0_i32_0 = arith.constant 0 : i32
    %c0_i32_1 = arith.constant 0 : i32
    return %c0_i32, %c0_i32_0 : i32, i32
  }
  func.func @transform_11(%arg0: i32) -> (i32, i32) {
    %c0_i32 = arith.constant 0 : i32
    %c0_i32_0 = arith.constant 0 : i32
    %c0_i32_1 = arith.constant 0 : i32
    return %c0_i32, %c0_i32_0 : i32, i32
  }
  func.func @transform_12(%arg0: i32) -> (i32, i32) {
    %c0_i32 = arith.constant 0 : i32
    %c0_i32_0 = arith.constant 0 : i32
    %c0_i32_1 = arith.constant 0 : i32
    return %c0_i32, %c0_i32_0 : i32, i32
  }
  func.func @transform_13(%arg0: i32) -> (i32, i32) {
    %c0_i32 = arith.constant 0 : i32
    %c0_i32_0 = arith.constant 0 : i32
    %c0_i32_1 = arith.constant 0 : i32
    return %c0_i32, %c0_i32_0 : i32, i32
  }
  func.func @transform_14(%arg0: i32) -> (i32, i32) {
    %c0_i32 = arith.constant 0 : i32
    %c0_i32_0 = arith.constant 0 : i32
    return %arg0, %c0_i32 : i32, i32
  }
}

</mosaic_0001>

<llo_original>
// kernel: tpu_custom_call.1
$region0: #{tpu_custom_call.1}
  #allocation0 [shape = 'u32[]', space=smem, size = 0x4, offset = 0x4, fixed_abs, tag = 'smem constant byte address 0x4 - core index']
  #allocation1 [shape = 'u32[72,128]{1,0:T(1,128)}', space=vmem, size = 0x9000, scoped, tag = 'internal scratch']
  %s0 = inlined_call_operand.hbm [shape: bf16[16,8,32], index: 0, kind: input, shape index: {}]
  %s1 = inlined_call_operand.vmem [shape: f32[16,8], index: 1, kind: input, shape index: {}]
  %s2 = inlined_call_operand.vmem [shape: bf16[32,96], index: 2, kind: input, shape index: {}]
  %s3 = inlined_call_operand.vmem [shape: f32[1,96], index: 3, kind: input, shape index: {}]
  %s4 = inlined_call_operand.vmem [shape: bf16[32,32], index: 4, kind: input, shape index: {}]
  %s5 = inlined_call_operand.vmem [shape: f32[1,32], index: 5, kind: input, shape index: {}]
  %s6 = inlined_call_operand.vmem [shape: f32[1,32], index: 6, kind: input, shape index: {}]
  %s7 = inlined_call_operand.vmem [shape: f32[1,32], index: 7, kind: input, shape index: {}]
  %s8 = inlined_call_operand.vmem [shape: bf16[32,64], index: 8, kind: input, shape index: {}]
  %s9 = inlined_call_operand.vmem [shape: f32[1,64], index: 9, kind: input, shape index: {}]
  %s10 = inlined_call_operand.vmem [shape: bf16[64,32], index: 10, kind: input, shape index: {}]
  %s11 = inlined_call_operand.vmem [shape: f32[1,32], index: 11, kind: input, shape index: {}]
  %s12 = inlined_call_operand.vmem [shape: f32[1,32], index: 12, kind: input, shape index: {}]
  %s13 = inlined_call_operand.vmem [shape: f32[1,32], index: 13, kind: input, shape index: {}]
  %s14 = inlined_call_operand.hbm [shape: f32[16,32], index: 14, kind: output, shape index: {}]
  %s15 = sld [smem:[#allocation0]]
  $region70: #{tpu_custom_call.1} parent=0
    _
  %s17 = ssub.s32 1, %s15
  %s18 = scalar_select 0, %s17, %s15
  $region1: #{tpu_custom_call.1} parent=0
    #allocation2 [shape = 'u8[32768]{0}', space=vmem, size = 0x8000, scoped, tag = 'input window, operand 0, single buffered']
    #allocation3 [shape = 's32[1]{0}', space=sflag, size = 0x4, scoped, tag = 'scoped memory for tpu_custom_call.1']
    #allocation4 [shape = 's32[1]{0}', space=sflag, size = 0x4, scoped, tag = 'scoped memory for tpu_custom_call.1']
    #allocation5 [shape = 'u8[8192]{0}', space=vmem, size = 0x2000, scoped, tag = 'output window, operand 0, single buffered']
    %19 = vsyncpa [#allocation3], 0
    %20 = vsyncpa [#allocation4], 0
    // Predicated region
    $region2: #{tpu_custom_call.1} parent=1 // pred_check
      _
    $region3: #{tpu_custom_call.1} parent=1 // pred_check_branch
      %22 = sbr.rel (0) target = $region5
    $region4: #{tpu_custom_call.1} parent=1 // pred_region
      %24 = vsyncadd [#allocation3], 0
      %s25 = sshll.u32 %s0, 4
      %s26 = int_to_ptr.hbm [resolvable:$true] %s25
      %s27 = sshll.u32 [#allocation2], 4
      %s28 = int_to_ptr.vmem [resolvable:$true] %s27
      %33 = dma.hbm_to_vmem [thread:$0]  %s26, 1024, %s28, [#allocation3], 64, 64, 4
    $region5: #{tpu_custom_call.1} parent=1 // pred_fallthru
      _
    // Predicated region
    $region6: #{tpu_custom_call.1} parent=1 // pred_check
      _
    $region7: #{tpu_custom_call.1} parent=1 // pred_check_branch
      %35 = sbr.rel (0) target = $region9
    $region8: #{tpu_custom_call.1} parent=1 // pred_region
      _
    $region9: #{tpu_custom_call.1} parent=1 // pred_fallthru
      _
    // Predicated region
    $region10: #{tpu_custom_call.1} parent=1 // pred_check
      _
    $region11: #{tpu_custom_call.1} parent=1 // pred_check_branch
      %37 = sbr.rel (0) target = $region13
    $region12: #{tpu_custom_call.1} parent=1 // pred_region
      _
    $region13: #{tpu_custom_call.1} parent=1 // pred_fallthru
      _
    // Predicated region
    $region14: #{tpu_custom_call.1} parent=1 // pred_check
      _
    $region15: #{tpu_custom_call.1} parent=1 // pred_check_branch
      %39 = sbr.rel (0) target = $region17
    $region16: #{tpu_custom_call.1} parent=1 // pred_region
      _
    $region17: #{tpu_custom_call.1} parent=1 // pred_fallthru
      _
    // Predicated region
    $region18: #{tpu_custom_call.1} parent=1 // pred_check
      _
    $region19: #{tpu_custom_call.1} parent=1 // pred_check_branch
      %41 = sbr.rel (0) target = $region21
    $region20: #{tpu_custom_call.1} parent=1 // pred_region
      _
    $region21: #{tpu_custom_call.1} parent=1 // pred_fallthru
      _
    // Predicated region
    $region22: #{tpu_custom_call.1} parent=1 // pred_check
      _
    $region23: #{tpu_custom_call.1} parent=1 // pred_check_branch
      %43 = sbr.rel (0) target = $region25
    $region24: #{tpu_custom_call.1} parent=1 // pred_region
      _
    $region25: #{tpu_custom_call.1} parent=1 // pred_fallthru
      _
    // Predicated region
    $region26: #{tpu_custom_call.1} parent=1 // pred_check
      _
    $region27: #{tpu_custom_call.1} parent=1 // pred_check_branch
      %45 = sbr.rel (0) target = $region29
    $region28: #{tpu_custom_call.1} parent=1 // pred_region
      _
    $region29: #{tpu_custom_call.1} parent=1 // pred_fallthru
      _
    // Predicated region
    $region30: #{tpu_custom_call.1} parent=1 // pred_check
      _
    $region31: #{tpu_custom_call.1} parent=1 // pred_check_branch
      %47 = sbr.rel (0) target = $region33
    $region32: #{tpu_custom_call.1} parent=1 // pred_region
      _
    $region33: #{tpu_custom_call.1} parent=1 // pred_fallthru
      _
    // Predicated region
    $region34: #{tpu_custom_call.1} parent=1 // pred_check
      _
    $region35: #{tpu_custom_call.1} parent=1 // pred_check_branch
      %49 = sbr.rel (0) target = $region37
    $region36: #{tpu_custom_call.1} parent=1 // pred_region
      _
    $region37: #{tpu_custom_call.1} parent=1 // pred_fallthru
      _
    // Predicated region
    $region38: #{tpu_custom_call.1} parent=1 // pred_check
      _
    $region39: #{tpu_custom_call.1} parent=1 // pred_check_branch
      %51 = sbr.rel (0) target = $region41
    $region40: #{tpu_custom_call.1} parent=1 // pred_region
      _
    $region41: #{tpu_custom_call.1} parent=1 // pred_fallthru
      _
    // Predicated region
    $region42: #{tpu_custom_call.1} parent=1 // pred_check
      _
    $region43: #{tpu_custom_call.1} parent=1 // pred_check_branch
      %53 = sbr.rel (0) target = $region45
    $region44: #{tpu_custom_call.1} parent=1 // pred_region
      _
    $region45: #{tpu_custom_call.1} parent=1 // pred_fallthru
      _
    // Predicated region
    $region46: #{tpu_custom_call.1} parent=1 // pred_check
      _
    $region47: #{tpu_custom_call.1} parent=1 // pred_check_branch
      %55 = sbr.rel (0) target = $region49
    $region48: #{tpu_custom_call.1} parent=1 // pred_region
      _
    $region49: #{tpu_custom_call.1} parent=1 // pred_fallthru
      _
    // Predicated region
    $region50: #{tpu_custom_call.1} parent=1 // pred_check
      _
    $region51: #{tpu_custom_call.1} parent=1 // pred_check_branch
      %57 = sbr.rel (0) target = $region53
    $region52: #{tpu_custom_call.1} parent=1 // pred_region
      _
    $region53: #{tpu_custom_call.1} parent=1 // pred_fallthru
      _
    // Predicated region
    $region54: #{tpu_custom_call.1} parent=1 // pred_check
      _
    $region55: #{tpu_custom_call.1} parent=1 // pred_check_branch
      %59 = sbr.rel (0) target = $region57
    $region56: #{tpu_custom_call.1} parent=1 // pred_region
      _
    $region57: #{tpu_custom_call.1} parent=1 // pred_fallthru
      _
    // Predicated region
    $region58: #{tpu_custom_call.1} parent=1 // pred_check
      _
    $region59: #{tpu_custom_call.1} parent=1 // pred_check_branch
      %61 = sbr.rel (0) target = $region61
    $region60: #{tpu_custom_call.1} parent=1 // pred_region
      %63 = dma.done [#allocation3], 1024
    $region61: #{tpu_custom_call.1} parent=1 // pred_fallthru
      _
    %v65 = vld [vmem:[#allocation2] sm:$0xf]
    %v66 = vld [vmem:[#allocation2 + $0x4] sm:$0xf]
    %v67 = vld [vmem:[#allocation2 + $0x8] sm:$0xf]
    %v68 = vld [vmem:[#allocation2 + $0xc] sm:$0xf]
    %v69 = vld [vmem:[#allocation2 + $0x10] sm:$0xf]
    %v70 = vld [vmem:[#allocation2 + $0x14] sm:$0xf]
    %v71 = vld [vmem:[#allocation2 + $0x18] sm:$0xf]
    %v72 = vld [vmem:[#allocation2 + $0x1c] sm:$0xf]
    %v73 = vld [vmem:[#allocation2 + $0x20] sm:$0xf]
    %v74 = vld [vmem:[#allocation2 + $0x24] sm:$0xf]
    %v75 = vld [vmem:[#allocation2 + $0x28] sm:$0xf]
    %v76 = vld [vmem:[#allocation2 + $0x2c] sm:$0xf]
    %v77 = vld [vmem:[#allocation2 + $0x30] sm:$0xf]
    %v78 = vld [vmem:[#allocation2 + $0x34] sm:$0xf]
    %v79 = vld [vmem:[#allocation2 + $0x38] sm:$0xf]
    %v80 = vld [vmem:[#allocation2 + $0x3c] sm:$0xf]
    %v81 = vld [vmem:[%s2] sm:$0xf]
    %v82 = vld [vmem:[%s2 + $0x4] sm:$0xf]
    %v83 = vld [vmem:[%s2 + $0x8] sm:$0xf]
    %v84 = vld [vmem:[%s2 + $0xc] sm:$0xf]
    %v85 = vld [vmem:[%s3] sm:$0x1]
    %v87 = vperm.slane %v85, 0
    %v105 = vunpack.c.l.b16 %v65
    %v106 = vunpack.c.l.b16 %v66
    %v107 = vunpack.c.l.b16 %v67
    %v108 = vunpack.c.l.b16 %v68
    %v109 = vunpack.c.l.b16 %v69
    %v110 = vunpack.c.l.b16 %v70
    %v111 = vunpack.c.l.b16 %v71
    %v112 = vunpack.c.l.b16 %v72
    %v113 = vunpack.c.l.b16 %v73
    %v114 = vunpack.c.l.b16 %v74
    %v115 = vunpack.c.l.b16 %v75
    %v116 = vunpack.c.l.b16 %v76
    %v117 = vunpack.c.l.b16 %v77
    %v118 = vunpack.c.l.b16 %v78
    %v119 = vunpack.c.l.b16 %v79
    %v120 = vunpack.c.l.b16 %v80
    %v121 = vpack.c.b16 %v106, %v105
    %v122 = vpack.c.b16 %v108, %v107
    %v123 = vpack.c.b16 %v110, %v109
    %v124 = vpack.c.b16 %v112, %v111
    %v125 = vpack.c.b16 %v114, %v113
    %v126 = vpack.c.b16 %v116, %v115
    %v127 = vpack.c.b16 %v118, %v117
    %v128 = vpack.c.b16 %v120, %v119
    %v133 = vunpack.c.l.b16 %v81
    %v134 = vunpack.c.l.b16 %v82
    %v135 = vunpack.c.l.b16 %v83
    %v136 = vunpack.c.l.b16 %v84
    %v137 = vpack.c.b16 %v134, %v133
    %v138 = vpack.c.b16 %v136, %v135
    %vm141 = vcmask 261120
    %v143 = vsel %vm141, %v121, 0
    %v146 = vsel %vm141, %v122, 0
    %v149 = vsel %vm141, %v123, 0
    %v152 = vsel %vm141, %v124, 0
    %v155 = vsel %vm141, %v125, 0
    %v158 = vsel %vm141, %v126, 0
    %v161 = vsel %vm141, %v127, 0
    %v164 = vsel %vm141, %v128, 0
    %166 = vmatpush.bf16.msra.mxu0 0
    %167 = vmatpush.bf16.msra.mxu0 0
    %168 = vmatpush.bf16.msra.mxu0 0
    %169 = vmatpush.bf16.msra.mxu0 0
    %170 = vmatpush.bf16.msra.mxu0 0
    %171 = vmatpush.bf16.msra.mxu0 0
    %172 = vmatpush.bf16.msra.mxu0 %v138
    %173 = vmatpush.bf16.msra.mxu0 %v137
    %174 = vmatmul.bf16.gmra.mxu0 %v143
    %v175 = vpop.f32.mrf.mxu0
    %v176 = vadd.f32 %v87, %v175
    %v177 = vpop.f32.mrf.mxu0
    %v178 = vadd.f32 %v87, %v177
    %179 = vmatmul.bf16.gmra.mxu0 %v146
    %v180 = vpop.f32.mrf.mxu0
    %v181 = vadd.f32 %v87, %v180
    %v182 = vpop.f32.mrf.mxu0
    %v183 = vadd.f32 %v87, %v182
    %184 = vmatmul.bf16.gmra.mxu0 %v149
    %v185 = vpop.f32.mrf.mxu0
    %v186 = vadd.f32 %v87, %v185
    %v187 = vpop.f32.mrf.mxu0
    %v188 = vadd.f32 %v87, %v187
    %189 = vmatmul.bf16.gmra.mxu0 %v152
    %v190 = vpop.f32.mrf.mxu0
    %v191 = vadd.f32 %v87, %v190
    %v192 = vpop.f32.mrf.mxu0
    %v193 = vadd.f32 %v87, %v192
    %194 = vmatmul.bf16.gmra.mxu0 %v155
    %v195 = vpop.f32.mrf.mxu0
    %v196 = vadd.f32 %v87, %v195
    %v197 = vpop.f32.mrf.mxu0
    %v198 = vadd.f32 %v87, %v197
    %199 = vmatmul.bf16.gmra.mxu0 %v158
    %v200 = vpop.f32.mrf.mxu0
    %v201 = vadd.f32 %v87, %v200
    %v202 = vpop.f32.mrf.mxu0
    %v203 = vadd.f32 %v87, %v202
    %204 = vmatmul.bf16.gmra.mxu0 %v161
    %v205 = vpop.f32.mrf.mxu0
    %v206 = vadd.f32 %v87, %v205
    %v207 = vpop.f32.mrf.mxu0
    %v208 = vadd.f32 %v87, %v207
    %209 = vmatmul.bf16.gmra.mxu0 %v164
    %v210 = vpop.f32.mrf.mxu0
    %v211 = vadd.f32 %v87, %v210
    %v212 = vpop.f32.mrf.mxu0
    %v213 = vadd.f32 %v87, %v212
    %214 = vdwg.mxu0
    %v215 = vpack.c.bf16 %v176, %v176
    %v216 = vpack.c.bf16 %v178, %v178
    %v217 = vpack.c.bf16 %v181, %v181
    %v218 = vpack.c.bf16 %v183, %v183
    %v219 = vpack.c.bf16 %v186, %v186
    %v220 = vpack.c.bf16 %v188, %v188
    %v221 = vpack.c.bf16 %v191, %v191
    %v222 = vpack.c.bf16 %v193, %v193
    %v223 = vpack.c.bf16 %v196, %v196
    %v224 = vpack.c.bf16 %v198, %v198
    %v225 = vpack.c.bf16 %v201, %v201
    %v226 = vpack.c.bf16 %v203, %v203
    %v227 = vpack.c.bf16 %v206, %v206
    %v228 = vpack.c.bf16 %v208, %v208
    %v229 = vpack.c.bf16 %v211, %v211
    %v230 = vpack.c.bf16 %v213, %v213
    %247 = vrot.lane.b32.xlu0 %v215, 112
    %v248 = vpop.permute.xlu0 %247
    %249 = vrot.lane.b32.xlu0 %v216, 112
    %v250 = vpop.permute.xlu0 %249
    %251 = vrot.lane.b32.xlu0 %v217, 112
    %v252 = vpop.permute.xlu0 %251
    %253 = vrot.lane.b32.xlu0 %v218, 112
    %v254 = vpop.permute.xlu0 %253
    %255 = vrot.lane.b32.xlu0 %v219, 112
    %v256 = vpop.permute.xlu0 %255
    %257 = vrot.lane.b32.xlu0 %v220, 112
    %v258 = vpop.permute.xlu0 %257
    %259 = vrot.lane.b32.xlu0 %v221, 112
    %v260 = vpop.permute.xlu0 %259
    %261 = vrot.lane.b32.xlu0 %v222, 112
    %v262 = vpop.permute.xlu0 %261
    %263 = vrot.lane.b32.xlu0 %v223, 112
    %v264 = vpop.permute.xlu0 %263
    %265 = vrot.lane.b32.xlu0 %v224, 112
    %v266 = vpop.permute.xlu0 %265
    %267 = vrot.lane.b32.xlu0 %v225, 112
    %v268 = vpop.permute.xlu0 %267
    %269 = vrot.lane.b32.xlu0 %v226, 112
    %v270 = vpop.permute.xlu0 %269
    %271 = vrot.lane.b32.xlu0 %v227, 112
    %v272 = vpop.permute.xlu0 %271
    %273 = vrot.lane.b32.xlu0 %v228, 112
    %v274 = vpop.permute.xlu0 %273
    %275 = vrot.lane.b32.xlu0 %v229, 112
    %v276 = vpop.permute.xlu0 %275
    %277 = vrot.lane.b32.xlu0 %v230, 112
    %v278 = vpop.permute.xlu0 %277
    %v279 = vunpack.c.l.b16 %v215
    %v280 = vpack.c.b16 %v279, %v279
    %281 = vrot.lane.b32.xlu0 %v280, 96
    %v282 = vpop.permute.xlu0 %281
    %vm283 = vcmask 130048
    %v285 = vsel %vm283, %v215, 0
    %v288 = vsel %vm283, %v282, 0
    %290 = vmatpush.bf16.xpose.msra.mxu0 0
    %291 = vmatpush.bf16.xpose.msra.mxu0 0
    %292 = vmatpush.bf16.xpose.msra.mxu0 0
    %293 = vmatpush.bf16.xpose.msra.mxu0 0
    %294 = vmatpush.bf16.xpose.msra.mxu0 0
    %295 = vmatpush.bf16.xpose.msra.mxu0 0
    %296 = vmatpush.bf16.xpose.msra.mxu0 0
    %297 = vmatpush.bf16.xpose.msra.mxu0 %v288
    %298 = vmatmul.bf16.gmra.mxu0 %v285
    %v299 = vpop.f32.mrf.mxu0
    %v300 = vadd.f32 0.0, %v299
    %v301 = vpop.f32.mrf.mxu0
    %302 = vdwg.mxu0
    %v303 = vunpack.c.l.b16 %v216
    %v304 = vpack.c.b16 %v303, %v303
    %305 = vrot.lane.b32.xlu0 %v304, 96
    %v306 = vpop.permute.xlu0 %305
    %v308 = vsel %vm283, %v216, 0
    %v311 = vsel %vm283, %v306, 0
    %313 = vmatpush.bf16.xpose.msra.mxu0 0
    %314 = vmatpush.bf16.xpose.msra.mxu0 0
    %315 = vmatpush.bf16.xpose.msra.mxu0 0
    %316 = vmatpush.bf16.xpose.msra.mxu0 0
    %317 = vmatpush.bf16.xpose.msra.mxu0 0
    %318 = vmatpush.bf16.xpose.msra.mxu0 0
    %319 = vmatpush.bf16.xpose.msra.mxu0 0
    %320 = vmatpush.bf16.xpose.msra.mxu0 %v311
    %321 = vmatmul.bf16.gmra.mxu0 %v308
    %v322 = vpop.f32.mrf.mxu0
    %v323 = vadd.f32 0.0, %v322
    %v324 = vpop.f32.mrf.mxu0
    %325 = vdwg.mxu0
    %v326 = vunpack.c.l.b16 %v217
    %v327 = vpack.c.b16 %v326, %v326
    %328 = vrot.lane.b32.xlu0 %v327, 96
    %v329 = vpop.permute.xlu0 %328
    %v331 = vsel %vm283, %v217, 0
    %v334 = vsel %vm283, %v329, 0
    %336 = vmatpush.bf16.xpose.msra.mxu0 0
    %337 = vmatpush.bf16.xpose.msra.mxu0 0
    %338 = vmatpush.bf16.xpose.msra.mxu0 0
    %339 = vmatpush.bf16.xpose.msra.mxu0 0
    %340 = vmatpush.bf16.xpose.msra.mxu0 0
    %341 = vmatpush.bf16.xpose.msra.mxu0 0
    %342 = vmatpush.bf16.xpose.msra.mxu0 0
    %343 = vmatpush.bf16.xpose.msra.mxu0 %v334
    %344 = vmatmul.bf16.gmra.mxu0 %v331
    %v345 = vpop.f32.mrf.mxu0
    %v346 = vadd.f32 0.0, %v345
    %v347 = vpop.f32.mrf.mxu0
    %348 = vdwg.mxu0
    %v349 = vunpack.c.l.b16 %v218
    %v350 = vpack.c.b16 %v349, %v349
    %351 = vrot.lane.b32.xlu0 %v350, 96
    %v352 = vpop.permute.xlu0 %351
    %v354 = vsel %vm283, %v218, 0
    %v357 = vsel %vm283, %v352, 0
    %359 = vmatpush.bf16.xpose.msra.mxu0 0
    %360 = vmatpush.bf16.xpose.msra.mxu0 0
    %361 = vmatpush.bf16.xpose.msra.mxu0 0
    %362 = vmatpush.bf16.xpose.msra.mxu0 0
    %363 = vmatpush.bf16.xpose.msra.mxu0 0
    %364 = vmatpush.bf16.xpose.msra.mxu0 0
    %365 = vmatpush.bf16.xpose.msra.mxu0 0
    %366 = vmatpush.bf16.xpose.msra.mxu0 %v357
    %367 = vmatmul.bf16.gmra.mxu0 %v354
    %v368 = vpop.f32.mrf.mxu0
    %v369 = vadd.f32 0.0, %v368
    %v370 = vpop.f32.mrf.mxu0
    %371 = vdwg.mxu0
    %v372 = vunpack.c.l.b16 %v219
    %v373 = vpack.c.b16 %v372, %v372
    %374 = vrot.lane.b32.xlu0 %v373, 96
    %v375 = vpop.permute.xlu0 %374
    %v377 = vsel %vm283, %v219, 0
    %v380 = vsel %vm283, %v375, 0
    %382 = vmatpush.bf16.xpose.msra.mxu0 0
    %383 = vmatpush.bf16.xpose.msra.mxu0 0
    %384 = vmatpush.bf16.xpose.msra.mxu0 0
    %385 = vmatpush.bf16.xpose.msra.mxu0 0
    %386 = vmatpush.bf16.xpose.msra.mxu0 0
    %387 = vmatpush.bf16.xpose.msra.mxu0 0
    %388 = vmatpush.bf16.xpose.msra.mxu0 0
    %389 = vmatpush.bf16.xpose.msra.mxu0 %v380
    %390 = vmatmul.bf16.gmra.mxu0 %v377
    %v391 = vpop.f32.mrf.mxu0
    %v392 = vadd.f32 0.0, %v391
    %v393 = vpop.f32.mrf.mxu0
    %394 = vdwg.mxu0
    %v395 = vunpack.c.l.b16 %v220
    %v396 = vpack.c.b16 %v395, %v395
    %397 = vrot.lane.b32.xlu0 %v396, 96
    %v398 = vpop.permute.xlu0 %397
    %v400 = vsel %vm283, %v220, 0
    %v403 = vsel %vm283, %v398, 0
    %405 = vmatpush.bf16.xpose.msra.mxu0 0
    %406 = vmatpush.bf16.xpose.msra.mxu0 0
    %407 = vmatpush.bf16.xpose.msra.mxu0 0
    %408 = vmatpush.bf16.xpose.msra.mxu0 0
    %409 = vmatpush.bf16.xpose.msra.mxu0 0
    %410 = vmatpush.bf16.xpose.msra.mxu0 0
    %411 = vmatpush.bf16.xpose.msra.mxu0 0
    %412 = vmatpush.bf16.xpose.msra.mxu0 %v403
    %413 = vmatmul.bf16.gmra.mxu0 %v400
    %v414 = vpop.f32.mrf.mxu0
    %v415 = vadd.f32 0.0, %v414
    %v416 = vpop.f32.mrf.mxu0
    %417 = vdwg.mxu0
    %v418 = vunpack.c.l.b16 %v221
    %v419 = vpack.c.b16 %v418, %v418
    %420 = vrot.lane.b32.xlu0 %v419, 96
    %v421 = vpop.permute.xlu0 %420
    %v423 = vsel %vm283, %v221, 0
    %v426 = vsel %vm283, %v421, 0
    %428 = vmatpush.bf16.xpose.msra.mxu0 0
    %429 = vmatpush.bf16.xpose.msra.mxu0 0
    %430 = vmatpush.bf16.xpose.msra.mxu0 0
    %431 = vmatpush.bf16.xpose.msra.mxu0 0
    %432 = vmatpush.bf16.xpose.msra.mxu0 0
    %433 = vmatpush.bf16.xpose.msra.mxu0 0
    %434 = vmatpush.bf16.xpose.msra.mxu0 0
    %435 = vmatpush.bf16.xpose.msra.mxu0 %v426
    %436 = vmatmul.bf16.gmra.mxu0 %v423
    %v437 = vpop.f32.mrf.mxu0
    %v438 = vadd.f32 0.0, %v437
    %v439 = vpop.f32.mrf.mxu0
    %440 = vdwg.mxu0
    %v441 = vunpack.c.l.b16 %v222
    %v442 = vpack.c.b16 %v441, %v441
    %443 = vrot.lane.b32.xlu0 %v442, 96
    %v444 = vpop.permute.xlu0 %443
    %v446 = vsel %vm283, %v222, 0
    %v449 = vsel %vm283, %v444, 0
    %451 = vmatpush.bf16.xpose.msra.mxu0 0
    %452 = vmatpush.bf16.xpose.msra.mxu0 0
    %453 = vmatpush.bf16.xpose.msra.mxu0 0
    %454 = vmatpush.bf16.xpose.msra.mxu0 0
    %455 = vmatpush.bf16.xpose.msra.mxu0 0
    %456 = vmatpush.bf16.xpose.msra.mxu0 0
    %457 = vmatpush.bf16.xpose.msra.mxu0 0
    %458 = vmatpush.bf16.xpose.msra.mxu0 %v449
    %459 = vmatmul.bf16.gmra.mxu0 %v446
    %v460 = vpop.f32.mrf.mxu0
    %v461 = vadd.f32 0.0, %v460
    %v462 = vpop.f32.mrf.mxu0
    %463 = vdwg.mxu0
    %v464 = vunpack.c.l.b16 %v223
    %v465 = vpack.c.b16 %v464, %v464
    %466 = vrot.lane.b32.xlu0 %v465, 96
    %v467 = vpop.permute.xlu0 %466
    %v469 = vsel %vm283, %v223, 0
    %v472 = vsel %vm283, %v467, 0
    %474 = vmatpush.bf16.xpose.msra.mxu0 0
    %475 = vmatpush.bf16.xpose.msra.mxu0 0
    %476 = vmatpush.bf16.xpose.msra.mxu0 0
    %477 = vmatpush.bf16.xpose.msra.mxu0 0
    %478 = vmatpush.bf16.xpose.msra.mxu0 0
    %479 = vmatpush.bf16.xpose.msra.mxu0 0
    %480 = vmatpush.bf16.xpose.msra.mxu0 0
    %481 = vmatpush.bf16.xpose.msra.mxu0 %v472
    %482 = vmatmul.bf16.gmra.mxu0 %v469
    %v483 = vpop.f32.mrf.mxu0
    %v484 = vadd.f32 0.0, %v483
    %v485 = vpop.f32.mrf.mxu0
    %486 = vdwg.mxu0
    %v487 = vunpack.c.l.b16 %v224
    %v488 = vpack.c.b16 %v487, %v487
    %489 = vrot.lane.b32.xlu0 %v488, 96
    %v490 = vpop.permute.xlu0 %489
    %v492 = vsel %vm283, %v224, 0
    %v495 = vsel %vm283, %v490, 0
    %497 = vmatpush.bf16.xpose.msra.mxu0 0
    %498 = vmatpush.bf16.xpose.msra.mxu0 0
    %499 = vmatpush.bf16.xpose.msra.mxu0 0
    %500 = vmatpush.bf16.xpose.msra.mxu0 0
    %501 = vmatpush.bf16.xpose.msra.mxu0 0
    %502 = vmatpush.bf16.xpose.msra.mxu0 0
    %503 = vmatpush.bf16.xpose.msra.mxu0 0
    %504 = vmatpush.bf16.xpose.msra.mxu0 %v495
    %505 = vmatmul.bf16.gmra.mxu0 %v492
    %v506 = vpop.f32.mrf.mxu0
    %v507 = vadd.f32 0.0, %v506
    %v508 = vpop.f32.mrf.mxu0
    %509 = vdwg.mxu0
    %v510 = vunpack.c.l.b16 %v225
    %v511 = vpack.c.b16 %v510, %v510
    %512 = vrot.lane.b32.xlu0 %v511, 96
    %v513 = vpop.permute.xlu0 %512
    %v515 = vsel %vm283, %v225, 0
    %v518 = vsel %vm283, %v513, 0
    %520 = vmatpush.bf16.xpose.msra.mxu0 0
    %521 = vmatpush.bf16.xpose.msra.mxu0 0
    %522 = vmatpush.bf16.xpose.msra.mxu0 0
    %523 = vmatpush.bf16.xpose.msra.mxu0 0
    %524 = vmatpush.bf16.xpose.msra.mxu0 0
    %525 = vmatpush.bf16.xpose.msra.mxu0 0
    %526 = vmatpush.bf16.xpose.msra.mxu0 0
    %527 = vmatpush.bf16.xpose.msra.mxu0 %v518
    %528 = vmatmul.bf16.gmra.mxu0 %v515
    %v529 = vpop.f32.mrf.mxu0
    %v530 = vadd.f32 0.0, %v529
    %v531 = vpop.f32.mrf.mxu0
    %532 = vdwg.mxu0
    %v533 = vunpack.c.l.b16 %v226
    %v534 = vpack.c.b16 %v533, %v533
    %535 = vrot.lane.b32.xlu0 %v534, 96
    %v536 = vpop.permute.xlu0 %535
    %v538 = vsel %vm283, %v226, 0
    %v541 = vsel %vm283, %v536, 0
    %543 = vmatpush.bf16.xpose.msra.mxu0 0
    %544 = vmatpush.bf16.xpose.msra.mxu0 0
    %545 = vmatpush.bf16.xpose.msra.mxu0 0
    %546 = vmatpush.bf16.xpose.msra.mxu0 0
    %547 = vmatpush.bf16.xpose.msra.mxu0 0
    %548 = vmatpush.bf16.xpose.msra.mxu0 0
    %549 = vmatpush.bf16.xpose.msra.mxu0 0
    %550 = vmatpush.bf16.xpose.msra.mxu0 %v541
    %551 = vmatmul.bf16.gmra.mxu0 %v538
    %v552 = vpop.f32.mrf.mxu0
    %v553 = vadd.f32 0.0, %v552
    %v554 = vpop.f32.mrf.mxu0
    %555 = vdwg.mxu0
    %v556 = vunpack.c.l.b16 %v227
    %v557 = vpack.c.b16 %v556, %v556
    %558 = vrot.lane.b32.xlu0 %v557, 96
    %v559 = vpop.permute.xlu0 %558
    %v561 = vsel %vm283, %v227, 0
    %v564 = vsel %vm283, %v559, 0
    %566 = vmatpush.bf16.xpose.msra.mxu0 0
    %567 = vmatpush.bf16.xpose.msra.mxu0 0
    %568 = vmatpush.bf16.xpose.msra.mxu0 0
    %569 = vmatpush.bf16.xpose.msra.mxu0 0
    %570 = vmatpush.bf16.xpose.msra.mxu0 0
    %571 = vmatpush.bf16.xpose.msra.mxu0 0
    %572 = vmatpush.bf16.xpose.msra.mxu0 0
    %573 = vmatpush.bf16.xpose.msra.mxu0 %v564
    %574 = vmatmul.bf16.gmra.mxu0 %v561
    %v575 = vpop.f32.mrf.mxu0
    %v576 = vadd.f32 0.0, %v575
    %v577 = vpop.f32.mrf.mxu0
    %578 = vdwg.mxu0
    %v579 = vunpack.c.l.b16 %v228
    %v580 = vpack.c.b16 %v579, %v579
    %581 = vrot.lane.b32.xlu0 %v580, 96
    %v582 = vpop.permute.xlu0 %581
    %v584 = vsel %vm283, %v228, 0
    %v587 = vsel %vm283, %v582, 0
    %589 = vmatpush.bf16.xpose.msra.mxu0 0
    %590 = vmatpush.bf16.xpose.msra.mxu0 0
    %591 = vmatpush.bf16.xpose.msra.mxu0 0
    %592 = vmatpush.bf16.xpose.msra.mxu0 0
    %593 = vmatpush.bf16.xpose.msra.mxu0 0
    %594 = vmatpush.bf16.xpose.msra.mxu0 0
    %595 = vmatpush.bf16.xpose.msra.mxu0 0
    %596 = vmatpush.bf16.xpose.msra.mxu0 %v587
    %597 = vmatmul.bf16.gmra.mxu0 %v584
    %v598 = vpop.f32.mrf.mxu0
    %v599 = vadd.f32 0.0, %v598
    %v600 = vpop.f32.mrf.mxu0
    %601 = vdwg.mxu0
    %v602 = vunpack.c.l.b16 %v229
    %v603 = vpack.c.b16 %v602, %v602
    %604 = vrot.lane.b32.xlu0 %v603, 96
    %v605 = vpop.permute.xlu0 %604
    %v607 = vsel %vm283, %v229, 0
    %v610 = vsel %vm283, %v605, 0
    %612 = vmatpush.bf16.xpose.msra.mxu0 0
    %613 = vmatpush.bf16.xpose.msra.mxu0 0
    %614 = vmatpush.bf16.xpose.msra.mxu0 0
    %615 = vmatpush.bf16.xpose.msra.mxu0 0
    %616 = vmatpush.bf16.xpose.msra.mxu0 0
    %617 = vmatpush.bf16.xpose.msra.mxu0 0
    %618 = vmatpush.bf16.xpose.msra.mxu0 0
    %619 = vmatpush.bf16.xpose.msra.mxu0 %v610
    %620 = vmatmul.bf16.gmra.mxu0 %v607
    %v621 = vpop.f32.mrf.mxu0
    %v622 = vadd.f32 0.0, %v621
    %v623 = vpop.f32.mrf.mxu0
    %624 = vdwg.mxu0
    %v625 = vunpack.c.l.b16 %v230
    %v626 = vpack.c.b16 %v625, %v625
    %627 = vrot.lane.b32.xlu0 %v626, 96
    %v628 = vpop.permute.xlu0 %627
    %v630 = vsel %vm283, %v230, 0
    %v633 = vsel %vm283, %v628, 0
    %635 = vmatpush.bf16.xpose.msra.mxu0 0
    %636 = vmatpush.bf16.xpose.msra.mxu0 0
    %637 = vmatpush.bf16.xpose.msra.mxu0 0
    %638 = vmatpush.bf16.xpose.msra.mxu0 0
    %639 = vmatpush.bf16.xpose.msra.mxu0 0
    %640 = vmatpush.bf16.xpose.msra.mxu0 0
    %641 = vmatpush.bf16.xpose.msra.mxu0 0
    %642 = vmatpush.bf16.xpose.msra.mxu0 %v633
    %643 = vmatmul.bf16.gmra.mxu0 %v630
    %v644 = vpop.f32.mrf.mxu0
    %v645 = vadd.f32 0.0, %v644
    %v646 = vpop.f32.mrf.mxu0
    %647 = vdwg.mxu0
    %v648 = vunpack.c.l.b16 %v248
    %v649 = vpack.c.b16 %v648, %v648
    %650 = vrot.lane.b32.xlu0 %v649, 96
    %v651 = vpop.permute.xlu0 %650
    %v653 = vsel %vm283, %v248, 0
    %v656 = vsel %vm283, %v651, 0
    %658 = vmatpush.bf16.xpose.msra.mxu0 0
    %659 = vmatpush.bf16.xpose.msra.mxu0 0
    %660 = vmatpush.bf16.xpose.msra.mxu0 0
    %661 = vmatpush.bf16.xpose.msra.mxu0 0
    %662 = vmatpush.bf16.xpose.msra.mxu0 0
    %663 = vmatpush.bf16.xpose.msra.mxu0 0
    %664 = vmatpush.bf16.xpose.msra.mxu0 0
    %665 = vmatpush.bf16.xpose.msra.mxu0 %v656
    %666 = vmatmul.bf16.gmra.mxu0 %v653
    %v667 = vpop.f32.mrf.mxu0
    %v668 = vadd.f32 0.0, %v667
    %v669 = vpop.f32.mrf.mxu0
    %670 = vdwg.mxu0
    %v671 = vunpack.c.l.b16 %v250
    %v672 = vpack.c.b16 %v671, %v671
    %673 = vrot.lane.b32.xlu0 %v672, 96
    %v674 = vpop.permute.xlu0 %673
    %v676 = vsel %vm283, %v250, 0
    %v679 = vsel %vm283, %v674, 0
    %681 = vmatpush.bf16.xpose.msra.mxu0 0
    %682 = vmatpush.bf16.xpose.msra.mxu0 0
    %683 = vmatpush.bf16.xpose.msra.mxu0 0
    %684 = vmatpush.bf16.xpose.msra.mxu0 0
    %685 = vmatpush.bf16.xpose.msra.mxu0 0
    %686 = vmatpush.bf16.xpose.msra.mxu0 0
    %687 = vmatpush.bf16.xpose.msra.mxu0 0
    %688 = vmatpush.bf16.xpose.msra.mxu0 %v679
    %689 = vmatmul.bf16.gmra.mxu0 %v676
    %v690 = vpop.f32.mrf.mxu0
    %v691 = vadd.f32 0.0, %v690
    %v692 = vpop.f32.mrf.mxu0
    %693 = vdwg.mxu0
    %v694 = vunpack.c.l.b16 %v252
    %v695 = vpack.c.b16 %v694, %v694
    %696 = vrot.lane.b32.xlu0 %v695, 96
    %v697 = vpop.permute.xlu0 %696
    %v699 = vsel %vm283, %v252, 0
    %v702 = vsel %vm283, %v697, 0
    %704 = vmatpush.bf16.xpose.msra.mxu0 0
    %705 = vmatpush.bf16.xpose.msra.mxu0 0
    %706 = vmatpush.bf16.xpose.msra.mxu0 0
    %707 = vmatpush.bf16.xpose.msra.mxu0 0
    %708 = vmatpush.bf16.xpose.msra.mxu0 0
    %709 = vmatpush.bf16.xpose.msra.mxu0 0
    %710 = vmatpush.bf16.xpose.msra.mxu0 0
    %711 = vmatpush.bf16.xpose.msra.mxu0 %v702
    %712 = vmatmul.bf16.gmra.mxu0 %v699
    %v713 = vpop.f32.mrf.mxu0
    %v714 = vadd.f32 0.0, %v713
    %v715 = vpop.f32.mrf.mxu0
    %716 = vdwg.mxu0
    %v717 = vunpack.c.l.b16 %v254
    %v718 = vpack.c.b16 %v717, %v717
    %719 = vrot.lane.b32.xlu0 %v718, 96
    %v720 = vpop.permute.xlu0 %719
    %v722 = vsel %vm283, %v254, 0
    %v725 = vsel %vm283, %v720, 0
    %727 = vmatpush.bf16.xpose.msra.mxu0 0
    %728 = vmatpush.bf16.xpose.msra.mxu0 0
    %729 = vmatpush.bf16.xpose.msra.mxu0 0
    %730 = vmatpush.bf16.xpose.msra.mxu0 0
    %731 = vmatpush.bf16.xpose.msra.mxu0 0
    %732 = vmatpush.bf16.xpose.msra.mxu0 0
    %733 = vmatpush.bf16.xpose.msra.mxu0 0
    %734 = vmatpush.bf16.xpose.msra.mxu0 %v725
    %735 = vmatmul.bf16.gmra.mxu0 %v722
    %v736 = vpop.f32.mrf.mxu0
    %v737 = vadd.f32 0.0, %v736
    %v738 = vpop.f32.mrf.mxu0
    %739 = vdwg.mxu0
    %v740 = vunpack.c.l.b16 %v256
    %v741 = vpack.c.b16 %v740, %v740
    %742 = vrot.lane.b32.xlu0 %v741, 96
    %v743 = vpop.permute.xlu0 %742
    %v745 = vsel %vm283, %v256, 0
    %v748 = vsel %vm283, %v743, 0
    %750 = vmatpush.bf16.xpose.msra.mxu0 0
    %751 = vmatpush.bf16.xpose.msra.mxu0 0
    %752 = vmatpush.bf16.xpose.msra.mxu0 0
    %753 = vmatpush.bf16.xpose.msra.mxu0 0
    %754 = vmatpush.bf16.xpose.msra.mxu0 0
    %755 = vmatpush.bf16.xpose.msra.mxu0 0
    %756 = vmatpush.bf16.xpose.msra.mxu0 0
    %757 = vmatpush.bf16.xpose.msra.mxu0 %v748
    %758 = vmatmul.bf16.gmra.mxu0 %v745
    %v759 = vpop.f32.mrf.mxu0
    %v760 = vadd.f32 0.0, %v759
    %v761 = vpop.f32.mrf.mxu0
    %762 = vdwg.mxu0
    %v763 = vunpack.c.l.b16 %v258
    %v764 = vpack.c.b16 %v763, %v763
    %765 = vrot.lane.b32.xlu0 %v764, 96
    %v766 = vpop.permute.xlu0 %765
    %v768 = vsel %vm283, %v258, 0
    %v771 = vsel %vm283, %v766, 0
    %773 = vmatpush.bf16.xpose.msra.mxu0 0
    %774 = vmatpush.bf16.xpose.msra.mxu0 0
    %775 = vmatpush.bf16.xpose.msra.mxu0 0
    %776 = vmatpush.bf16.xpose.msra.mxu0 0
    %777 = vmatpush.bf16.xpose.msra.mxu0 0
    %778 = vmatpush.bf16.xpose.msra.mxu0 0
    %779 = vmatpush.bf16.xpose.msra.mxu0 0
    %780 = vmatpush.bf16.xpose.msra.mxu0 %v771
    %781 = vmatmul.bf16.gmra.mxu0 %v768
    %v782 = vpop.f32.mrf.mxu0
    %v783 = vadd.f32 0.0, %v782
    %v784 = vpop.f32.mrf.mxu0
    %785 = vdwg.mxu0
    %v786 = vunpack.c.l.b16 %v260
    %v787 = vpack.c.b16 %v786, %v786
    %788 = vrot.lane.b32.xlu0 %v787, 96
    %v789 = vpop.permute.xlu0 %788
    %v791 = vsel %vm283, %v260, 0
    %v794 = vsel %vm283, %v789, 0
    %796 = vmatpush.bf16.xpose.msra.mxu0 0
    %797 = vmatpush.bf16.xpose.msra.mxu0 0
    %798 = vmatpush.bf16.xpose.msra.mxu0 0
    %799 = vmatpush.bf16.xpose.msra.mxu0 0
    %800 = vmatpush.bf16.xpose.msra.mxu0 0
    %801 = vmatpush.bf16.xpose.msra.mxu0 0
    %802 = vmatpush.bf16.xpose.msra.mxu0 0
    %803 = vmatpush.bf16.xpose.msra.mxu0 %v794
    %804 = vmatmul.bf16.gmra.mxu0 %v791
    %v805 = vpop.f32.mrf.mxu0
    %v806 = vadd.f32 0.0, %v805
    %v807 = vpop.f32.mrf.mxu0
    %808 = vdwg.mxu0
    %v809 = vunpack.c.l.b16 %v262
    %v810 = vpack.c.b16 %v809, %v809
    %811 = vrot.lane.b32.xlu0 %v810, 96
    %v812 = vpop.permute.xlu0 %811
    %v814 = vsel %vm283, %v262, 0
    %v817 = vsel %vm283, %v812, 0
    %819 = vmatpush.bf16.xpose.msra.mxu0 0
    %820 = vmatpush.bf16.xpose.msra.mxu0 0
    %821 = vmatpush.bf16.xpose.msra.mxu0 0
    %822 = vmatpush.bf16.xpose.msra.mxu0 0
    %823 = vmatpush.bf16.xpose.msra.mxu0 0
    %824 = vmatpush.bf16.xpose.msra.mxu0 0
    %825 = vmatpush.bf16.xpose.msra.mxu0 0
    %826 = vmatpush.bf16.xpose.msra.mxu0 %v817
    %827 = vmatmul.bf16.gmra.mxu0 %v814
    %v828 = vpop.f32.mrf.mxu0
    %v829 = vadd.f32 0.0, %v828
    %v830 = vpop.f32.mrf.mxu0
    %831 = vdwg.mxu0
    %v832 = vunpack.c.l.b16 %v264
    %v833 = vpack.c.b16 %v832, %v832
    %834 = vrot.lane.b32.xlu0 %v833, 96
    %v835 = vpop.permute.xlu0 %834
    %v837 = vsel %vm283, %v264, 0
    %v840 = vsel %vm283, %v835, 0
    %842 = vmatpush.bf16.xpose.msra.mxu0 0
    %843 = vmatpush.bf16.xpose.msra.mxu0 0
    %844 = vmatpush.bf16.xpose.msra.mxu0 0
    %845 = vmatpush.bf16.xpose.msra.mxu0 0
    %846 = vmatpush.bf16.xpose.msra.mxu0 0
    %847 = vmatpush.bf16.xpose.msra.mxu0 0
    %848 = vmatpush.bf16.xpose.msra.mxu0 0
    %849 = vmatpush.bf16.xpose.msra.mxu0 %v840
    %850 = vmatmul.bf16.gmra.mxu0 %v837
    %v851 = vpop.f32.mrf.mxu0
    %v852 = vadd.f32 0.0, %v851
    %v853 = vpop.f32.mrf.mxu0
    %854 = vdwg.mxu0
    %v855 = vunpack.c.l.b16 %v266
    %v856 = vpack.c.b16 %v855, %v855
    %857 = vrot.lane.b32.xlu0 %v856, 96
    %v858 = vpop.permute.xlu0 %857
    %v860 = vsel %vm283, %v266, 0
    %v863 = vsel %vm283, %v858, 0
    %865 = vmatpush.bf16.xpose.msra.mxu0 0
    %866 = vmatpush.bf16.xpose.msra.mxu0 0
    %867 = vmatpush.bf16.xpose.msra.mxu0 0
    %868 = vmatpush.bf16.xpose.msra.mxu0 0
    %869 = vmatpush.bf16.xpose.msra.mxu0 0
    %870 = vmatpush.bf16.xpose.msra.mxu0 0
    %871 = vmatpush.bf16.xpose.msra.mxu0 0
    %872 = vmatpush.bf16.xpose.msra.mxu0 %v863
    %873 = vmatmul.bf16.gmra.mxu0 %v860
    %v874 = vpop.f32.mrf.mxu0
    %v875 = vadd.f32 0.0, %v874
    %v876 = vpop.f32.mrf.mxu0
    %877 = vdwg.mxu0
    %v878 = vunpack.c.l.b16 %v268
    %v879 = vpack.c.b16 %v878, %v878
    %880 = vrot.lane.b32.xlu0 %v879, 96
    %v881 = vpop.permute.xlu0 %880
    %v883 = vsel %vm283, %v268, 0
    %v886 = vsel %vm283, %v881, 0
    %888 = vmatpush.bf16.xpose.msra.mxu0 0
    %889 = vmatpush.bf16.xpose.msra.mxu0 0
    %890 = vmatpush.bf16.xpose.msra.mxu0 0
    %891 = vmatpush.bf16.xpose.msra.mxu0 0
    %892 = vmatpush.bf16.xpose.msra.mxu0 0
    %893 = vmatpush.bf16.xpose.msra.mxu0 0
    %894 = vmatpush.bf16.xpose.msra.mxu0 0
    %895 = vmatpush.bf16.xpose.msra.mxu0 %v886
    %896 = vmatmul.bf16.gmra.mxu0 %v883
    %v897 = vpop.f32.mrf.mxu0
    %v898 = vadd.f32 0.0, %v897
    %v899 = vpop.f32.mrf.mxu0
    %900 = vdwg.mxu0
    %v901 = vunpack.c.l.b16 %v270
    %v902 = vpack.c.b16 %v901, %v901
    %903 = vrot.lane.b32.xlu0 %v902, 96
    %v904 = vpop.permute.xlu0 %903
    %v906 = vsel %vm283, %v270, 0
    %v909 = vsel %vm283, %v904, 0
    %911 = vmatpush.bf16.xpose.msra.mxu0 0
    %912 = vmatpush.bf16.xpose.msra.mxu0 0
    %913 = vmatpush.bf16.xpose.msra.mxu0 0
    %914 = vmatpush.bf16.xpose.msra.mxu0 0
    %915 = vmatpush.bf16.xpose.msra.mxu0 0
    %916 = vmatpush.bf16.xpose.msra.mxu0 0
    %917 = vmatpush.bf16.xpose.msra.mxu0 0
    %918 = vmatpush.bf16.xpose.msra.mxu0 %v909
    %919 = vmatmul.bf16.gmra.mxu0 %v906
    %v920 = vpop.f32.mrf.mxu0
    %v921 = vadd.f32 0.0, %v920
    %v922 = vpop.f32.mrf.mxu0
    %923 = vdwg.mxu0
    %v924 = vunpack.c.l.b16 %v272
    %v925 = vpack.c.b16 %v924, %v924
    %926 = vrot.lane.b32.xlu0 %v925, 96
    %v927 = vpop.permute.xlu0 %926
    %v929 = vsel %vm283, %v272, 0
    %v932 = vsel %vm283, %v927, 0
    %934 = vmatpush.bf16.xpose.msra.mxu0 0
    %935 = vmatpush.bf16.xpose.msra.mxu0 0
    %936 = vmatpush.bf16.xpose.msra.mxu0 0
    %937 = vmatpush.bf16.xpose.msra.mxu0 0
    %938 = vmatpush.bf16.xpose.msra.mxu0 0
    %939 = vmatpush.bf16.xpose.msra.mxu0 0
    %940 = vmatpush.bf16.xpose.msra.mxu0 0
    %941 = vmatpush.bf16.xpose.msra.mxu0 %v932
    %942 = vmatmul.bf16.gmra.mxu0 %v929
    %v943 = vpop.f32.mrf.mxu0
    %v944 = vadd.f32 0.0, %v943
    %v945 = vpop.f32.mrf.mxu0
    %946 = vdwg.mxu0
    %v947 = vunpack.c.l.b16 %v274
    %v948 = vpack.c.b16 %v947, %v947
    %949 = vrot.lane.b32.xlu0 %v948, 96
    %v950 = vpop.permute.xlu0 %949
    %v952 = vsel %vm283, %v274, 0
    %v955 = vsel %vm283, %v950, 0
    %957 = vmatpush.bf16.xpose.msra.mxu0 0
    %958 = vmatpush.bf16.xpose.msra.mxu0 0
    %959 = vmatpush.bf16.xpose.msra.mxu0 0
    %960 = vmatpush.bf16.xpose.msra.mxu0 0
    %961 = vmatpush.bf16.xpose.msra.mxu0 0
    %962 = vmatpush.bf16.xpose.msra.mxu0 0
    %963 = vmatpush.bf16.xpose.msra.mxu0 0
    %964 = vmatpush.bf16.xpose.msra.mxu0 %v955
    %965 = vmatmul.bf16.gmra.mxu0 %v952
    %v966 = vpop.f32.mrf.mxu0
    %v967 = vadd.f32 0.0, %v966
    %v968 = vpop.f32.mrf.mxu0
    %969 = vdwg.mxu0
    %v970 = vunpack.c.l.b16 %v276
    %v971 = vpack.c.b16 %v970, %v970
    %972 = vrot.lane.b32.xlu0 %v971, 96
    %v973 = vpop.permute.xlu0 %972
    %v975 = vsel %vm283, %v276, 0
    %v978 = vsel %vm283, %v973, 0
    %980 = vmatpush.bf16.xpose.msra.mxu0 0
    %981 = vmatpush.bf16.xpose.msra.mxu0 0
    %982 = vmatpush.bf16.xpose.msra.mxu0 0
    %983 = vmatpush.bf16.xpose.msra.mxu0 0
    %984 = vmatpush.bf16.xpose.msra.mxu0 0
    %985 = vmatpush.bf16.xpose.msra.mxu0 0
    %986 = vmatpush.bf16.xpose.msra.mxu0 0
    %987 = vmatpush.bf16.xpose.msra.mxu0 %v978
    %988 = vmatmul.bf16.gmra.mxu0 %v975
    %v989 = vpop.f32.mrf.mxu0
    %v990 = vadd.f32 0.0, %v989
    %v991 = vpop.f32.mrf.mxu0
    %992 = vdwg.mxu0
    %v993 = vunpack.c.l.b16 %v278
    %v994 = vpack.c.b16 %v993, %v993
    %995 = vrot.lane.b32.xlu0 %v994, 96
    %v996 = vpop.permute.xlu0 %995
    %v998 = vsel %vm283, %v278, 0
    %v1001 = vsel %vm283, %v996, 0
    %1003 = vmatpush.bf16.xpose.msra.mxu0 0
    %1004 = vmatpush.bf16.xpose.msra.mxu0 0
    %1005 = vmatpush.bf16.xpose.msra.mxu0 0
    %1006 = vmatpush.bf16.xpose.msra.mxu0 0
    %1007 = vmatpush.bf16.xpose.msra.mxu0 0
    %1008 = vmatpush.bf16.xpose.msra.mxu0 0
    %1009 = vmatpush.bf16.xpose.msra.mxu0 0
    %1010 = vmatpush.bf16.xpose.msra.mxu0 %v1001
    %1011 = vmatmul.bf16.gmra.mxu0 %v998
    %v1012 = vpop.f32.mrf.mxu0
    %v1013 = vadd.f32 0.0, %v1012
    %v1014 = vpop.f32.mrf.mxu0
    %1015 = vdwg.mxu0
    %v1016 = vmul.f32 %v300, 0.25
    %v1017 = vmul.f32 %v323, 0.25
    %v1018 = vmul.f32 %v346, 0.25
    %v1019 = vmul.f32 %v369, 0.25
    %v1020 = vmul.f32 %v392, 0.25
    %v1021 = vmul.f32 %v415, 0.25
    %v1022 = vmul.f32 %v438, 0.25
    %v1023 = vmul.f32 %v461, 0.25
    %v1024 = vmul.f32 %v484, 0.25
    %v1025 = vmul.f32 %v507, 0.25
    %v1026 = vmul.f32 %v530, 0.25
    %v1027 = vmul.f32 %v553, 0.25
    %v1028 = vmul.f32 %v576, 0.25
    %v1029 = vmul.f32 %v599, 0.25
    %v1030 = vmul.f32 %v622, 0.25
    %v1031 = vmul.f32 %v645, 0.25
    %v1032 = vmul.f32 %v668, 0.25
    %v1033 = vmul.f32 %v691, 0.25
    %v1034 = vmul.f32 %v714, 0.25
    %v1035 = vmul.f32 %v737, 0.25
    %v1036 = vmul.f32 %v760, 0.25
    %v1037 = vmul.f32 %v783, 0.25
    %v1038 = vmul.f32 %v806, 0.25
    %v1039 = vmul.f32 %v829, 0.25
    %v1040 = vmul.f32 %v852, 0.25
    %v1041 = vmul.f32 %v875, 0.25
    %v1042 = vmul.f32 %v898, 0.25
    %v1043 = vmul.f32 %v921, 0.25
    %v1044 = vmul.f32 %v944, 0.25
    %v1045 = vmul.f32 %v967, 0.25
    %v1046 = vmul.f32 %v990, 0.25
    %v1047 = vmul.f32 %v1013, 0.25
    %v1048 = vld [vmem:[%s1] sm:$0xff]
    %v1049 = vld [vmem:[%s1 + $0x8] sm:$0xff]
    %v1052 = vrot.slane %v1048, 1
    %v1053 = vrot.slane %v1048, 2
    %v1054 = vrot.slane %v1048, 3
    %v1055 = vrot.slane %v1048, 4
    %v1056 = vrot.slane %v1048, 5
    %v1057 = vrot.slane %v1048, 6
    %v1058 = vrot.slane %v1048, 7
    %v1059 = vrot.slane %v1049, 1
    %v1060 = vrot.slane %v1049, 2
    %v1061 = vrot.slane %v1049, 3
    %v1062 = vrot.slane %v1049, 4
    %v1063 = vrot.slane %v1049, 5
    %v1064 = vrot.slane %v1049, 6
    %v1065 = vrot.slane %v1049, 7
    %v1066 = vperm.slane %v1048, 0
    %v1067 = vperm.slane %v1052, 0
    %v1068 = vperm.slane %v1053, 0
    %v1069 = vperm.slane %v1054, 0
    %v1070 = vperm.slane %v1055, 0
    %v1071 = vperm.slane %v1056, 0
    %v1072 = vperm.slane %v1057, 0
    %v1073 = vperm.slane %v1058, 0
    %v1074 = vperm.slane %v1049, 0
    %v1075 = vperm.slane %v1059, 0
    %v1076 = vperm.slane %v1060, 0
    %v1077 = vperm.slane %v1061, 0
    %v1078 = vperm.slane %v1062, 0
    %v1079 = vperm.slane %v1063, 0
    %v1080 = vperm.slane %v1064, 0
    %v1081 = vperm.slane %v1065, 0
    %v1098 = vadd.f32 %v1016, %v1066
    %v1099 = vadd.f32 %v1017, %v1067
    %v1100 = vadd.f32 %v1018, %v1068
    %v1101 = vadd.f32 %v1019, %v1069
    %v1102 = vadd.f32 %v1020, %v1070
    %v1103 = vadd.f32 %v1021, %v1071
    %v1104 = vadd.f32 %v1022, %v1072
    %v1105 = vadd.f32 %v1023, %v1073
    %v1106 = vadd.f32 %v1024, %v1074
    %v1107 = vadd.f32 %v1025, %v1075
    %v1108 = vadd.f32 %v1026, %v1076
    %v1109 = vadd.f32 %v1027, %v1077
    %v1110 = vadd.f32 %v1028, %v1078
    %v1111 = vadd.f32 %v1029, %v1079
    %v1112 = vadd.f32 %v1030, %v1080
    %v1113 = vadd.f32 %v1031, %v1081
    %v1114 = vadd.f32 %v1032, %v1066
    %v1115 = vadd.f32 %v1033, %v1067
    %v1116 = vadd.f32 %v1034, %v1068
    %v1117 = vadd.f32 %v1035, %v1069
    %v1118 = vadd.f32 %v1036, %v1070
    %v1119 = vadd.f32 %v1037, %v1071
    %v1120 = vadd.f32 %v1038, %v1072
    %v1121 = vadd.f32 %v1039, %v1073
    %v1122 = vadd.f32 %v1040, %v1074
    %v1123 = vadd.f32 %v1041, %v1075
    %v1124 = vadd.f32 %v1042, %v1076
    %v1125 = vadd.f32 %v1043, %v1077
    %v1126 = vadd.f32 %v1044, %v1078
    %v1127 = vadd.f32 %v1045, %v1079
    %v1128 = vadd.f32 %v1046, %v1080
    %v1129 = vadd.f32 %v1047, %v1081
    %vm1130 = vcmask 64512
    %v1131 = vsel %vm1130, %v1098, -inf
    %1132 = vmax.xlane.f32.xlu0 %v1131
    %v1133 = vpop.xlane.xlu0 %1132
    %v1134 = vsel %vm1130, %v1099, -inf
    %1135 = vmax.xlane.f32.xlu0 %v1134
    %v1136 = vpop.xlane.xlu0 %1135
    %v1137 = vsel %vm1130, %v1100, -inf
    %1138 = vmax.xlane.f32.xlu0 %v1137
    %v1139 = vpop.xlane.xlu0 %1138
    %v1140 = vsel %vm1130, %v1101, -inf
    %1141 = vmax.xlane.f32.xlu0 %v1140
    %v1142 = vpop.xlane.xlu0 %1141
    %v1143 = vsel %vm1130, %v1102, -inf
    %1144 = vmax.xlane.f32.xlu0 %v1143
    %v1145 = vpop.xlane.xlu0 %1144
    %v1146 = vsel %vm1130, %v1103, -inf
    %1147 = vmax.xlane.f32.xlu0 %v1146
    %v1148 = vpop.xlane.xlu0 %1147
    %v1149 = vsel %vm1130, %v1104, -inf
    %1150 = vmax.xlane.f32.xlu0 %v1149
    %v1151 = vpop.xlane.xlu0 %1150
    %v1152 = vsel %vm1130, %v1105, -inf
    %1153 = vmax.xlane.f32.xlu0 %v1152
    %v1154 = vpop.xlane.xlu0 %1153
    %v1155 = vsel %vm1130, %v1106, -inf
    %1156 = vmax.xlane.f32.xlu0 %v1155
    %v1157 = vpop.xlane.xlu0 %1156
    %v1158 = vsel %vm1130, %v1107, -inf
    %1159 = vmax.xlane.f32.xlu0 %v1158
    %v1160 = vpop.xlane.xlu0 %1159
    %v1161 = vsel %vm1130, %v1108, -inf
    %1162 = vmax.xlane.f32.xlu0 %v1161
    %v1163 = vpop.xlane.xlu0 %1162
    %v1164 = vsel %vm1130, %v1109, -inf
    %1165 = vmax.xlane.f32.xlu0 %v1164
    %v1166 = vpop.xlane.xlu0 %1165
    %v1167 = vsel %vm1130, %v1110, -inf
    %1168 = vmax.xlane.f32.xlu0 %v1167
    %v1169 = vpop.xlane.xlu0 %1168
    %v1170 = vsel %vm1130, %v1111, -inf
    %1171 = vmax.xlane.f32.xlu0 %v1170
    %v1172 = vpop.xlane.xlu0 %1171
    %v1173 = vsel %vm1130, %v1112, -inf
    %1174 = vmax.xlane.f32.xlu0 %v1173
    %v1175 = vpop.xlane.xlu0 %1174
    %v1176 = vsel %vm1130, %v1113, -inf
    %1177 = vmax.xlane.f32.xlu0 %v1176
    %v1178 = vpop.xlane.xlu0 %1177
    %v1179 = vsel %vm1130, %v1114, -inf
    %1180 = vmax.xlane.f32.xlu0 %v1179
    %v1181 = vpop.xlane.xlu0 %1180
    %v1182 = vsel %vm1130, %v1115, -inf
    %1183 = vmax.xlane.f32.xlu0 %v1182
    %v1184 = vpop.xlane.xlu0 %1183
    %v1185 = vsel %vm1130, %v1116, -inf
    %1186 = vmax.xlane.f32.xlu0 %v1185
    %v1187 = vpop.xlane.xlu0 %1186
    %v1188 = vsel %vm1130, %v1117, -inf
    %1189 = vmax.xlane.f32.xlu0 %v1188
    %v1190 = vpop.xlane.xlu0 %1189
    %v1191 = vsel %vm1130, %v1118, -inf
    %1192 = vmax.xlane.f32.xlu0 %v1191
    %v1193 = vpop.xlane.xlu0 %1192
    %v1194 = vsel %vm1130, %v1119, -inf
    %1195 = vmax.xlane.f32.xlu0 %v1194
    %v1196 = vpop.xlane.xlu0 %1195
    %v1197 = vsel %vm1130, %v1120, -inf
    %1198 = vmax.xlane.f32.xlu0 %v1197
    %v1199 = vpop.xlane.xlu0 %1198
    %v1200 = vsel %vm1130, %v1121, -inf
    %1201 = vmax.xlane.f32.xlu0 %v1200
    %v1202 = vpop.xlane.xlu0 %1201
    %v1203 = vsel %vm1130, %v1122, -inf
    %1204 = vmax.xlane.f32.xlu0 %v1203
    %v1205 = vpop.xlane.xlu0 %1204
    %v1206 = vsel %vm1130, %v1123, -inf
    %1207 = vmax.xlane.f32.xlu0 %v1206
    %v1208 = vpop.xlane.xlu0 %1207
    %v1209 = vsel %vm1130, %v1124, -inf
    %1210 = vmax.xlane.f32.xlu0 %v1209
    %v1211 = vpop.xlane.xlu0 %1210
    %v1212 = vsel %vm1130, %v1125, -inf
    %1213 = vmax.xlane.f32.xlu0 %v1212
    %v1214 = vpop.xlane.xlu0 %1213
    %v1215 = vsel %vm1130, %v1126, -inf
    %1216 = vmax.xlane.f32.xlu0 %v1215
    %v1217 = vpop.xlane.xlu0 %1216
    %v1218 = vsel %vm1130, %v1127, -inf
    %1219 = vmax.xlane.f32.xlu0 %v1218
    %v1220 = vpop.xlane.xlu0 %1219
    %v1221 = vsel %vm1130, %v1128, -inf
    %1222 = vmax.xlane.f32.xlu0 %v1221
    %v1223 = vpop.xlane.xlu0 %1222
    %v1224 = vsel %vm1130, %v1129, -inf
    %1225 = vmax.xlane.f32.xlu0 %v1224
    %v1226 = vpop.xlane.xlu0 %1225
    %v1227 = vsub.f32 %v1098, %v1133
    %v1228 = vsub.f32 %v1099, %v1136
    %v1229 = vsub.f32 %v1100, %v1139
    %v1230 = vsub.f32 %v1101, %v1142
    %v1231 = vsub.f32 %v1102, %v1145
    %v1232 = vsub.f32 %v1103, %v1148
    %v1233 = vsub.f32 %v1104, %v1151
    %v1234 = vsub.f32 %v1105, %v1154
    %v1235 = vsub.f32 %v1106, %v1157
    %v1236 = vsub.f32 %v1107, %v1160
    %v1237 = vsub.f32 %v1108, %v1163
    %v1238 = vsub.f32 %v1109, %v1166
    %v1239 = vsub.f32 %v1110, %v1169
    %v1240 = vsub.f32 %v1111, %v1172
    %v1241 = vsub.f32 %v1112, %v1175
    %v1242 = vsub.f32 %v1113, %v1178
    %v1243 = vsub.f32 %v1114, %v1181
    %v1244 = vsub.f32 %v1115, %v1184
    %v1245 = vsub.f32 %v1116, %v1187
    %v1246 = vsub.f32 %v1117, %v1190
    %v1247 = vsub.f32 %v1118, %v1193
    %v1248 = vsub.f32 %v1119, %v1196
    %v1249 = vsub.f32 %v1120, %v1199
    %v1250 = vsub.f32 %v1121, %v1202
    %v1251 = vsub.f32 %v1122, %v1205
    %v1252 = vsub.f32 %v1123, %v1208
    %v1253 = vsub.f32 %v1124, %v1211
    %v1254 = vsub.f32 %v1125, %v1214
    %v1255 = vsub.f32 %v1126, %v1217
    %v1256 = vsub.f32 %v1127, %v1220
    %v1257 = vsub.f32 %v1128, %v1223
    %v1258 = vsub.f32 %v1129, %v1226
    %v1259 = vmul.f32 %v1227, 1.442695
    %v1260 = vpow.pop %v1259
    %v1261 = vmul.f32 %v1228, 1.442695
    %v1262 = vpow.pop %v1261
    %v1263 = vmul.f32 %v1229, 1.442695
    %v1264 = vpow.pop %v1263
    %v1265 = vmul.f32 %v1230, 1.442695
    %v1266 = vpow.pop %v1265
    %v1267 = vmul.f32 %v1231, 1.442695
    %v1268 = vpow.pop %v1267
    %v1269 = vmul.f32 %v1232, 1.442695
    %v1270 = vpow.pop %v1269
    %v1271 = vmul.f32 %v1233, 1.442695
    %v1272 = vpow.pop %v1271
    %v1273 = vmul.f32 %v1234, 1.442695
    %v1274 = vpow.pop %v1273
    %v1275 = vmul.f32 %v1235, 1.442695
    %v1276 = vpow.pop %v1275
    %v1277 = vmul.f32 %v1236, 1.442695
    %v1278 = vpow.pop %v1277
    %v1279 = vmul.f32 %v1237, 1.442695
    %v1280 = vpow.pop %v1279
    %v1281 = vmul.f32 %v1238, 1.442695
    %v1282 = vpow.pop %v1281
    %v1283 = vmul.f32 %v1239, 1.442695
    %v1284 = vpow.pop %v1283
    %v1285 = vmul.f32 %v1240, 1.442695
    %v1286 = vpow.pop %v1285
    %v1287 = vmul.f32 %v1241, 1.442695
    %v1288 = vpow.pop %v1287
    %v1289 = vmul.f32 %v1242, 1.442695
    %v1290 = vpow.pop %v1289
    %v1291 = vmul.f32 %v1243, 1.442695
    %v1292 = vpow.pop %v1291
    %v1293 = vmul.f32 %v1244, 1.442695
    %v1294 = vpow.pop %v1293
    %v1295 = vmul.f32 %v1245, 1.442695
    %v1296 = vpow.pop %v1295
    %v1297 = vmul.f32 %v1246, 1.442695
    %v1298 = vpow.pop %v1297
    %v1299 = vmul.f32 %v1247, 1.442695
    %v1300 = vpow.pop %v1299
    %v1301 = vmul.f32 %v1248, 1.442695
    %v1302 = vpow.pop %v1301
    %v1303 = vmul.f32 %v1249, 1.442695
    %v1304 = vpow.pop %v1303
    %v1305 = vmul.f32 %v1250, 1.442695
    %v1306 = vpow.pop %v1305
    %v1307 = vmul.f32 %v1251, 1.442695
    %v1308 = vpow.pop %v1307
    %v1309 = vmul.f32 %v1252, 1.442695
    %v1310 = vpow.pop %v1309
    %v1311 = vmul.f32 %v1253, 1.442695
    %v1312 = vpow.pop %v1311
    %v1313 = vmul.f32 %v1254, 1.442695
    %v1314 = vpow.pop %v1313
    %v1315 = vmul.f32 %v1255, 1.442695
    %v1316 = vpow.pop %v1315
    %v1317 = vmul.f32 %v1256, 1.442695
    %v1318 = vpow.pop %v1317
    %v1319 = vmul.f32 %v1257, 1.442695
    %v1320 = vpow.pop %v1319
    %v1321 = vmul.f32 %v1258, 1.442695
    %v1322 = vpow.pop %v1321
    %v1323 = vsel %vm1130, %v1260, 0.0
    %1324 = vadd.xlane.f32.xlu0 %v1323
    %v1325 = vpop.xlane.xlu0 %1324
    %v1326 = vsel %vm1130, %v1262, 0.0
    %1327 = vadd.xlane.f32.xlu0 %v1326
    %v1328 = vpop.xlane.xlu0 %1327
    %v1329 = vsel %vm1130, %v1264, 0.0
    %1330 = vadd.xlane.f32.xlu0 %v1329
    %v1331 = vpop.xlane.xlu0 %1330
    %v1332 = vsel %vm1130, %v1266, 0.0
    %1333 = vadd.xlane.f32.xlu0 %v1332
    %v1334 = vpop.xlane.xlu0 %1333
    %v1335 = vsel %vm1130, %v1268, 0.0
    %1336 = vadd.xlane.f32.xlu0 %v1335
    %v1337 = vpop.xlane.xlu0 %1336
    %v1338 = vsel %vm1130, %v1270, 0.0
    %1339 = vadd.xlane.f32.xlu0 %v1338
    %v1340 = vpop.xlane.xlu0 %1339
    %v1341 = vsel %vm1130, %v1272, 0.0
    %1342 = vadd.xlane.f32.xlu0 %v1341
    %v1343 = vpop.xlane.xlu0 %1342
    %v1344 = vsel %vm1130, %v1274, 0.0
    %1345 = vadd.xlane.f32.xlu0 %v1344
    %v1346 = vpop.xlane.xlu0 %1345
    %v1347 = vsel %vm1130, %v1276, 0.0
    %1348 = vadd.xlane.f32.xlu0 %v1347
    %v1349 = vpop.xlane.xlu0 %1348
    %v1350 = vsel %vm1130, %v1278, 0.0
    %1351 = vadd.xlane.f32.xlu0 %v1350
    %v1352 = vpop.xlane.xlu0 %1351
    %v1353 = vsel %vm1130, %v1280, 0.0
    %1354 = vadd.xlane.f32.xlu0 %v1353
    %v1355 = vpop.xlane.xlu0 %1354
    %v1356 = vsel %vm1130, %v1282, 0.0
    %1357 = vadd.xlane.f32.xlu0 %v1356
    %v1358 = vpop.xlane.xlu0 %1357
    %v1359 = vsel %vm1130, %v1284, 0.0
    %1360 = vadd.xlane.f32.xlu0 %v1359
    %v1361 = vpop.xlane.xlu0 %1360
    %v1362 = vsel %vm1130, %v1286, 0.0
    %1363 = vadd.xlane.f32.xlu0 %v1362
    %v1364 = vpop.xlane.xlu0 %1363
    %v1365 = vsel %vm1130, %v1288, 0.0
    %1366 = vadd.xlane.f32.xlu0 %v1365
    %v1367 = vpop.xlane.xlu0 %1366
    %v1368 = vsel %vm1130, %v1290, 0.0
    %1369 = vadd.xlane.f32.xlu0 %v1368
    %v1370 = vpop.xlane.xlu0 %1369
    %v1371 = vsel %vm1130, %v1292, 0.0
    %1372 = vadd.xlane.f32.xlu0 %v1371
    %v1373 = vpop.xlane.xlu0 %1372
    %v1374 = vsel %vm1130, %v1294, 0.0
    %1375 = vadd.xlane.f32.xlu0 %v1374
    %v1376 = vpop.xlane.xlu0 %1375
    %v1377 = vsel %vm1130, %v1296, 0.0
    %1378 = vadd.xlane.f32.xlu0 %v1377
    %v1379 = vpop.xlane.xlu0 %1378
    %v1380 = vsel %vm1130, %v1298, 0.0
    %1381 = vadd.xlane.f32.xlu0 %v1380
    %v1382 = vpop.xlane.xlu0 %1381
    %v1383 = vsel %vm1130, %v1300, 0.0
    %1384 = vadd.xlane.f32.xlu0 %v1383
    %v1385 = vpop.xlane.xlu0 %1384
    %v1386 = vsel %vm1130, %v1302, 0.0
    %1387 = vadd.xlane.f32.xlu0 %v1386
    %v1388 = vpop.xlane.xlu0 %1387
    %v1389 = vsel %vm1130, %v1304, 0.0
    %1390 = vadd.xlane.f32.xlu0 %v1389
    %v1391 = vpop.xlane.xlu0 %1390
    %v1392 = vsel %vm1130, %v1306, 0.0
    %1393 = vadd.xlane.f32.xlu0 %v1392
    %v1394 = vpop.xlane.xlu0 %1393
    %v1395 = vsel %vm1130, %v1308, 0.0
    %1396 = vadd.xlane.f32.xlu0 %v1395
    %v1397 = vpop.xlane.xlu0 %1396
    %v1398 = vsel %vm1130, %v1310, 0.0
    %1399 = vadd.xlane.f32.xlu0 %v1398
    %v1400 = vpop.xlane.xlu0 %1399
    %v1401 = vsel %vm1130, %v1312, 0.0
    %1402 = vadd.xlane.f32.xlu0 %v1401
    %v1403 = vpop.xlane.xlu0 %1402
    %v1404 = vsel %vm1130, %v1314, 0.0
    %1405 = vadd.xlane.f32.xlu0 %v1404
    %v1406 = vpop.xlane.xlu0 %1405
    %v1407 = vsel %vm1130, %v1316, 0.0
    %1408 = vadd.xlane.f32.xlu0 %v1407
    %v1409 = vpop.xlane.xlu0 %1408
    %v1410 = vsel %vm1130, %v1318, 0.0
    %1411 = vadd.xlane.f32.xlu0 %v1410
    %v1412 = vpop.xlane.xlu0 %1411
    %v1413 = vsel %vm1130, %v1320, 0.0
    %1414 = vadd.xlane.f32.xlu0 %v1413
    %v1415 = vpop.xlane.xlu0 %1414
    %v1416 = vsel %vm1130, %v1322, 0.0
    %1417 = vadd.xlane.f32.xlu0 %v1416
    %v1418 = vpop.xlane.xlu0 %1417
    %v1419 = vrcp.pop %v1325
    %v1420 = vrcp.pop %v1328
    %v1421 = vrcp.pop %v1331
    %v1422 = vrcp.pop %v1334
    %v1423 = vrcp.pop %v1337
    %v1424 = vrcp.pop %v1340
    %v1425 = vrcp.pop %v1343
    %v1426 = vrcp.pop %v1346
    %v1427 = vrcp.pop %v1349
    %v1428 = vrcp.pop %v1352
    %v1429 = vrcp.pop %v1355
    %v1430 = vrcp.pop %v1358
    %v1431 = vrcp.pop %v1361
    %v1432 = vrcp.pop %v1364
    %v1433 = vrcp.pop %v1367
    %v1434 = vrcp.pop %v1370
    %v1435 = vrcp.pop %v1373
    %v1436 = vrcp.pop %v1376
    %v1437 = vrcp.pop %v1379
    %v1438 = vrcp.pop %v1382
    %v1439 = vrcp.pop %v1385
    %v1440 = vrcp.pop %v1388
    %v1441 = vrcp.pop %v1391
    %v1442 = vrcp.pop %v1394
    %v1443 = vrcp.pop %v1397
    %v1444 = vrcp.pop %v1400
    %v1445 = vrcp.pop %v1403
    %v1446 = vrcp.pop %v1406
    %v1447 = vrcp.pop %v1409
    %v1448 = vrcp.pop %v1412
    %v1449 = vrcp.pop %v1415
    %v1450 = vrcp.pop %v1418
    %v1451 = vmul.f32 %v1260, %v1419
    %v1452 = vmul.f32 %v1262, %v1420
    %v1453 = vmul.f32 %v1264, %v1421
    %v1454 = vmul.f32 %v1266, %v1422
    %v1455 = vmul.f32 %v1268, %v1423
    %v1456 = vmul.f32 %v1270, %v1424
    %v1457 = vmul.f32 %v1272, %v1425
    %v1458 = vmul.f32 %v1274, %v1426
    %v1459 = vmul.f32 %v1276, %v1427
    %v1460 = vmul.f32 %v1278, %v1428
    %v1461 = vmul.f32 %v1280, %v1429
    %v1462 = vmul.f32 %v1282, %v1430
    %v1463 = vmul.f32 %v1284, %v1431
    %v1464 = vmul.f32 %v1286, %v1432
    %v1465 = vmul.f32 %v1288, %v1433
    %v1466 = vmul.f32 %v1290, %v1434
    %v1467 = vmul.f32 %v1292, %v1435
    %v1468 = vmul.f32 %v1294, %v1436
    %v1469 = vmul.f32 %v1296, %v1437
    %v1470 = vmul.f32 %v1298, %v1438
    %v1471 = vmul.f32 %v1300, %v1439
    %v1472 = vmul.f32 %v1302, %v1440
    %v1473 = vmul.f32 %v1304, %v1441
    %v1474 = vmul.f32 %v1306, %v1442
    %v1475 = vmul.f32 %v1308, %v1443
    %v1476 = vmul.f32 %v1310, %v1444
    %v1477 = vmul.f32 %v1312, %v1445
    %v1478 = vmul.f32 %v1314, %v1446
    %v1479 = vmul.f32 %v1316, %v1447
    %v1480 = vmul.f32 %v1318, %v1448
    %v1481 = vmul.f32 %v1320, %v1449
    %v1482 = vmul.f32 %v1322, %v1450
    %v1483 = vpack.c.bf16 %v1451, %v1451
    %v1484 = vpack.c.bf16 %v1452, %v1452
    %v1485 = vpack.c.bf16 %v1453, %v1453
    %v1486 = vpack.c.bf16 %v1454, %v1454
    %v1487 = vpack.c.bf16 %v1455, %v1455
    %v1488 = vpack.c.bf16 %v1456, %v1456
    %v1489 = vpack.c.bf16 %v1457, %v1457
    %v1490 = vpack.c.bf16 %v1458, %v1458
    %v1491 = vpack.c.bf16 %v1459, %v1459
    %v1492 = vpack.c.bf16 %v1460, %v1460
    %v1493 = vpack.c.bf16 %v1461, %v1461
    %v1494 = vpack.c.bf16 %v1462, %v1462
    %v1495 = vpack.c.bf16 %v1463, %v1463
    %v1496 = vpack.c.bf16 %v1464, %v1464
    %v1497 = vpack.c.bf16 %v1465, %v1465
    %v1498 = vpack.c.bf16 %v1466, %v1466
    %v1499 = vpack.c.bf16 %v1467, %v1467
    %v1500 = vpack.c.bf16 %v1468, %v1468
    %v1501 = vpack.c.bf16 %v1469, %v1469
    %v1502 = vpack.c.bf16 %v1470, %v1470
    %v1503 = vpack.c.bf16 %v1471, %v1471
    %v1504 = vpack.c.bf16 %v1472, %v1472
    %v1505 = vpack.c.bf16 %v1473, %v1473
    %v1506 = vpack.c.bf16 %v1474, %v1474
    %v1507 = vpack.c.bf16 %v1475, %v1475
    %v1508 = vpack.c.bf16 %v1476, %v1476
    %v1509 = vpack.c.bf16 %v1477, %v1477
    %v1510 = vpack.c.bf16 %v1478, %v1478
    %v1511 = vpack.c.bf16 %v1479, %v1479
    %v1512 = vpack.c.bf16 %v1480, %v1480
    %v1513 = vpack.c.bf16 %v1481, %v1481
    %v1514 = vpack.c.bf16 %v1482, %v1482
    %1515 = vrot.lane.b32.xlu0 %v280, 64
    %v1516 = vpop.permute.xlu0 %1515
    %v1518 = vsel %vm1130, %v1483, 0
    %vm1520 = vcmask 1043456
    %v1522 = vsel %vm1520, %v1516, 0
    %1524 = vmatpush.bf16.msra.mxu0 0
    %1525 = vmatpush.bf16.msra.mxu0 0
    %1526 = vmatpush.bf16.msra.mxu0 0
    %1527 = vmatpush.bf16.msra.mxu0 0
    %1528 = vmatpush.bf16.msra.mxu0 0
    %1529 = vmatpush.bf16.msra.mxu0 0
    %1530 = vmatpush.bf16.msra.mxu0 0
    %1531 = vmatpush.bf16.msra.mxu0 %v1522
    %1532 = vmatmul.bf16.gmra.mxu0 %v1518
    %v1533 = vpop.f32.mrf.mxu0
    %v1534 = vadd.f32 0.0, %v1533
    %v1535 = vpop.f32.mrf.mxu0
    %1536 = vdwg.mxu0
    %1537 = vrot.lane.b32.xlu0 %v304, 64
    %v1538 = vpop.permute.xlu0 %1537
    %v1540 = vsel %vm1130, %v1484, 0
    %v1543 = vsel %vm1520, %v1538, 0
    %1545 = vmatpush.bf16.msra.mxu0 0
    %1546 = vmatpush.bf16.msra.mxu0 0
    %1547 = vmatpush.bf16.msra.mxu0 0
    %1548 = vmatpush.bf16.msra.mxu0 0
    %1549 = vmatpush.bf16.msra.mxu0 0
    %1550 = vmatpush.bf16.msra.mxu0 0
    %1551 = vmatpush.bf16.msra.mxu0 0
    %1552 = vmatpush.bf16.msra.mxu0 %v1543
    %1553 = vmatmul.bf16.gmra.mxu0 %v1540
    %v1554 = vpop.f32.mrf.mxu0
    %v1555 = vadd.f32 0.0, %v1554
    %v1556 = vpop.f32.mrf.mxu0
    %1557 = vdwg.mxu0
    %1558 = vrot.lane.b32.xlu0 %v327, 64
    %v1559 = vpop.permute.xlu0 %1558
    %v1561 = vsel %vm1130, %v1485, 0
    %v1564 = vsel %vm1520, %v1559, 0
    %1566 = vmatpush.bf16.msra.mxu0 0
    %1567 = vmatpush.bf16.msra.mxu0 0
    %1568 = vmatpush.bf16.msra.mxu0 0
    %1569 = vmatpush.bf16.msra.mxu0 0
    %1570 = vmatpush.bf16.msra.mxu0 0
    %1571 = vmatpush.bf16.msra.mxu0 0
    %1572 = vmatpush.bf16.msra.mxu0 0
    %1573 = vmatpush.bf16.msra.mxu0 %v1564
    %1574 = vmatmul.bf16.gmra.mxu0 %v1561
    %v1575 = vpop.f32.mrf.mxu0
    %v1576 = vadd.f32 0.0, %v1575
    %v1577 = vpop.f32.mrf.mxu0
    %1578 = vdwg.mxu0
    %1579 = vrot.lane.b32.xlu0 %v350, 64
    %v1580 = vpop.permute.xlu0 %1579
    %v1582 = vsel %vm1130, %v1486, 0
    %v1585 = vsel %vm1520, %v1580, 0
    %1587 = vmatpush.bf16.msra.mxu0 0
    %1588 = vmatpush.bf16.msra.mxu0 0
    %1589 = vmatpush.bf16.msra.mxu0 0
    %1590 = vmatpush.bf16.msra.mxu0 0
    %1591 = vmatpush.bf16.msra.mxu0 0
    %1592 = vmatpush.bf16.msra.mxu0 0
    %1593 = vmatpush.bf16.msra.mxu0 0
    %1594 = vmatpush.bf16.msra.mxu0 %v1585
    %1595 = vmatmul.bf16.gmra.mxu0 %v1582
    %v1596 = vpop.f32.mrf.mxu0
    %v1597 = vadd.f32 0.0, %v1596
    %v1598 = vpop.f32.mrf.mxu0
    %1599 = vdwg.mxu0
    %1600 = vrot.lane.b32.xlu0 %v373, 64
    %v1601 = vpop.permute.xlu0 %1600
    %v1603 = vsel %vm1130, %v1487, 0
    %v1606 = vsel %vm1520, %v1601, 0
    %1608 = vmatpush.bf16.msra.mxu0 0
    %1609 = vmatpush.bf16.msra.mxu0 0
    %1610 = vmatpush.bf16.msra.mxu0 0
    %1611 = vmatpush.bf16.msra.mxu0 0
    %1612 = vmatpush.bf16.msra.mxu0 0
    %1613 = vmatpush.bf16.msra.mxu0 0
    %1614 = vmatpush.bf16.msra.mxu0 0
    %1615 = vmatpush.bf16.msra.mxu0 %v1606
    %1616 = vmatmul.bf16.gmra.mxu0 %v1603
    %v1617 = vpop.f32.mrf.mxu0
    %v1618 = vadd.f32 0.0, %v1617
    %v1619 = vpop.f32.mrf.mxu0
    %1620 = vdwg.mxu0
    %1621 = vrot.lane.b32.xlu0 %v396, 64
    %v1622 = vpop.permute.xlu0 %1621
    %v1624 = vsel %vm1130, %v1488, 0
    %v1627 = vsel %vm1520, %v1622, 0
    %1629 = vmatpush.bf16.msra.mxu0 0
    %1630 = vmatpush.bf16.msra.mxu0 0
    %1631 = vmatpush.bf16.msra.mxu0 0
    %1632 = vmatpush.bf16.msra.mxu0 0
    %1633 = vmatpush.bf16.msra.mxu0 0
    %1634 = vmatpush.bf16.msra.mxu0 0
    %1635 = vmatpush.bf16.msra.mxu0 0
    %1636 = vmatpush.bf16.msra.mxu0 %v1627
    %1637 = vmatmul.bf16.gmra.mxu0 %v1624
    %v1638 = vpop.f32.mrf.mxu0
    %v1639 = vadd.f32 0.0, %v1638
    %v1640 = vpop.f32.mrf.mxu0
    %1641 = vdwg.mxu0
    %1642 = vrot.lane.b32.xlu0 %v419, 64
    %v1643 = vpop.permute.xlu0 %1642
    %v1645 = vsel %vm1130, %v1489, 0
    %v1648 = vsel %vm1520, %v1643, 0
    %1650 = vmatpush.bf16.msra.mxu0 0
    %1651 = vmatpush.bf16.msra.mxu0 0
    %1652 = vmatpush.bf16.msra.mxu0 0
    %1653 = vmatpush.bf16.msra.mxu0 0
    %1654 = vmatpush.bf16.msra.mxu0 0
    %1655 = vmatpush.bf16.msra.mxu0 0
    %1656 = vmatpush.bf16.msra.mxu0 0
    %1657 = vmatpush.bf16.msra.mxu0 %v1648
    %1658 = vmatmul.bf16.gmra.mxu0 %v1645
    %v1659 = vpop.f32.mrf.mxu0
    %v1660 = vadd.f32 0.0, %v1659
    %v1661 = vpop.f32.mrf.mxu0
    %1662 = vdwg.mxu0
    %1663 = vrot.lane.b32.xlu0 %v442, 64
    %v1664 = vpop.permute.xlu0 %1663
    %v1666 = vsel %vm1130, %v1490, 0
    %v1669 = vsel %vm1520, %v1664, 0
    %1671 = vmatpush.bf16.msra.mxu0 0
    %1672 = vmatpush.bf16.msra.mxu0 0
    %1673 = vmatpush.bf16.msra.mxu0 0
    %1674 = vmatpush.bf16.msra.mxu0 0
    %1675 = vmatpush.bf16.msra.mxu0 0
    %1676 = vmatpush.bf16.msra.mxu0 0
    %1677 = vmatpush.bf16.msra.mxu0 0
    %1678 = vmatpush.bf16.msra.mxu0 %v1669
    %1679 = vmatmul.bf16.gmra.mxu0 %v1666
    %v1680 = vpop.f32.mrf.mxu0
    %v1681 = vadd.f32 0.0, %v1680
    %v1682 = vpop.f32.mrf.mxu0
    %1683 = vdwg.mxu0
    %1684 = vrot.lane.b32.xlu0 %v465, 64
    %v1685 = vpop.permute.xlu0 %1684
    %v1687 = vsel %vm1130, %v1491, 0
    %v1690 = vsel %vm1520, %v1685, 0
    %1692 = vmatpush.bf16.msra.mxu0 0
    %1693 = vmatpush.bf16.msra.mxu0 0
    %1694 = vmatpush.bf16.msra.mxu0 0
    %1695 = vmatpush.bf16.msra.mxu0 0
    %1696 = vmatpush.bf16.msra.mxu0 0
    %1697 = vmatpush.bf16.msra.mxu0 0
    %1698 = vmatpush.bf16.msra.mxu0 0
    %1699 = vmatpush.bf16.msra.mxu0 %v1690
    %1700 = vmatmul.bf16.gmra.mxu0 %v1687
    %v1701 = vpop.f32.mrf.mxu0
    %v1702 = vadd.f32 0.0, %v1701
    %v1703 = vpop.f32.mrf.mxu0
    %1704 = vdwg.mxu0
    %1705 = vrot.lane.b32.xlu0 %v488, 64
    %v1706 = vpop.permute.xlu0 %1705
    %v1708 = vsel %vm1130, %v1492, 0
    %v1711 = vsel %vm1520, %v1706, 0
    %1713 = vmatpush.bf16.msra.mxu0 0
    %1714 = vmatpush.bf16.msra.mxu0 0
    %1715 = vmatpush.bf16.msra.mxu0 0
    %1716 = vmatpush.bf16.msra.mxu0 0
    %1717 = vmatpush.bf16.msra.mxu0 0
    %1718 = vmatpush.bf16.msra.mxu0 0
    %1719 = vmatpush.bf16.msra.mxu0 0
    %1720 = vmatpush.bf16.msra.mxu0 %v1711
    %1721 = vmatmul.bf16.gmra.mxu0 %v1708
    %v1722 = vpop.f32.mrf.mxu0
    %v1723 = vadd.f32 0.0, %v1722
    %v1724 = vpop.f32.mrf.mxu0
    %1725 = vdwg.mxu0
    %1726 = vrot.lane.b32.xlu0 %v511, 64
    %v1727 = vpop.permute.xlu0 %1726
    %v1729 = vsel %vm1130, %v1493, 0
    %v1732 = vsel %vm1520, %v1727, 0
    %1734 = vmatpush.bf16.msra.mxu0 0
    %1735 = vmatpush.bf16.msra.mxu0 0
    %1736 = vmatpush.bf16.msra.mxu0 0
    %1737 = vmatpush.bf16.msra.mxu0 0
    %1738 = vmatpush.bf16.msra.mxu0 0
    %1739 = vmatpush.bf16.msra.mxu0 0
    %1740 = vmatpush.bf16.msra.mxu0 0
    %1741 = vmatpush.bf16.msra.mxu0 %v1732
    %1742 = vmatmul.bf16.gmra.mxu0 %v1729
    %v1743 = vpop.f32.mrf.mxu0
    %v1744 = vadd.f32 0.0, %v1743
    %v1745 = vpop.f32.mrf.mxu0
    %1746 = vdwg.mxu0
    %1747 = vrot.lane.b32.xlu0 %v534, 64
    %v1748 = vpop.permute.xlu0 %1747
    %v1750 = vsel %vm1130, %v1494, 0
    %v1753 = vsel %vm1520, %v1748, 0
    %1755 = vmatpush.bf16.msra.mxu0 0
    %1756 = vmatpush.bf16.msra.mxu0 0
    %1757 = vmatpush.bf16.msra.mxu0 0
    %1758 = vmatpush.bf16.msra.mxu0 0
    %1759 = vmatpush.bf16.msra.mxu0 0
    %1760 = vmatpush.bf16.msra.mxu0 0
    %1761 = vmatpush.bf16.msra.mxu0 0
    %1762 = vmatpush.bf16.msra.mxu0 %v1753
    %1763 = vmatmul.bf16.gmra.mxu0 %v1750
    %v1764 = vpop.f32.mrf.mxu0
    %v1765 = vadd.f32 0.0, %v1764
    %v1766 = vpop.f32.mrf.mxu0
    %1767 = vdwg.mxu0
    %1768 = vrot.lane.b32.xlu0 %v557, 64
    %v1769 = vpop.permute.xlu0 %1768
    %v1771 = vsel %vm1130, %v1495, 0
    %v1774 = vsel %vm1520, %v1769, 0
    %1776 = vmatpush.bf16.msra.mxu0 0
    %1777 = vmatpush.bf16.msra.mxu0 0
    %1778 = vmatpush.bf16.msra.mxu0 0
    %1779 = vmatpush.bf16.msra.mxu0 0
    %1780 = vmatpush.bf16.msra.mxu0 0
    %1781 = vmatpush.bf16.msra.mxu0 0
    %1782 = vmatpush.bf16.msra.mxu0 0
    %1783 = vmatpush.bf16.msra.mxu0 %v1774
    %1784 = vmatmul.bf16.gmra.mxu0 %v1771
    %v1785 = vpop.f32.mrf.mxu0
    %v1786 = vadd.f32 0.0, %v1785
    %v1787 = vpop.f32.mrf.mxu0
    %1788 = vdwg.mxu0
    %1789 = vrot.lane.b32.xlu0 %v580, 64
    %v1790 = vpop.permute.xlu0 %1789
    %v1792 = vsel %vm1130, %v1496, 0
    %v1795 = vsel %vm1520, %v1790, 0
    %1797 = vmatpush.bf16.msra.mxu0 0
    %1798 = vmatpush.bf16.msra.mxu0 0
    %1799 = vmatpush.bf16.msra.mxu0 0
    %1800 = vmatpush.bf16.msra.mxu0 0
    %1801 = vmatpush.bf16.msra.mxu0 0
    %1802 = vmatpush.bf16.msra.mxu0 0
    %1803 = vmatpush.bf16.msra.mxu0 0
    %1804 = vmatpush.bf16.msra.mxu0 %v1795
    %1805 = vmatmul.bf16.gmra.mxu0 %v1792
    %v1806 = vpop.f32.mrf.mxu0
    %v1807 = vadd.f32 0.0, %v1806
    %v1808 = vpop.f32.mrf.mxu0
    %1809 = vdwg.mxu0
    %1810 = vrot.lane.b32.xlu0 %v603, 64
    %v1811 = vpop.permute.xlu0 %1810
    %v1813 = vsel %vm1130, %v1497, 0
    %v1816 = vsel %vm1520, %v1811, 0
    %1818 = vmatpush.bf16.msra.mxu0 0
    %1819 = vmatpush.bf16.msra.mxu0 0
    %1820 = vmatpush.bf16.msra.mxu0 0
    %1821 = vmatpush.bf16.msra.mxu0 0
    %1822 = vmatpush.bf16.msra.mxu0 0
    %1823 = vmatpush.bf16.msra.mxu0 0
    %1824 = vmatpush.bf16.msra.mxu0 0
    %1825 = vmatpush.bf16.msra.mxu0 %v1816
    %1826 = vmatmul.bf16.gmra.mxu0 %v1813
    %v1827 = vpop.f32.mrf.mxu0
    %v1828 = vadd.f32 0.0, %v1827
    %v1829 = vpop.f32.mrf.mxu0
    %1830 = vdwg.mxu0
    %1831 = vrot.lane.b32.xlu0 %v626, 64
    %v1832 = vpop.permute.xlu0 %1831
    %v1834 = vsel %vm1130, %v1498, 0
    %v1837 = vsel %vm1520, %v1832, 0
    %1839 = vmatpush.bf16.msra.mxu0 0
    %1840 = vmatpush.bf16.msra.mxu0 0
    %1841 = vmatpush.bf16.msra.mxu0 0
    %1842 = vmatpush.bf16.msra.mxu0 0
    %1843 = vmatpush.bf16.msra.mxu0 0
    %1844 = vmatpush.bf16.msra.mxu0 0
    %1845 = vmatpush.bf16.msra.mxu0 0
    %1846 = vmatpush.bf16.msra.mxu0 %v1837
    %1847 = vmatmul.bf16.gmra.mxu0 %v1834
    %v1848 = vpop.f32.mrf.mxu0
    %v1849 = vadd.f32 0.0, %v1848
    %v1850 = vpop.f32.mrf.mxu0
    %1851 = vdwg.mxu0
    %1852 = vrot.lane.b32.xlu0 %v649, 64
    %v1853 = vpop.permute.xlu0 %1852
    %v1855 = vsel %vm1130, %v1499, 0
    %v1858 = vsel %vm1520, %v1853, 0
    %1860 = vmatpush.bf16.msra.mxu0 0
    %1861 = vmatpush.bf16.msra.mxu0 0
    %1862 = vmatpush.bf16.msra.mxu0 0
    %1863 = vmatpush.bf16.msra.mxu0 0
    %1864 = vmatpush.bf16.msra.mxu0 0
    %1865 = vmatpush.bf16.msra.mxu0 0
    %1866 = vmatpush.bf16.msra.mxu0 0
    %1867 = vmatpush.bf16.msra.mxu0 %v1858
    %1868 = vmatmul.bf16.gmra.mxu0 %v1855
    %v1869 = vpop.f32.mrf.mxu0
    %v1870 = vadd.f32 0.0, %v1869
    %v1871 = vpop.f32.mrf.mxu0
    %1872 = vdwg.mxu0
    %1873 = vrot.lane.b32.xlu0 %v672, 64
    %v1874 = vpop.permute.xlu0 %1873
    %v1876 = vsel %vm1130, %v1500, 0
    %v1879 = vsel %vm1520, %v1874, 0
    %1881 = vmatpush.bf16.msra.mxu0 0
    %1882 = vmatpush.bf16.msra.mxu0 0
    %1883 = vmatpush.bf16.msra.mxu0 0
    %1884 = vmatpush.bf16.msra.mxu0 0
    %1885 = vmatpush.bf16.msra.mxu0 0
    %1886 = vmatpush.bf16.msra.mxu0 0
    %1887 = vmatpush.bf16.msra.mxu0 0
    %1888 = vmatpush.bf16.msra.mxu0 %v1879
    %1889 = vmatmul.bf16.gmra.mxu0 %v1876
    %v1890 = vpop.f32.mrf.mxu0
    %v1891 = vadd.f32 0.0, %v1890
    %v1892 = vpop.f32.mrf.mxu0
    %1893 = vdwg.mxu0
    %1894 = vrot.lane.b32.xlu0 %v695, 64
    %v1895 = vpop.permute.xlu0 %1894
    %v1897 = vsel %vm1130, %v1501, 0
    %v1900 = vsel %vm1520, %v1895, 0
    %1902 = vmatpush.bf16.msra.mxu0 0
    %1903 = vmatpush.bf16.msra.mxu0 0
    %1904 = vmatpush.bf16.msra.mxu0 0
    %1905 = vmatpush.bf16.msra.mxu0 0
    %1906 = vmatpush.bf16.msra.mxu0 0
    %1907 = vmatpush.bf16.msra.mxu0 0
    %1908 = vmatpush.bf16.msra.mxu0 0
    %1909 = vmatpush.bf16.msra.mxu0 %v1900
    %1910 = vmatmul.bf16.gmra.mxu0 %v1897
    %v1911 = vpop.f32.mrf.mxu0
    %v1912 = vadd.f32 0.0, %v1911
    %v1913 = vpop.f32.mrf.mxu0
    %1914 = vdwg.mxu0
    %1915 = vrot.lane.b32.xlu0 %v718, 64
    %v1916 = vpop.permute.xlu0 %1915
    %v1918 = vsel %vm1130, %v1502, 0
    %v1921 = vsel %vm1520, %v1916, 0
    %1923 = vmatpush.bf16.msra.mxu0 0
    %1924 = vmatpush.bf16.msra.mxu0 0
    %1925 = vmatpush.bf16.msra.mxu0 0
    %1926 = vmatpush.bf16.msra.mxu0 0
    %1927 = vmatpush.bf16.msra.mxu0 0
    %1928 = vmatpush.bf16.msra.mxu0 0
    %1929 = vmatpush.bf16.msra.mxu0 0
    %1930 = vmatpush.bf16.msra.mxu0 %v1921
    %1931 = vmatmul.bf16.gmra.mxu0 %v1918
    %v1932 = vpop.f32.mrf.mxu0
    %v1933 = vadd.f32 0.0, %v1932
    %v1934 = vpop.f32.mrf.mxu0
    %1935 = vdwg.mxu0
    %1936 = vrot.lane.b32.xlu0 %v741, 64
    %v1937 = vpop.permute.xlu0 %1936
    %v1939 = vsel %vm1130, %v1503, 0
    %v1942 = vsel %vm1520, %v1937, 0
    %1944 = vmatpush.bf16.msra.mxu0 0
    %1945 = vmatpush.bf16.msra.mxu0 0
    %1946 = vmatpush.bf16.msra.mxu0 0
    %1947 = vmatpush.bf16.msra.mxu0 0
    %1948 = vmatpush.bf16.msra.mxu0 0
    %1949 = vmatpush.bf16.msra.mxu0 0
    %1950 = vmatpush.bf16.msra.mxu0 0
    %1951 = vmatpush.bf16.msra.mxu0 %v1942
    %1952 = vmatmul.bf16.gmra.mxu0 %v1939
    %v1953 = vpop.f32.mrf.mxu0
    %v1954 = vadd.f32 0.0, %v1953
    %v1955 = vpop.f32.mrf.mxu0
    %1956 = vdwg.mxu0
    %1957 = vrot.lane.b32.xlu0 %v764, 64
    %v1958 = vpop.permute.xlu0 %1957
    %v1960 = vsel %vm1130, %v1504, 0
    %v1963 = vsel %vm1520, %v1958, 0
    %1965 = vmatpush.bf16.msra.mxu0 0
    %1966 = vmatpush.bf16.msra.mxu0 0
    %1967 = vmatpush.bf16.msra.mxu0 0
    %1968 = vmatpush.bf16.msra.mxu0 0
    %1969 = vmatpush.bf16.msra.mxu0 0
    %1970 = vmatpush.bf16.msra.mxu0 0
    %1971 = vmatpush.bf16.msra.mxu0 0
    %1972 = vmatpush.bf16.msra.mxu0 %v1963
    %1973 = vmatmul.bf16.gmra.mxu0 %v1960
    %v1974 = vpop.f32.mrf.mxu0
    %v1975 = vadd.f32 0.0, %v1974
    %v1976 = vpop.f32.mrf.mxu0
    %1977 = vdwg.mxu0
    %1978 = vrot.lane.b32.xlu0 %v787, 64
    %v1979 = vpop.permute.xlu0 %1978
    %v1981 = vsel %vm1130, %v1505, 0
    %v1984 = vsel %vm1520, %v1979, 0
    %1986 = vmatpush.bf16.msra.mxu0 0
    %1987 = vmatpush.bf16.msra.mxu0 0
    %1988 = vmatpush.bf16.msra.mxu0 0
    %1989 = vmatpush.bf16.msra.mxu0 0
    %1990 = vmatpush.bf16.msra.mxu0 0
    %1991 = vmatpush.bf16.msra.mxu0 0
    %1992 = vmatpush.bf16.msra.mxu0 0
    %1993 = vmatpush.bf16.msra.mxu0 %v1984
    %1994 = vmatmul.bf16.gmra.mxu0 %v1981
    %v1995 = vpop.f32.mrf.mxu0
    %v1996 = vadd.f32 0.0, %v1995
    %v1997 = vpop.f32.mrf.mxu0
    %1998 = vdwg.mxu0
    %1999 = vrot.lane.b32.xlu0 %v810, 64
    %v2000 = vpop.permute.xlu0 %1999
    %v2002 = vsel %vm1130, %v1506, 0
    %v2005 = vsel %vm1520, %v2000, 0
    %2007 = vmatpush.bf16.msra.mxu0 0
    %2008 = vmatpush.bf16.msra.mxu0 0
    %2009 = vmatpush.bf16.msra.mxu0 0
    %2010 = vmatpush.bf16.msra.mxu0 0
    %2011 = vmatpush.bf16.msra.mxu0 0
    %2012 = vmatpush.bf16.msra.mxu0 0
    %2013 = vmatpush.bf16.msra.mxu0 0
    %2014 = vmatpush.bf16.msra.mxu0 %v2005
    %2015 = vmatmul.bf16.gmra.mxu0 %v2002
    %v2016 = vpop.f32.mrf.mxu0
    %v2017 = vadd.f32 0.0, %v2016
    %v2018 = vpop.f32.mrf.mxu0
    %2019 = vdwg.mxu0
    %2020 = vrot.lane.b32.xlu0 %v833, 64
    %v2021 = vpop.permute.xlu0 %2020
    %v2023 = vsel %vm1130, %v1507, 0
    %v2026 = vsel %vm1520, %v2021, 0
    %2028 = vmatpush.bf16.msra.mxu0 0
    %2029 = vmatpush.bf16.msra.mxu0 0
    %2030 = vmatpush.bf16.msra.mxu0 0
    %2031 = vmatpush.bf16.msra.mxu0 0
    %2032 = vmatpush.bf16.msra.mxu0 0
    %2033 = vmatpush.bf16.msra.mxu0 0
    %2034 = vmatpush.bf16.msra.mxu0 0
    %2035 = vmatpush.bf16.msra.mxu0 %v2026
    %2036 = vmatmul.bf16.gmra.mxu0 %v2023
    %v2037 = vpop.f32.mrf.mxu0
    %v2038 = vadd.f32 0.0, %v2037
    %v2039 = vpop.f32.mrf.mxu0
    %2040 = vdwg.mxu0
    %2041 = vrot.lane.b32.xlu0 %v856, 64
    %v2042 = vpop.permute.xlu0 %2041
    %v2044 = vsel %vm1130, %v1508, 0
    %v2047 = vsel %vm1520, %v2042, 0
    %2049 = vmatpush.bf16.msra.mxu0 0
    %2050 = vmatpush.bf16.msra.mxu0 0
    %2051 = vmatpush.bf16.msra.mxu0 0
    %2052 = vmatpush.bf16.msra.mxu0 0
    %2053 = vmatpush.bf16.msra.mxu0 0
    %2054 = vmatpush.bf16.msra.mxu0 0
    %2055 = vmatpush.bf16.msra.mxu0 0
    %2056 = vmatpush.bf16.msra.mxu0 %v2047
    %2057 = vmatmul.bf16.gmra.mxu0 %v2044
    %v2058 = vpop.f32.mrf.mxu0
    %v2059 = vadd.f32 0.0, %v2058
    %v2060 = vpop.f32.mrf.mxu0
    %2061 = vdwg.mxu0
    %2062 = vrot.lane.b32.xlu0 %v879, 64
    %v2063 = vpop.permute.xlu0 %2062
    %v2065 = vsel %vm1130, %v1509, 0
    %v2068 = vsel %vm1520, %v2063, 0
    %2070 = vmatpush.bf16.msra.mxu0 0
    %2071 = vmatpush.bf16.msra.mxu0 0
    %2072 = vmatpush.bf16.msra.mxu0 0
    %2073 = vmatpush.bf16.msra.mxu0 0
    %2074 = vmatpush.bf16.msra.mxu0 0
    %2075 = vmatpush.bf16.msra.mxu0 0
    %2076 = vmatpush.bf16.msra.mxu0 0
    %2077 = vmatpush.bf16.msra.mxu0 %v2068
    %2078 = vmatmul.bf16.gmra.mxu0 %v2065
    %v2079 = vpop.f32.mrf.mxu0
    %v2080 = vadd.f32 0.0, %v2079
    %v2081 = vpop.f32.mrf.mxu0
    %2082 = vdwg.mxu0
    %2083 = vrot.lane.b32.xlu0 %v902, 64
    %v2084 = vpop.permute.xlu0 %2083
    %v2086 = vsel %vm1130, %v1510, 0
    %v2089 = vsel %vm1520, %v2084, 0
    %2091 = vmatpush.bf16.msra.mxu0 0
    %2092 = vmatpush.bf16.msra.mxu0 0
    %2093 = vmatpush.bf16.msra.mxu0 0
    %2094 = vmatpush.bf16.msra.mxu0 0
    %2095 = vmatpush.bf16.msra.mxu0 0
    %2096 = vmatpush.bf16.msra.mxu0 0
    %2097 = vmatpush.bf16.msra.mxu0 0
    %2098 = vmatpush.bf16.msra.mxu0 %v2089
    %2099 = vmatmul.bf16.gmra.mxu0 %v2086
    %v2100 = vpop.f32.mrf.mxu0
    %v2101 = vadd.f32 0.0, %v2100
    %v2102 = vpop.f32.mrf.mxu0
    %2103 = vdwg.mxu0
    %2104 = vrot.lane.b32.xlu0 %v925, 64
    %v2105 = vpop.permute.xlu0 %2104
    %v2107 = vsel %vm1130, %v1511, 0
    %v2110 = vsel %vm1520, %v2105, 0
    %2112 = vmatpush.bf16.msra.mxu0 0
    %2113 = vmatpush.bf16.msra.mxu0 0
    %2114 = vmatpush.bf16.msra.mxu0 0
    %2115 = vmatpush.bf16.msra.mxu0 0
    %2116 = vmatpush.bf16.msra.mxu0 0
    %2117 = vmatpush.bf16.msra.mxu0 0
    %2118 = vmatpush.bf16.msra.mxu0 0
    %2119 = vmatpush.bf16.msra.mxu0 %v2110
    %2120 = vmatmul.bf16.gmra.mxu0 %v2107
    %v2121 = vpop.f32.mrf.mxu0
    %v2122 = vadd.f32 0.0, %v2121
    %v2123 = vpop.f32.mrf.mxu0
    %2124 = vdwg.mxu0
    %2125 = vrot.lane.b32.xlu0 %v948, 64
    %v2126 = vpop.permute.xlu0 %2125
    %v2128 = vsel %vm1130, %v1512, 0
    %v2131 = vsel %vm1520, %v2126, 0
    %2133 = vmatpush.bf16.msra.mxu0 0
    %2134 = vmatpush.bf16.msra.mxu0 0
    %2135 = vmatpush.bf16.msra.mxu0 0
    %2136 = vmatpush.bf16.msra.mxu0 0
    %2137 = vmatpush.bf16.msra.mxu0 0
    %2138 = vmatpush.bf16.msra.mxu0 0
    %2139 = vmatpush.bf16.msra.mxu0 0
    %2140 = vmatpush.bf16.msra.mxu0 %v2131
    %2141 = vmatmul.bf16.gmra.mxu0 %v2128
    %v2142 = vpop.f32.mrf.mxu0
    %v2143 = vadd.f32 0.0, %v2142
    %v2144 = vpop.f32.mrf.mxu0
    %2145 = vdwg.mxu0
    %2146 = vrot.lane.b32.xlu0 %v971, 64
    %v2147 = vpop.permute.xlu0 %2146
    %v2149 = vsel %vm1130, %v1513, 0
    %v2152 = vsel %vm1520, %v2147, 0
    %2154 = vmatpush.bf16.msra.mxu0 0
    %2155 = vmatpush.bf16.msra.mxu0 0
    %2156 = vmatpush.bf16.msra.mxu0 0
    %2157 = vmatpush.bf16.msra.mxu0 0
    %2158 = vmatpush.bf16.msra.mxu0 0
    %2159 = vmatpush.bf16.msra.mxu0 0
    %2160 = vmatpush.bf16.msra.mxu0 0
    %2161 = vmatpush.bf16.msra.mxu0 %v2152
    %2162 = vmatmul.bf16.gmra.mxu0 %v2149
    %v2163 = vpop.f32.mrf.mxu0
    %v2164 = vadd.f32 0.0, %v2163
    %v2165 = vpop.f32.mrf.mxu0
    %2166 = vdwg.mxu0
    %2167 = vrot.lane.b32.xlu0 %v994, 64
    %v2168 = vpop.permute.xlu0 %2167
    %v2170 = vsel %vm1130, %v1514, 0
    %v2173 = vsel %vm1520, %v2168, 0
    %2175 = vmatpush.bf16.msra.mxu0 0
    %2176 = vmatpush.bf16.msra.mxu0 0
    %2177 = vmatpush.bf16.msra.mxu0 0
    %2178 = vmatpush.bf16.msra.mxu0 0
    %2179 = vmatpush.bf16.msra.mxu0 0
    %2180 = vmatpush.bf16.msra.mxu0 0
    %2181 = vmatpush.bf16.msra.mxu0 0
    %2182 = vmatpush.bf16.msra.mxu0 %v2173
    %2183 = vmatmul.bf16.gmra.mxu0 %v2170
    %v2184 = vpop.f32.mrf.mxu0
    %v2185 = vadd.f32 0.0, %v2184
    %v2186 = vpop.f32.mrf.mxu0
    %2187 = vdwg.mxu0
    %2204 = vrot.lane.b32.xlu0 %v1870, 16
    %v2205 = vpop.permute.xlu0 %2204
    %2206 = vrot.lane.b32.xlu0 %v1891, 16
    %v2207 = vpop.permute.xlu0 %2206
    %2208 = vrot.lane.b32.xlu0 %v1912, 16
    %v2209 = vpop.permute.xlu0 %2208
    %2210 = vrot.lane.b32.xlu0 %v1933, 16
    %v2211 = vpop.permute.xlu0 %2210
    %2212 = vrot.lane.b32.xlu0 %v1954, 16
    %v2213 = vpop.permute.xlu0 %2212
    %2214 = vrot.lane.b32.xlu0 %v1975, 16
    %v2215 = vpop.permute.xlu0 %2214
    %2216 = vrot.lane.b32.xlu0 %v1996, 16
    %v2217 = vpop.permute.xlu0 %2216
    %2218 = vrot.lane.b32.xlu0 %v2017, 16
    %v2219 = vpop.permute.xlu0 %2218
    %2220 = vrot.lane.b32.xlu0 %v2038, 16
    %v2221 = vpop.permute.xlu0 %2220
    %2222 = vrot.lane.b32.xlu0 %v2059, 16
    %v2223 = vpop.permute.xlu0 %2222
    %2224 = vrot.lane.b32.xlu0 %v2080, 16
    %v2225 = vpop.permute.xlu0 %2224
    %2226 = vrot.lane.b32.xlu0 %v2101, 16
    %v2227 = vpop.permute.xlu0 %2226
    %2228 = vrot.lane.b32.xlu0 %v2122, 16
    %v2229 = vpop.permute.xlu0 %2228
    %2230 = vrot.lane.b32.xlu0 %v2143, 16
    %v2231 = vpop.permute.xlu0 %2230
    %2232 = vrot.lane.b32.xlu0 %v2164, 16
    %v2233 = vpop.permute.xlu0 %2232
    %2234 = vrot.lane.b32.xlu0 %v2185, 16
    %v2235 = vpop.permute.xlu0 %2234
    %v2252 = vsel %vm283, %v1534, %v2205
    %v2253 = vsel %vm283, %v1555, %v2207
    %v2254 = vsel %vm283, %v1576, %v2209
    %v2255 = vsel %vm283, %v1597, %v2211
    %v2256 = vsel %vm283, %v1618, %v2213
    %v2257 = vsel %vm283, %v1639, %v2215
    %v2258 = vsel %vm283, %v1660, %v2217
    %v2259 = vsel %vm283, %v1681, %v2219
    %v2260 = vsel %vm283, %v1702, %v2221
    %v2261 = vsel %vm283, %v1723, %v2223
    %v2262 = vsel %vm283, %v1744, %v2225
    %v2263 = vsel %vm283, %v1765, %v2227
    %v2264 = vsel %vm283, %v1786, %v2229
    %v2265 = vsel %vm283, %v1807, %v2231
    %v2266 = vsel %vm283, %v1828, %v2233
    %v2267 = vsel %vm283, %v1849, %v2235
    %v2268 = vpack.c.bf16 %v2253, %v2252
    %v2269 = vpack.c.bf16 %v2255, %v2254
    %v2270 = vpack.c.bf16 %v2257, %v2256
    %v2271 = vpack.c.bf16 %v2259, %v2258
    %v2272 = vpack.c.bf16 %v2261, %v2260
    %v2273 = vpack.c.bf16 %v2263, %v2262
    %v2274 = vpack.c.bf16 %v2265, %v2264
    %v2275 = vpack.c.bf16 %v2267, %v2266
    %v2276 = vld [vmem:[%s4] sm:$0xf]
    %v2277 = vld [vmem:[%s4 + $0x4] sm:$0xf]
    %v2278 = vld [vmem:[%s4 + $0x8] sm:$0xf]
    %v2279 = vld [vmem:[%s4 + $0xc] sm:$0xf]
    %v2280 = vld [vmem:[%s5] sm:$0x1]
    %v2282 = vperm.slane %v2280, 0
    %v2288 = vunpack.c.l.b16 %v2276
    %v2289 = vunpack.c.l.b16 %v2277
    %v2290 = vunpack.c.l.b16 %v2278
    %v2291 = vunpack.c.l.b16 %v2279
    %v2292 = vpack.c.b16 %v2289, %v2288
    %v2293 = vpack.c.b16 %v2291, %v2290
    %v2297 = vsel %vm141, %v2268, 0
    %v2300 = vsel %vm141, %v2269, 0
    %v2303 = vsel %vm141, %v2270, 0
    %v2306 = vsel %vm141, %v2271, 0
    %v2309 = vsel %vm141, %v2272, 0
    %v2312 = vsel %vm141, %v2273, 0
    %v2315 = vsel %vm141, %v2274, 0
    %v2318 = vsel %vm141, %v2275, 0
    %2320 = vmatpush.bf16.msra.mxu0 0
    %2321 = vmatpush.bf16.msra.mxu0 0
    %2322 = vmatpush.bf16.msra.mxu0 0
    %2323 = vmatpush.bf16.msra.mxu0 0
    %2324 = vmatpush.bf16.msra.mxu0 0
    %2325 = vmatpush.bf16.msra.mxu0 0
    %2326 = vmatpush.bf16.msra.mxu0 %v2293
    %2327 = vmatpush.bf16.msra.mxu0 %v2292
    %2328 = vmatmul.bf16.gmra.mxu0 %v2297
    %v2329 = vpop.f32.mrf.mxu0
    %v2330 = vadd.f32 %v2282, %v2329
    %v2331 = vpop.f32.mrf.mxu0
    %v2332 = vadd.f32 %v2282, %v2331
    %2333 = vmatmul.bf16.gmra.mxu0 %v2300
    %v2334 = vpop.f32.mrf.mxu0
    %v2335 = vadd.f32 %v2282, %v2334
    %v2336 = vpop.f32.mrf.mxu0
    %v2337 = vadd.f32 %v2282, %v2336
    %2338 = vmatmul.bf16.gmra.mxu0 %v2303
    %v2339 = vpop.f32.mrf.mxu0
    %v2340 = vadd.f32 %v2282, %v2339
    %v2341 = vpop.f32.mrf.mxu0
    %v2342 = vadd.f32 %v2282, %v2341
    %2343 = vmatmul.bf16.gmra.mxu0 %v2306
    %v2344 = vpop.f32.mrf.mxu0
    %v2345 = vadd.f32 %v2282, %v2344
    %v2346 = vpop.f32.mrf.mxu0
    %v2347 = vadd.f32 %v2282, %v2346
    %2348 = vmatmul.bf16.gmra.mxu0 %v2309
    %v2349 = vpop.f32.mrf.mxu0
    %v2350 = vadd.f32 %v2282, %v2349
    %v2351 = vpop.f32.mrf.mxu0
    %v2352 = vadd.f32 %v2282, %v2351
    %2353 = vmatmul.bf16.gmra.mxu0 %v2312
    %v2354 = vpop.f32.mrf.mxu0
    %v2355 = vadd.f32 %v2282, %v2354
    %v2356 = vpop.f32.mrf.mxu0
    %v2357 = vadd.f32 %v2282, %v2356
    %2358 = vmatmul.bf16.gmra.mxu0 %v2315
    %v2359 = vpop.f32.mrf.mxu0
    %v2360 = vadd.f32 %v2282, %v2359
    %v2361 = vpop.f32.mrf.mxu0
    %v2362 = vadd.f32 %v2282, %v2361
    %2363 = vmatmul.bf16.gmra.mxu0 %v2318
    %v2364 = vpop.f32.mrf.mxu0
    %v2365 = vadd.f32 %v2282, %v2364
    %v2366 = vpop.f32.mrf.mxu0
    %v2367 = vadd.f32 %v2282, %v2366
    %2368 = vdwg.mxu0
    %v2369 = vunpack.c.l.bf16 %v65
    %v2370 = vunpack.c.l.bf16 %v66
    %v2371 = vunpack.c.l.bf16 %v67
    %v2372 = vunpack.c.l.bf16 %v68
    %v2373 = vunpack.c.l.bf16 %v69
    %v2374 = vunpack.c.l.bf16 %v70
    %v2375 = vunpack.c.l.bf16 %v71
    %v2376 = vunpack.c.l.bf16 %v72
    %v2377 = vunpack.c.l.bf16 %v73
    %v2378 = vunpack.c.l.bf16 %v74
    %v2379 = vunpack.c.l.bf16 %v75
    %v2380 = vunpack.c.l.bf16 %v76
    %v2381 = vunpack.c.l.bf16 %v77
    %v2382 = vunpack.c.l.bf16 %v78
    %v2383 = vunpack.c.l.bf16 %v79
    %v2384 = vunpack.c.l.bf16 %v80
    %v2385 = vadd.f32 %v2369, %v2330
    %v2386 = vadd.f32 %v2370, %v2332
    %v2387 = vadd.f32 %v2371, %v2335
    %v2388 = vadd.f32 %v2372, %v2337
    %v2389 = vadd.f32 %v2373, %v2340
    %v2390 = vadd.f32 %v2374, %v2342
    %v2391 = vadd.f32 %v2375, %v2345
    %v2392 = vadd.f32 %v2376, %v2347
    %v2393 = vadd.f32 %v2377, %v2350
    %v2394 = vadd.f32 %v2378, %v2352
    %v2395 = vadd.f32 %v2379, %v2355
    %v2396 = vadd.f32 %v2380, %v2357
    %v2397 = vadd.f32 %v2381, %v2360
    %v2398 = vadd.f32 %v2382, %v2362
    %v2399 = vadd.f32 %v2383, %v2365
    %v2400 = vadd.f32 %v2384, %v2367
    %v2401 = vld [vmem:[%s6] sm:$0x1]
    %v2402 = vld [vmem:[%s7] sm:$0x1]
    %v2403 = vsel %vm141, %v2385, 0.0
    %2404 = vadd.xlane.f32.xlu0 %v2403
    %v2405 = vpop.xlane.xlu0 %2404
    %v2406 = vsel %vm141, %v2386, 0.0
    %2407 = vadd.xlane.f32.xlu0 %v2406
    %v2408 = vpop.xlane.xlu0 %2407
    %v2409 = vsel %vm141, %v2387, 0.0
    %2410 = vadd.xlane.f32.xlu0 %v2409
    %v2411 = vpop.xlane.xlu0 %2410
    %v2412 = vsel %vm141, %v2388, 0.0
    %2413 = vadd.xlane.f32.xlu0 %v2412
    %v2414 = vpop.xlane.xlu0 %2413
    %v2415 = vsel %vm141, %v2389, 0.0
    %2416 = vadd.xlane.f32.xlu0 %v2415
    %v2417 = vpop.xlane.xlu0 %2416
    %v2418 = vsel %vm141, %v2390, 0.0
    %2419 = vadd.xlane.f32.xlu0 %v2418
    %v2420 = vpop.xlane.xlu0 %2419
    %v2421 = vsel %vm141, %v2391, 0.0
    %2422 = vadd.xlane.f32.xlu0 %v2421
    %v2423 = vpop.xlane.xlu0 %2422
    %v2424 = vsel %vm141, %v2392, 0.0
    %2425 = vadd.xlane.f32.xlu0 %v2424
    %v2426 = vpop.xlane.xlu0 %2425
    %v2427 = vsel %vm141, %v2393, 0.0
    %2428 = vadd.xlane.f32.xlu0 %v2427
    %v2429 = vpop.xlane.xlu0 %2428
    %v2430 = vsel %vm141, %v2394, 0.0
    %2431 = vadd.xlane.f32.xlu0 %v2430
    %v2432 = vpop.xlane.xlu0 %2431
    %v2433 = vsel %vm141, %v2395, 0.0
    %2434 = vadd.xlane.f32.xlu0 %v2433
    %v2435 = vpop.xlane.xlu0 %2434
    %v2436 = vsel %vm141, %v2396, 0.0
    %2437 = vadd.xlane.f32.xlu0 %v2436
    %v2438 = vpop.xlane.xlu0 %2437
    %v2439 = vsel %vm141, %v2397, 0.0
    %2440 = vadd.xlane.f32.xlu0 %v2439
    %v2441 = vpop.xlane.xlu0 %2440
    %v2442 = vsel %vm141, %v2398, 0.0
    %2443 = vadd.xlane.f32.xlu0 %v2442
    %v2444 = vpop.xlane.xlu0 %2443
    %v2445 = vsel %vm141, %v2399, 0.0
    %2446 = vadd.xlane.f32.xlu0 %v2445
    %v2447 = vpop.xlane.xlu0 %2446
    %v2448 = vsel %vm141, %v2400, 0.0
    %2449 = vadd.xlane.f32.xlu0 %v2448
    %v2450 = vpop.xlane.xlu0 %2449
    %v2451 = vrcp.pop 32.0
    %v2452 = vmul.f32 32.0, %v2451
    %v2453 = vsub.f32 1.0, %v2452
    %v2454 = vmul.f32 %v2451, %v2453
    %v2455 = vadd.f32 %v2451, %v2454
    %vm2456 = vweird.f32 %v2451
    %v2457 = vsel %vm2456, %v2451, %v2455
    %v2458 = vmul.f32 %v2405, %v2457
    %v2459 = vmul.f32 %v2408, %v2457
    %v2460 = vmul.f32 %v2411, %v2457
    %v2461 = vmul.f32 %v2414, %v2457
    %v2462 = vmul.f32 %v2417, %v2457
    %v2463 = vmul.f32 %v2420, %v2457
    %v2464 = vmul.f32 %v2423, %v2457
    %v2465 = vmul.f32 %v2426, %v2457
    %v2466 = vmul.f32 %v2429, %v2457
    %v2467 = vmul.f32 %v2432, %v2457
    %v2468 = vmul.f32 %v2435, %v2457
    %v2469 = vmul.f32 %v2438, %v2457
    %v2470 = vmul.f32 %v2441, %v2457
    %v2471 = vmul.f32 %v2444, %v2457
    %v2472 = vmul.f32 %v2447, %v2457
    %v2473 = vmul.f32 %v2450, %v2457
    %v2474 = vsub.f32 %v2385, %v2458
    %v2475 = vsub.f32 %v2386, %v2459
    %v2476 = vsub.f32 %v2387, %v2460
    %v2477 = vsub.f32 %v2388, %v2461
    %v2478 = vsub.f32 %v2389, %v2462
    %v2479 = vsub.f32 %v2390, %v2463
    %v2480 = vsub.f32 %v2391, %v2464
    %v2481 = vsub.f32 %v2392, %v2465
    %v2482 = vsub.f32 %v2393, %v2466
    %v2483 = vsub.f32 %v2394, %v2467
    %v2484 = vsub.f32 %v2395, %v2468
    %v2485 = vsub.f32 %v2396, %v2469
    %v2486 = vsub.f32 %v2397, %v2470
    %v2487 = vsub.f32 %v2398, %v2471
    %v2488 = vsub.f32 %v2399, %v2472
    %v2489 = vsub.f32 %v2400, %v2473
    %v2490 = vmul.f32 %v2474, %v2474
    %v2491 = vmul.f32 %v2475, %v2475
    %v2492 = vmul.f32 %v2476, %v2476
    %v2493 = vmul.f32 %v2477, %v2477
    %v2494 = vmul.f32 %v2478, %v2478
    %v2495 = vmul.f32 %v2479, %v2479
    %v2496 = vmul.f32 %v2480, %v2480
    %v2497 = vmul.f32 %v2481, %v2481
    %v2498 = vmul.f32 %v2482, %v2482
    %v2499 = vmul.f32 %v2483, %v2483
    %v2500 = vmul.f32 %v2484, %v2484
    %v2501 = vmul.f32 %v2485, %v2485
    %v2502 = vmul.f32 %v2486, %v2486
    %v2503 = vmul.f32 %v2487, %v2487
    %v2504 = vmul.f32 %v2488, %v2488
    %v2505 = vmul.f32 %v2489, %v2489
    %v2506 = vsel %vm141, %v2490, 0.0
    %2507 = vadd.xlane.f32.xlu0 %v2506
    %v2508 = vpop.xlane.xlu0 %2507
    %v2509 = vsel %vm141, %v2491, 0.0
    %2510 = vadd.xlane.f32.xlu0 %v2509
    %v2511 = vpop.xlane.xlu0 %2510
    %v2512 = vsel %vm141, %v2492, 0.0
    %2513 = vadd.xlane.f32.xlu0 %v2512
    %v2514 = vpop.xlane.xlu0 %2513
    %v2515 = vsel %vm141, %v2493, 0.0
    %2516 = vadd.xlane.f32.xlu0 %v2515
    %v2517 = vpop.xlane.xlu0 %2516
    %v2518 = vsel %vm141, %v2494, 0.0
    %2519 = vadd.xlane.f32.xlu0 %v2518
    %v2520 = vpop.xlane.xlu0 %2519
    %v2521 = vsel %vm141, %v2495, 0.0
    %2522 = vadd.xlane.f32.xlu0 %v2521
    %v2523 = vpop.xlane.xlu0 %2522
    %v2524 = vsel %vm141, %v2496, 0.0
    %2525 = vadd.xlane.f32.xlu0 %v2524
    %v2526 = vpop.xlane.xlu0 %2525
    %v2527 = vsel %vm141, %v2497, 0.0
    %2528 = vadd.xlane.f32.xlu0 %v2527
    %v2529 = vpop.xlane.xlu0 %2528
    %v2530 = vsel %vm141, %v2498, 0.0
    %2531 = vadd.xlane.f32.xlu0 %v2530
    %v2532 = vpop.xlane.xlu0 %2531
    %v2533 = vsel %vm141, %v2499, 0.0
    %2534 = vadd.xlane.f32.xlu0 %v2533
    %v2535 = vpop.xlane.xlu0 %2534
    %v2536 = vsel %vm141, %v2500, 0.0
    %2537 = vadd.xlane.f32.xlu0 %v2536
    %v2538 = vpop.xlane.xlu0 %2537
    %v2539 = vsel %vm141, %v2501, 0.0
    %2540 = vadd.xlane.f32.xlu0 %v2539
    %v2541 = vpop.xlane.xlu0 %2540
    %v2542 = vsel %vm141, %v2502, 0.0
    %2543 = vadd.xlane.f32.xlu0 %v2542
    %v2544 = vpop.xlane.xlu0 %2543
    %v2545 = vsel %vm141, %v2503, 0.0
    %2546 = vadd.xlane.f32.xlu0 %v2545
    %v2547 = vpop.xlane.xlu0 %2546
    %v2548 = vsel %vm141, %v2504, 0.0
    %2549 = vadd.xlane.f32.xlu0 %v2548
    %v2550 = vpop.xlane.xlu0 %2549
    %v2551 = vsel %vm141, %v2505, 0.0
    %2552 = vadd.xlane.f32.xlu0 %v2551
    %v2553 = vpop.xlane.xlu0 %2552
    %v2554 = vmul.f32 %v2508, %v2457
    %v2555 = vmul.f32 %v2511, %v2457
    %v2556 = vmul.f32 %v2514, %v2457
    %v2557 = vmul.f32 %v2517, %v2457
    %v2558 = vmul.f32 %v2520, %v2457
    %v2559 = vmul.f32 %v2523, %v2457
    %v2560 = vmul.f32 %v2526, %v2457
    %v2561 = vmul.f32 %v2529, %v2457
    %v2562 = vmul.f32 %v2532, %v2457
    %v2563 = vmul.f32 %v2535, %v2457
    %v2564 = vmul.f32 %v2538, %v2457
    %v2565 = vmul.f32 %v2541, %v2457
    %v2566 = vmul.f32 %v2544, %v2457
    %v2567 = vmul.f32 %v2547, %v2457
    %v2568 = vmul.f32 %v2550, %v2457
    %v2569 = vmul.f32 %v2553, %v2457
    %v2570 = vadd.f32 %v2554, 1e-12
    %v2571 = vadd.f32 %v2555, 1e-12
    %v2572 = vadd.f32 %v2556, 1e-12
    %v2573 = vadd.f32 %v2557, 1e-12
    %v2574 = vadd.f32 %v2558, 1e-12
    %v2575 = vadd.f32 %v2559, 1e-12
    %v2576 = vadd.f32 %v2560, 1e-12
    %v2577 = vadd.f32 %v2561, 1e-12
    %v2578 = vadd.f32 %v2562, 1e-12
    %v2579 = vadd.f32 %v2563, 1e-12
    %v2580 = vadd.f32 %v2564, 1e-12
    %v2581 = vadd.f32 %v2565, 1e-12
    %v2582 = vadd.f32 %v2566, 1e-12
    %v2583 = vadd.f32 %v2567, 1e-12
    %v2584 = vadd.f32 %v2568, 1e-12
    %v2585 = vadd.f32 %v2569, 1e-12
    %v2586 = vrsqrt.pop %v2570
    %v2587 = vmul.f32 %v2586, %v2570
    %v2588 = vmul.f32 %v2587, %v2586
    %v2589 = vmul.f32 0.5, %v2588
    %v2590 = vsub.f32 1.5, %v2589
    %v2591 = vmul.f32 %v2586, %v2590
    %vm2592 = vweird.f32 %v2570
    %vm2593 = vweird.f32 %v2586
    %vm2594 = vmor %vm2592, %vm2593
    %v2595 = vsel %vm2594, %v2586, %v2591
    %v2596 = vrsqrt.pop %v2571
    %v2597 = vmul.f32 %v2596, %v2571
    %v2598 = vmul.f32 %v2597, %v2596
    %v2599 = vmul.f32 0.5, %v2598
    %v2600 = vsub.f32 1.5, %v2599
    %v2601 = vmul.f32 %v2596, %v2600
    %vm2602 = vweird.f32 %v2571
    %vm2603 = vweird.f32 %v2596
    %vm2604 = vmor %vm2602, %vm2603
    %v2605 = vsel %vm2604, %v2596, %v2601
    %v2606 = vrsqrt.pop %v2572
    %v2607 = vmul.f32 %v2606, %v2572
    %v2608 = vmul.f32 %v2607, %v2606
    %v2609 = vmul.f32 0.5, %v2608
    %v2610 = vsub.f32 1.5, %v2609
    %v2611 = vmul.f32 %v2606, %v2610
    %vm2612 = vweird.f32 %v2572
    %vm2613 = vweird.f32 %v2606
    %vm2614 = vmor %vm2612, %vm2613
    %v2615 = vsel %vm2614, %v2606, %v2611
    %v2616 = vrsqrt.pop %v2573
    %v2617 = vmul.f32 %v2616, %v2573
    %v2618 = vmul.f32 %v2617, %v2616
    %v2619 = vmul.f32 0.5, %v2618
    %v2620 = vsub.f32 1.5, %v2619
    %v2621 = vmul.f32 %v2616, %v2620
    %vm2622 = vweird.f32 %v2573
    %vm2623 = vweird.f32 %v2616
    %vm2624 = vmor %vm2622, %vm2623
    %v2625 = vsel %vm2624, %v2616, %v2621
    %v2626 = vrsqrt.pop %v2574
    %v2627 = vmul.f32 %v2626, %v2574
    %v2628 = vmul.f32 %v2627, %v2626
    %v2629 = vmul.f32 0.5, %v2628
    %v2630 = vsub.f32 1.5, %v2629
    %v2631 = vmul.f32 %v2626, %v2630
    %vm2632 = vweird.f32 %v2574
    %vm2633 = vweird.f32 %v2626
    %vm2634 = vmor %vm2632, %vm2633
    %v2635 = vsel %vm2634, %v2626, %v2631
    %v2636 = vrsqrt.pop %v2575
    %v2637 = vmul.f32 %v2636, %v2575
    %v2638 = vmul.f32 %v2637, %v2636
    %v2639 = vmul.f32 0.5, %v2638
    %v2640 = vsub.f32 1.5, %v2639
    %v2641 = vmul.f32 %v2636, %v2640
    %vm2642 = vweird.f32 %v2575
    %vm2643 = vweird.f32 %v2636
    %vm2644 = vmor %vm2642, %vm2643
    %v2645 = vsel %vm2644, %v2636, %v2641
    %v2646 = vrsqrt.pop %v2576
    %v2647 = vmul.f32 %v2646, %v2576
    %v2648 = vmul.f32 %v2647, %v2646
    %v2649 = vmul.f32 0.5, %v2648
    %v2650 = vsub.f32 1.5, %v2649
    %v2651 = vmul.f32 %v2646, %v2650
    %vm2652 = vweird.f32 %v2576
    %vm2653 = vweird.f32 %v2646
    %vm2654 = vmor %vm2652, %vm2653
    %v2655 = vsel %vm2654, %v2646, %v2651
    %v2656 = vrsqrt.pop %v2577
    %v2657 = vmul.f32 %v2656, %v2577
    %v2658 = vmul.f32 %v2657, %v2656
    %v2659 = vmul.f32 0.5, %v2658
    %v2660 = vsub.f32 1.5, %v2659
    %v2661 = vmul.f32 %v2656, %v2660
    %vm2662 = vweird.f32 %v2577
    %vm2663 = vweird.f32 %v2656
    %vm2664 = vmor %vm2662, %vm2663
    %v2665 = vsel %vm2664, %v2656, %v2661
    %v2666 = vrsqrt.pop %v2578
    %v2667 = vmul.f32 %v2666, %v2578
    %v2668 = vmul.f32 %v2667, %v2666
    %v2669 = vmul.f32 0.5, %v2668
    %v2670 = vsub.f32 1.5, %v2669
    %v2671 = vmul.f32 %v2666, %v2670
    %vm2672 = vweird.f32 %v2578
    %vm2673 = vweird.f32 %v2666
    %vm2674 = vmor %vm2672, %vm2673
    %v2675 = vsel %vm2674, %v2666, %v2671
    %v2676 = vrsqrt.pop %v2579
    %v2677 = vmul.f32 %v2676, %v2579
    %v2678 = vmul.f32 %v2677, %v2676
    %v2679 = vmul.f32 0.5, %v2678
    %v2680 = vsub.f32 1.5, %v2679
    %v2681 = vmul.f32 %v2676, %v2680
    %vm2682 = vweird.f32 %v2579
    %vm2683 = vweird.f32 %v2676
    %vm2684 = vmor %vm2682, %vm2683
    %v2685 = vsel %vm2684, %v2676, %v2681
    %v2686 = vrsqrt.pop %v2580
    %v2687 = vmul.f32 %v2686, %v2580
    %v2688 = vmul.f32 %v2687, %v2686
    %v2689 = vmul.f32 0.5, %v2688
    %v2690 = vsub.f32 1.5, %v2689
    %v2691 = vmul.f32 %v2686, %v2690
    %vm2692 = vweird.f32 %v2580
    %vm2693 = vweird.f32 %v2686
    %vm2694 = vmor %vm2692, %vm2693
    %v2695 = vsel %vm2694, %v2686, %v2691
    %v2696 = vrsqrt.pop %v2581
    %v2697 = vmul.f32 %v2696, %v2581
    %v2698 = vmul.f32 %v2697, %v2696
    %v2699 = vmul.f32 0.5, %v2698
    %v2700 = vsub.f32 1.5, %v2699
    %v2701 = vmul.f32 %v2696, %v2700
    %vm2702 = vweird.f32 %v2581
    %vm2703 = vweird.f32 %v2696
    %vm2704 = vmor %vm2702, %vm2703
    %v2705 = vsel %vm2704, %v2696, %v2701
    %v2706 = vrsqrt.pop %v2582
    %v2707 = vmul.f32 %v2706, %v2582
    %v2708 = vmul.f32 %v2707, %v2706
    %v2709 = vmul.f32 0.5, %v2708
    %v2710 = vsub.f32 1.5, %v2709
    %v2711 = vmul.f32 %v2706, %v2710
    %vm2712 = vweird.f32 %v2582
    %vm2713 = vweird.f32 %v2706
    %vm2714 = vmor %vm2712, %vm2713
    %v2715 = vsel %vm2714, %v2706, %v2711
    %v2716 = vrsqrt.pop %v2583
    %v2717 = vmul.f32 %v2716, %v2583
    %v2718 = vmul.f32 %v2717, %v2716
    %v2719 = vmul.f32 0.5, %v2718
    %v2720 = vsub.f32 1.5, %v2719
    %v2721 = vmul.f32 %v2716, %v2720
    %vm2722 = vweird.f32 %v2583
    %vm2723 = vweird.f32 %v2716
    %vm2724 = vmor %vm2722, %vm2723
    %v2725 = vsel %vm2724, %v2716, %v2721
    %v2726 = vrsqrt.pop %v2584
    %v2727 = vmul.f32 %v2726, %v2584
    %v2728 = vmul.f32 %v2727, %v2726
    %v2729 = vmul.f32 0.5, %v2728
    %v2730 = vsub.f32 1.5, %v2729
    %v2731 = vmul.f32 %v2726, %v2730
    %vm2732 = vweird.f32 %v2584
    %vm2733 = vweird.f32 %v2726
    %vm2734 = vmor %vm2732, %vm2733
    %v2735 = vsel %vm2734, %v2726, %v2731
    %v2736 = vrsqrt.pop %v2585
    %v2737 = vmul.f32 %v2736, %v2585
    %v2738 = vmul.f32 %v2737, %v2736
    %v2739 = vmul.f32 0.5, %v2738
    %v2740 = vsub.f32 1.5, %v2739
    %v2741 = vmul.f32 %v2736, %v2740
    %vm2742 = vweird.f32 %v2585
    %vm2743 = vweird.f32 %v2736
    %vm2744 = vmor %vm2742, %vm2743
    %v2745 = vsel %vm2744, %v2736, %v2741
    %v2746 = vmul.f32 %v2474, %v2595
    %v2747 = vmul.f32 %v2475, %v2605
    %v2748 = vmul.f32 %v2476, %v2615
    %v2749 = vmul.f32 %v2477, %v2625
    %v2750 = vmul.f32 %v2478, %v2635
    %v2751 = vmul.f32 %v2479, %v2645
    %v2752 = vmul.f32 %v2480, %v2655
    %v2753 = vmul.f32 %v2481, %v2665
    %v2754 = vmul.f32 %v2482, %v2675
    %v2755 = vmul.f32 %v2483, %v2685
    %v2756 = vmul.f32 %v2484, %v2695
    %v2757 = vmul.f32 %v2485, %v2705
    %v2758 = vmul.f32 %v2486, %v2715
    %v2759 = vmul.f32 %v2487, %v2725
    %v2760 = vmul.f32 %v2488, %v2735
    %v2761 = vmul.f32 %v2489, %v2745
    %v2763 = vperm.slane %v2401, 0
    %v2765 = vmul.f32 %v2746, %v2763
    %v2766 = vmul.f32 %v2747, %v2763
    %v2767 = vmul.f32 %v2748, %v2763
    %v2768 = vmul.f32 %v2749, %v2763
    %v2769 = vmul.f32 %v2750, %v2763
    %v2770 = vmul.f32 %v2751, %v2763
    %v2771 = vmul.f32 %v2752, %v2763
    %v2772 = vmul.f32 %v2753, %v2763
    %v2773 = vmul.f32 %v2754, %v2763
    %v2774 = vmul.f32 %v2755, %v2763
    %v2775 = vmul.f32 %v2756, %v2763
    %v2776 = vmul.f32 %v2757, %v2763
    %v2777 = vmul.f32 %v2758, %v2763
    %v2778 = vmul.f32 %v2759, %v2763
    %v2779 = vmul.f32 %v2760, %v2763
    %v2780 = vmul.f32 %v2761, %v2763
    %v2782 = vperm.slane %v2402, 0
    %v2784 = vadd.f32 %v2765, %v2782
    %v2785 = vadd.f32 %v2766, %v2782
    %v2786 = vadd.f32 %v2767, %v2782
    %v2787 = vadd.f32 %v2768, %v2782
    %v2788 = vadd.f32 %v2769, %v2782
    %v2789 = vadd.f32 %v2770, %v2782
    %v2790 = vadd.f32 %v2771, %v2782
    %v2791 = vadd.f32 %v2772, %v2782
    %v2792 = vadd.f32 %v2773, %v2782
    %v2793 = vadd.f32 %v2774, %v2782
    %v2794 = vadd.f32 %v2775, %v2782
    %v2795 = vadd.f32 %v2776, %v2782
    %v2796 = vadd.f32 %v2777, %v2782
    %v2797 = vadd.f32 %v2778, %v2782
    %v2798 = vadd.f32 %v2779, %v2782
    %v2799 = vadd.f32 %v2780, %v2782
    %v2800 = vpack.c.bf16 %v2784, %v2784
    %v2801 = vpack.c.bf16 %v2785, %v2785
    %v2802 = vpack.c.bf16 %v2786, %v2786
    %v2803 = vpack.c.bf16 %v2787, %v2787
    %v2804 = vpack.c.bf16 %v2788, %v2788
    %v2805 = vpack.c.bf16 %v2789, %v2789
    %v2806 = vpack.c.bf16 %v2790, %v2790
    %v2807 = vpack.c.bf16 %v2791, %v2791
    %v2808 = vpack.c.bf16 %v2792, %v2792
    %v2809 = vpack.c.bf16 %v2793, %v2793
    %v2810 = vpack.c.bf16 %v2794, %v2794
    %v2811 = vpack.c.bf16 %v2795, %v2795
    %v2812 = vpack.c.bf16 %v2796, %v2796
    %v2813 = vpack.c.bf16 %v2797, %v2797
    %v2814 = vpack.c.bf16 %v2798, %v2798
    %v2815 = vpack.c.bf16 %v2799, %v2799
    %v2816 = vld [vmem:[%s8] sm:$0xf]
    %v2817 = vld [vmem:[%s8 + $0x4] sm:$0xf]
    %v2818 = vld [vmem:[%s8 + $0x8] sm:$0xf]
    %v2819 = vld [vmem:[%s8 + $0xc] sm:$0xf]
    %v2820 = vld [vmem:[%s9] sm:$0x1]
    %v2822 = vperm.slane %v2820, 0
    %v2840 = vunpack.c.l.b16 %v2800
    %v2841 = vunpack.c.l.b16 %v2801
    %v2842 = vunpack.c.l.b16 %v2802
    %v2843 = vunpack.c.l.b16 %v2803
    %v2844 = vunpack.c.l.b16 %v2804
    %v2845 = vunpack.c.l.b16 %v2805
    %v2846 = vunpack.c.l.b16 %v2806
    %v2847 = vunpack.c.l.b16 %v2807
    %v2848 = vunpack.c.l.b16 %v2808
    %v2849 = vunpack.c.l.b16 %v2809
    %v2850 = vunpack.c.l.b16 %v2810
    %v2851 = vunpack.c.l.b16 %v2811
    %v2852 = vunpack.c.l.b16 %v2812
    %v2853 = vunpack.c.l.b16 %v2813
    %v2854 = vunpack.c.l.b16 %v2814
    %v2855 = vunpack.c.l.b16 %v2815
    %v2856 = vpack.c.b16 %v2841, %v2840
    %v2857 = vpack.c.b16 %v2843, %v2842
    %v2858 = vpack.c.b16 %v2845, %v2844
    %v2859 = vpack.c.b16 %v2847, %v2846
    %v2860 = vpack.c.b16 %v2849, %v2848
    %v2861 = vpack.c.b16 %v2851, %v2850
    %v2862 = vpack.c.b16 %v2853, %v2852
    %v2863 = vpack.c.b16 %v2855, %v2854
    %v2868 = vunpack.c.l.b16 %v2816
    %v2869 = vunpack.c.l.b16 %v2817
    %v2870 = vunpack.c.l.b16 %v2818
    %v2871 = vunpack.c.l.b16 %v2819
    %v2872 = vpack.c.b16 %v2869, %v2868
    %v2873 = vpack.c.b16 %v2871, %v2870
    %v2877 = vsel %vm141, %v2856, 0
    %v2880 = vsel %vm141, %v2857, 0
    %v2883 = vsel %vm141, %v2858, 0
    %v2886 = vsel %vm141, %v2859, 0
    %v2889 = vsel %vm141, %v2860, 0
    %v2892 = vsel %vm141, %v2861, 0
    %v2895 = vsel %vm141, %v2862, 0
    %v2898 = vsel %vm141, %v2863, 0
    %2900 = vmatpush.bf16.msra.mxu0 0
    %2901 = vmatpush.bf16.msra.mxu0 0
    %2902 = vmatpush.bf16.msra.mxu0 0
    %2903 = vmatpush.bf16.msra.mxu0 0
    %2904 = vmatpush.bf16.msra.mxu0 0
    %2905 = vmatpush.bf16.msra.mxu0 0
    %2906 = vmatpush.bf16.msra.mxu0 %v2873
    %2907 = vmatpush.bf16.msra.mxu0 %v2872
    %2908 = vmatmul.bf16.gmra.mxu0 %v2877
    %v2909 = vpop.f32.mrf.mxu0
    %v2910 = vadd.f32 %v2822, %v2909
    %v2911 = vpop.f32.mrf.mxu0
    %v2912 = vadd.f32 %v2822, %v2911
    %2913 = vmatmul.bf16.gmra.mxu0 %v2880
    %v2914 = vpop.f32.mrf.mxu0
    %v2915 = vadd.f32 %v2822, %v2914
    %v2916 = vpop.f32.mrf.mxu0
    %v2917 = vadd.f32 %v2822, %v2916
    %2918 = vmatmul.bf16.gmra.mxu0 %v2883
    %v2919 = vpop.f32.mrf.mxu0
    %v2920 = vadd.f32 %v2822, %v2919
    %v2921 = vpop.f32.mrf.mxu0
    %v2922 = vadd.f32 %v2822, %v2921
    %2923 = vmatmul.bf16.gmra.mxu0 %v2886
    %v2924 = vpop.f32.mrf.mxu0
    %v2925 = vadd.f32 %v2822, %v2924
    %v2926 = vpop.f32.mrf.mxu0
    %v2927 = vadd.f32 %v2822, %v2926
    %2928 = vmatmul.bf16.gmra.mxu0 %v2889
    %v2929 = vpop.f32.mrf.mxu0
    %v2930 = vadd.f32 %v2822, %v2929
    %v2931 = vpop.f32.mrf.mxu0
    %v2932 = vadd.f32 %v2822, %v2931
    %2933 = vmatmul.bf16.gmra.mxu0 %v2892
    %v2934 = vpop.f32.mrf.mxu0
    %v2935 = vadd.f32 %v2822, %v2934
    %v2936 = vpop.f32.mrf.mxu0
    %v2937 = vadd.f32 %v2822, %v2936
    %2938 = vmatmul.bf16.gmra.mxu0 %v2895
    %v2939 = vpop.f32.mrf.mxu0
    %v2940 = vadd.f32 %v2822, %v2939
    %v2941 = vpop.f32.mrf.mxu0
    %v2942 = vadd.f32 %v2822, %v2941
    %2943 = vmatmul.bf16.gmra.mxu0 %v2898
    %v2944 = vpop.f32.mrf.mxu0
    %v2945 = vadd.f32 %v2822, %v2944
    %v2946 = vpop.f32.mrf.mxu0
    %v2947 = vadd.f32 %v2822, %v2946
    %2948 = vdwg.mxu0
    %v2949 = vmul.f32 %v2910, %v2910
    %v2950 = vmul.f32 %v2912, %v2912
    %v2951 = vmul.f32 %v2915, %v2915
    %v2952 = vmul.f32 %v2917, %v2917
    %v2953 = vmul.f32 %v2920, %v2920
    %v2954 = vmul.f32 %v2922, %v2922
    %v2955 = vmul.f32 %v2925, %v2925
    %v2956 = vmul.f32 %v2927, %v2927
    %v2957 = vmul.f32 %v2930, %v2930
    %v2958 = vmul.f32 %v2932, %v2932
    %v2959 = vmul.f32 %v2935, %v2935
    %v2960 = vmul.f32 %v2937, %v2937
    %v2961 = vmul.f32 %v2940, %v2940
    %v2962 = vmul.f32 %v2942, %v2942
    %v2963 = vmul.f32 %v2945, %v2945
    %v2964 = vmul.f32 %v2947, %v2947
    %v2965 = vmul.f32 %v2910, %v2949
    %v2966 = vmul.f32 %v2912, %v2950
    %v2967 = vmul.f32 %v2915, %v2951
    %v2968 = vmul.f32 %v2917, %v2952
    %v2969 = vmul.f32 %v2920, %v2953
    %v2970 = vmul.f32 %v2922, %v2954
    %v2971 = vmul.f32 %v2925, %v2955
    %v2972 = vmul.f32 %v2927, %v2956
    %v2973 = vmul.f32 %v2930, %v2957
    %v2974 = vmul.f32 %v2932, %v2958
    %v2975 = vmul.f32 %v2935, %v2959
    %v2976 = vmul.f32 %v2937, %v2960
    %v2977 = vmul.f32 %v2940, %v2961
    %v2978 = vmul.f32 %v2942, %v2962
    %v2979 = vmul.f32 %v2945, %v2963
    %v2980 = vmul.f32 %v2947, %v2964
    %v2981 = vmul.f32 %v2965, 0.044715
    %v2982 = vmul.f32 %v2966, 0.044715
    %v2983 = vmul.f32 %v2967, 0.044715
    %v2984 = vmul.f32 %v2968, 0.044715
    %v2985 = vmul.f32 %v2969, 0.044715
    %v2986 = vmul.f32 %v2970, 0.044715
    %v2987 = vmul.f32 %v2971, 0.044715
    %v2988 = vmul.f32 %v2972, 0.044715
    %v2989 = vmul.f32 %v2973, 0.044715
    %v2990 = vmul.f32 %v2974, 0.044715
    %v2991 = vmul.f32 %v2975, 0.044715
    %v2992 = vmul.f32 %v2976, 0.044715
    %v2993 = vmul.f32 %v2977, 0.044715
    %v2994 = vmul.f32 %v2978, 0.044715
    %v2995 = vmul.f32 %v2979, 0.044715
    %v2996 = vmul.f32 %v2980, 0.044715
    %v2997 = vadd.f32 %v2910, %v2981
    %v2998 = vadd.f32 %v2912, %v2982
    %v2999 = vadd.f32 %v2915, %v2983
    %v3000 = vadd.f32 %v2917, %v2984
    %v3001 = vadd.f32 %v2920, %v2985
    %v3002 = vadd.f32 %v2922, %v2986
    %v3003 = vadd.f32 %v2925, %v2987
    %v3004 = vadd.f32 %v2927, %v2988
    %v3005 = vadd.f32 %v2930, %v2989
    %v3006 = vadd.f32 %v2932, %v2990
    %v3007 = vadd.f32 %v2935, %v2991
    %v3008 = vadd.f32 %v2937, %v2992
    %v3009 = vadd.f32 %v2940, %v2993
    %v3010 = vadd.f32 %v2942, %v2994
    %v3011 = vadd.f32 %v2945, %v2995
    %v3012 = vadd.f32 %v2947, %v2996
    %v3013 = vmul.f32 %v2997, 0.7978846
    %v3014 = vmul.f32 %v2998, 0.7978846
    %v3015 = vmul.f32 %v2999, 0.7978846
    %v3016 = vmul.f32 %v3000, 0.7978846
    %v3017 = vmul.f32 %v3001, 0.7978846
    %v3018 = vmul.f32 %v3002, 0.7978846
    %v3019 = vmul.f32 %v3003, 0.7978846
    %v3020 = vmul.f32 %v3004, 0.7978846
    %v3021 = vmul.f32 %v3005, 0.7978846
    %v3022 = vmul.f32 %v3006, 0.7978846
    %v3023 = vmul.f32 %v3007, 0.7978846
    %v3024 = vmul.f32 %v3008, 0.7978846
    %v3025 = vmul.f32 %v3009, 0.7978846
    %v3026 = vmul.f32 %v3010, 0.7978846
    %v3027 = vmul.f32 %v3011, 0.7978846
    %v3028 = vmul.f32 %v3012, 0.7978846
    %v3029 = vtanh.pop %v3013
    %v3030 = vtanh.pop %v3014
    %v3031 = vtanh.pop %v3015
    %v3032 = vtanh.pop %v3016
    %v3033 = vtanh.pop %v3017
    %v3034 = vtanh.pop %v3018
    %v3035 = vtanh.pop %v3019
    %v3036 = vtanh.pop %v3020
    %v3037 = vtanh.pop %v3021
    %v3038 = vtanh.pop %v3022
    %v3039 = vtanh.pop %v3023
    %v3040 = vtanh.pop %v3024
    %v3041 = vtanh.pop %v3025
    %v3042 = vtanh.pop %v3026
    %v3043 = vtanh.pop %v3027
    %v3044 = vtanh.pop %v3028
    %v3045 = vadd.f32 %v3029, 1.0
    %v3046 = vadd.f32 %v3030, 1.0
    %v3047 = vadd.f32 %v3031, 1.0
    %v3048 = vadd.f32 %v3032, 1.0
    %v3049 = vadd.f32 %v3033, 1.0
    %v3050 = vadd.f32 %v3034, 1.0
    %v3051 = vadd.f32 %v3035, 1.0
    %v3052 = vadd.f32 %v3036, 1.0
    %v3053 = vadd.f32 %v3037, 1.0
    %v3054 = vadd.f32 %v3038, 1.0
    %v3055 = vadd.f32 %v3039, 1.0
    %v3056 = vadd.f32 %v3040, 1.0
    %v3057 = vadd.f32 %v3041, 1.0
    %v3058 = vadd.f32 %v3042, 1.0
    %v3059 = vadd.f32 %v3043, 1.0
    %v3060 = vadd.f32 %v3044, 1.0
    %v3061 = vmul.f32 %v3045, 0.5
    %v3062 = vmul.f32 %v3046, 0.5
    %v3063 = vmul.f32 %v3047, 0.5
    %v3064 = vmul.f32 %v3048, 0.5
    %v3065 = vmul.f32 %v3049, 0.5
    %v3066 = vmul.f32 %v3050, 0.5
    %v3067 = vmul.f32 %v3051, 0.5
    %v3068 = vmul.f32 %v3052, 0.5
    %v3069 = vmul.f32 %v3053, 0.5
    %v3070 = vmul.f32 %v3054, 0.5
    %v3071 = vmul.f32 %v3055, 0.5
    %v3072 = vmul.f32 %v3056, 0.5
    %v3073 = vmul.f32 %v3057, 0.5
    %v3074 = vmul.f32 %v3058, 0.5
    %v3075 = vmul.f32 %v3059, 0.5
    %v3076 = vmul.f32 %v3060, 0.5
    %v3077 = vmul.f32 %v2910, %v3061
    %v3078 = vmul.f32 %v2912, %v3062
    %v3079 = vmul.f32 %v2915, %v3063
    %v3080 = vmul.f32 %v2917, %v3064
    %v3081 = vmul.f32 %v2920, %v3065
    %v3082 = vmul.f32 %v2922, %v3066
    %v3083 = vmul.f32 %v2925, %v3067
    %v3084 = vmul.f32 %v2927, %v3068
    %v3085 = vmul.f32 %v2930, %v3069
    %v3086 = vmul.f32 %v2932, %v3070
    %v3087 = vmul.f32 %v2935, %v3071
    %v3088 = vmul.f32 %v2937, %v3072
    %v3089 = vmul.f32 %v2940, %v3073
    %v3090 = vmul.f32 %v2942, %v3074
    %v3091 = vmul.f32 %v2945, %v3075
    %v3092 = vmul.f32 %v2947, %v3076
    %v3093 = vpack.c.bf16 %v3078, %v3077
    %v3094 = vpack.c.bf16 %v3080, %v3079
    %v3095 = vpack.c.bf16 %v3082, %v3081
    %v3096 = vpack.c.bf16 %v3084, %v3083
    %v3097 = vpack.c.bf16 %v3086, %v3085
    %v3098 = vpack.c.bf16 %v3088, %v3087
    %v3099 = vpack.c.bf16 %v3090, %v3089
    %v3100 = vpack.c.bf16 %v3092, %v3091
    %v3101 = vld [vmem:[%s10] sm:$0xf]
    %v3102 = vld [vmem:[%s10 + $0x4] sm:$0xf]
    %v3103 = vld [vmem:[%s10 + $0x8] sm:$0xf]
    %v3104 = vld [vmem:[%s10 + $0xc] sm:$0xf]
    %v3105 = vld [vmem:[%s10 + $0x10] sm:$0xf]
    %v3106 = vld [vmem:[%s10 + $0x14] sm:$0xf]
    %v3107 = vld [vmem:[%s10 + $0x18] sm:$0xf]
    %v3108 = vld [vmem:[%s10 + $0x1c] sm:$0xf]
    %v3109 = vld [vmem:[%s11] sm:$0x1]
    %v3111 = vperm.slane %v3109, 0
    %v3121 = vunpack.c.l.b16 %v3101
    %v3122 = vunpack.c.l.b16 %v3102
    %v3123 = vunpack.c.l.b16 %v3103
    %v3124 = vunpack.c.l.b16 %v3104
    %v3125 = vunpack.c.l.b16 %v3105
    %v3126 = vunpack.c.l.b16 %v3106
    %v3127 = vunpack.c.l.b16 %v3107
    %v3128 = vunpack.c.l.b16 %v3108
    %v3129 = vpack.c.b16 %v3122, %v3121
    %v3130 = vpack.c.b16 %v3124, %v3123
    %v3131 = vpack.c.b16 %v3126, %v3125
    %v3132 = vpack.c.b16 %v3128, %v3127
    %vm3137 = vcmask 523264
    %v3139 = vsel %vm3137, %v3093, 0
    %v3142 = vsel %vm3137, %v3094, 0
    %v3145 = vsel %vm3137, %v3095, 0
    %v3148 = vsel %vm3137, %v3096, 0
    %v3151 = vsel %vm3137, %v3097, 0
    %v3154 = vsel %vm3137, %v3098, 0
    %v3157 = vsel %vm3137, %v3099, 0
    %v3160 = vsel %vm3137, %v3100, 0
    %3162 = vmatpush.bf16.msra.mxu0 0
    %3163 = vmatpush.bf16.msra.mxu0 0
    %3164 = vmatpush.bf16.msra.mxu0 0
    %3165 = vmatpush.bf16.msra.mxu0 0
    %3166 = vmatpush.bf16.msra.mxu0 %v3132
    %3167 = vmatpush.bf16.msra.mxu0 %v3131
    %3168 = vmatpush.bf16.msra.mxu0 %v3130
    %3169 = vmatpush.bf16.msra.mxu0 %v3129
    %3170 = vmatmul.bf16.gmra.mxu0 %v3139
    %v3171 = vpop.f32.mrf.mxu0
    %v3172 = vadd.f32 %v3111, %v3171
    %v3173 = vpop.f32.mrf.mxu0
    %v3174 = vadd.f32 %v3111, %v3173
    %3175 = vmatmul.bf16.gmra.mxu0 %v3142
    %v3176 = vpop.f32.mrf.mxu0
    %v3177 = vadd.f32 %v3111, %v3176
    %v3178 = vpop.f32.mrf.mxu0
    %v3179 = vadd.f32 %v3111, %v3178
    %3180 = vmatmul.bf16.gmra.mxu0 %v3145
    %v3181 = vpop.f32.mrf.mxu0
    %v3182 = vadd.f32 %v3111, %v3181
    %v3183 = vpop.f32.mrf.mxu0
    %v3184 = vadd.f32 %v3111, %v3183
    %3185 = vmatmul.bf16.gmra.mxu0 %v3148
    %v3186 = vpop.f32.mrf.mxu0
    %v3187 = vadd.f32 %v3111, %v3186
    %v3188 = vpop.f32.mrf.mxu0
    %v3189 = vadd.f32 %v3111, %v3188
    %3190 = vmatmul.bf16.gmra.mxu0 %v3151
    %v3191 = vpop.f32.mrf.mxu0
    %v3192 = vadd.f32 %v3111, %v3191
    %v3193 = vpop.f32.mrf.mxu0
    %v3194 = vadd.f32 %v3111, %v3193
    %3195 = vmatmul.bf16.gmra.mxu0 %v3154
    %v3196 = vpop.f32.mrf.mxu0
    %v3197 = vadd.f32 %v3111, %v3196
    %v3198 = vpop.f32.mrf.mxu0
    %v3199 = vadd.f32 %v3111, %v3198
    %3200 = vmatmul.bf16.gmra.mxu0 %v3157
    %v3201 = vpop.f32.mrf.mxu0
    %v3202 = vadd.f32 %v3111, %v3201
    %v3203 = vpop.f32.mrf.mxu0
    %v3204 = vadd.f32 %v3111, %v3203
    %3205 = vmatmul.bf16.gmra.mxu0 %v3160
    %v3206 = vpop.f32.mrf.mxu0
    %v3207 = vadd.f32 %v3111, %v3206
    %v3208 = vpop.f32.mrf.mxu0
    %v3209 = vadd.f32 %v3111, %v3208
    %3210 = vdwg.mxu0
    %v3211 = vunpack.c.l.bf16 %v2800
    %v3212 = vunpack.c.l.bf16 %v2801
    %v3213 = vunpack.c.l.bf16 %v2802
    %v3214 = vunpack.c.l.bf16 %v2803
    %v3215 = vunpack.c.l.bf16 %v2804
    %v3216 = vunpack.c.l.bf16 %v2805
    %v3217 = vunpack.c.l.bf16 %v2806
    %v3218 = vunpack.c.l.bf16 %v2807
    %v3219 = vunpack.c.l.bf16 %v2808
    %v3220 = vunpack.c.l.bf16 %v2809
    %v3221 = vunpack.c.l.bf16 %v2810
    %v3222 = vunpack.c.l.bf16 %v2811
    %v3223 = vunpack.c.l.bf16 %v2812
    %v3224 = vunpack.c.l.bf16 %v2813
    %v3225 = vunpack.c.l.bf16 %v2814
    %v3226 = vunpack.c.l.bf16 %v2815
    %v3227 = vadd.f32 %v3211, %v3172
    %v3228 = vadd.f32 %v3212, %v3174
    %v3229 = vadd.f32 %v3213, %v3177
    %v3230 = vadd.f32 %v3214, %v3179
    %v3231 = vadd.f32 %v3215, %v3182
    %v3232 = vadd.f32 %v3216, %v3184
    %v3233 = vadd.f32 %v3217, %v3187
    %v3234 = vadd.f32 %v3218, %v3189
    %v3235 = vadd.f32 %v3219, %v3192
    %v3236 = vadd.f32 %v3220, %v3194
    %v3237 = vadd.f32 %v3221, %v3197
    %v3238 = vadd.f32 %v3222, %v3199
    %v3239 = vadd.f32 %v3223, %v3202
    %v3240 = vadd.f32 %v3224, %v3204
    %v3241 = vadd.f32 %v3225, %v3207
    %v3242 = vadd.f32 %v3226, %v3209
    %v3243 = vld [vmem:[%s12] sm:$0x1]
    %v3244 = vld [vmem:[%s13] sm:$0x1]
    %v3245 = vsel %vm141, %v3227, 0.0
    %3246 = vadd.xlane.f32.xlu0 %v3245
    %v3247 = vpop.xlane.xlu0 %3246
    %v3248 = vsel %vm141, %v3228, 0.0
    %3249 = vadd.xlane.f32.xlu0 %v3248
    %v3250 = vpop.xlane.xlu0 %3249
    %v3251 = vsel %vm141, %v3229, 0.0
    %3252 = vadd.xlane.f32.xlu0 %v3251
    %v3253 = vpop.xlane.xlu0 %3252
    %v3254 = vsel %vm141, %v3230, 0.0
    %3255 = vadd.xlane.f32.xlu0 %v3254
    %v3256 = vpop.xlane.xlu0 %3255
    %v3257 = vsel %vm141, %v3231, 0.0
    %3258 = vadd.xlane.f32.xlu0 %v3257
    %v3259 = vpop.xlane.xlu0 %3258
    %v3260 = vsel %vm141, %v3232, 0.0
    %3261 = vadd.xlane.f32.xlu0 %v3260
    %v3262 = vpop.xlane.xlu0 %3261
    %v3263 = vsel %vm141, %v3233, 0.0
    %3264 = vadd.xlane.f32.xlu0 %v3263
    %v3265 = vpop.xlane.xlu0 %3264
    %v3266 = vsel %vm141, %v3234, 0.0
    %3267 = vadd.xlane.f32.xlu0 %v3266
    %v3268 = vpop.xlane.xlu0 %3267
    %v3269 = vsel %vm141, %v3235, 0.0
    %3270 = vadd.xlane.f32.xlu0 %v3269
    %v3271 = vpop.xlane.xlu0 %3270
    %v3272 = vsel %vm141, %v3236, 0.0
    %3273 = vadd.xlane.f32.xlu0 %v3272
    %v3274 = vpop.xlane.xlu0 %3273
    %v3275 = vsel %vm141, %v3237, 0.0
    %3276 = vadd.xlane.f32.xlu0 %v3275
    %v3277 = vpop.xlane.xlu0 %3276
    %v3278 = vsel %vm141, %v3238, 0.0
    %3279 = vadd.xlane.f32.xlu0 %v3278
    %v3280 = vpop.xlane.xlu0 %3279
    %v3281 = vsel %vm141, %v3239, 0.0
    %3282 = vadd.xlane.f32.xlu0 %v3281
    %v3283 = vpop.xlane.xlu0 %3282
    %v3284 = vsel %vm141, %v3240, 0.0
    %3285 = vadd.xlane.f32.xlu0 %v3284
    %v3286 = vpop.xlane.xlu0 %3285
    %v3287 = vsel %vm141, %v3241, 0.0
    %3288 = vadd.xlane.f32.xlu0 %v3287
    %v3289 = vpop.xlane.xlu0 %3288
    %v3290 = vsel %vm141, %v3242, 0.0
    %3291 = vadd.xlane.f32.xlu0 %v3290
    %v3292 = vpop.xlane.xlu0 %3291
    %v3293 = vmul.f32 %v3247, %v2457
    %v3294 = vmul.f32 %v3250, %v2457
    %v3295 = vmul.f32 %v3253, %v2457
    %v3296 = vmul.f32 %v3256, %v2457
    %v3297 = vmul.f32 %v3259, %v2457
    %v3298 = vmul.f32 %v3262, %v2457
    %v3299 = vmul.f32 %v3265, %v2457
    %v3300 = vmul.f32 %v3268, %v2457
    %v3301 = vmul.f32 %v3271, %v2457
    %v3302 = vmul.f32 %v3274, %v2457
    %v3303 = vmul.f32 %v3277, %v2457
    %v3304 = vmul.f32 %v3280, %v2457
    %v3305 = vmul.f32 %v3283, %v2457
    %v3306 = vmul.f32 %v3286, %v2457
    %v3307 = vmul.f32 %v3289, %v2457
    %v3308 = vmul.f32 %v3292, %v2457
    %v3309 = vsub.f32 %v3227, %v3293
    %v3310 = vsub.f32 %v3228, %v3294
    %v3311 = vsub.f32 %v3229, %v3295
    %v3312 = vsub.f32 %v3230, %v3296
    %v3313 = vsub.f32 %v3231, %v3297
    %v3314 = vsub.f32 %v3232, %v3298
    %v3315 = vsub.f32 %v3233, %v3299
    %v3316 = vsub.f32 %v3234, %v3300
    %v3317 = vsub.f32 %v3235, %v3301
    %v3318 = vsub.f32 %v3236, %v3302
    %v3319 = vsub.f32 %v3237, %v3303
    %v3320 = vsub.f32 %v3238, %v3304
    %v3321 = vsub.f32 %v3239, %v3305
    %v3322 = vsub.f32 %v3240, %v3306
    %v3323 = vsub.f32 %v3241, %v3307
    %v3324 = vsub.f32 %v3242, %v3308
    %v3325 = vmul.f32 %v3309, %v3309
    %v3326 = vmul.f32 %v3310, %v3310
    %v3327 = vmul.f32 %v3311, %v3311
    %v3328 = vmul.f32 %v3312, %v3312
    %v3329 = vmul.f32 %v3313, %v3313
    %v3330 = vmul.f32 %v3314, %v3314
    %v3331 = vmul.f32 %v3315, %v3315
    %v3332 = vmul.f32 %v3316, %v3316
    %v3333 = vmul.f32 %v3317, %v3317
    %v3334 = vmul.f32 %v3318, %v3318
    %v3335 = vmul.f32 %v3319, %v3319
    %v3336 = vmul.f32 %v3320, %v3320
    %v3337 = vmul.f32 %v3321, %v3321
    %v3338 = vmul.f32 %v3322, %v3322
    %v3339 = vmul.f32 %v3323, %v3323
    %v3340 = vmul.f32 %v3324, %v3324
    %v3341 = vsel %vm141, %v3325, 0.0
    %3342 = vadd.xlane.f32.xlu0 %v3341
    %v3343 = vpop.xlane.xlu0 %3342
    %v3344 = vsel %vm141, %v3326, 0.0
    %3345 = vadd.xlane.f32.xlu0 %v3344
    %v3346 = vpop.xlane.xlu0 %3345
    %v3347 = vsel %vm141, %v3327, 0.0
    %3348 = vadd.xlane.f32.xlu0 %v3347
    %v3349 = vpop.xlane.xlu0 %3348
    %v3350 = vsel %vm141, %v3328, 0.0
    %3351 = vadd.xlane.f32.xlu0 %v3350
    %v3352 = vpop.xlane.xlu0 %3351
    %v3353 = vsel %vm141, %v3329, 0.0
    %3354 = vadd.xlane.f32.xlu0 %v3353
    %v3355 = vpop.xlane.xlu0 %3354
    %v3356 = vsel %vm141, %v3330, 0.0
    %3357 = vadd.xlane.f32.xlu0 %v3356
    %v3358 = vpop.xlane.xlu0 %3357
    %v3359 = vsel %vm141, %v3331, 0.0
    %3360 = vadd.xlane.f32.xlu0 %v3359
    %v3361 = vpop.xlane.xlu0 %3360
    %v3362 = vsel %vm141, %v3332, 0.0
    %3363 = vadd.xlane.f32.xlu0 %v3362
    %v3364 = vpop.xlane.xlu0 %3363
    %v3365 = vsel %vm141, %v3333, 0.0
    %3366 = vadd.xlane.f32.xlu0 %v3365
    %v3367 = vpop.xlane.xlu0 %3366
    %v3368 = vsel %vm141, %v3334, 0.0
    %3369 = vadd.xlane.f32.xlu0 %v3368
    %v3370 = vpop.xlane.xlu0 %3369
    %v3371 = vsel %vm141, %v3335, 0.0
    %3372 = vadd.xlane.f32.xlu0 %v3371
    %v3373 = vpop.xlane.xlu0 %3372
    %v3374 = vsel %vm141, %v3336, 0.0
    %3375 = vadd.xlane.f32.xlu0 %v3374
    %v3376 = vpop.xlane.xlu0 %3375
    %v3377 = vsel %vm141, %v3337, 0.0
    %3378 = vadd.xlane.f32.xlu0 %v3377
    %v3379 = vpop.xlane.xlu0 %3378
    %v3380 = vsel %vm141, %v3338, 0.0
    %3381 = vadd.xlane.f32.xlu0 %v3380
    %v3382 = vpop.xlane.xlu0 %3381
    %v3383 = vsel %vm141, %v3339, 0.0
    %3384 = vadd.xlane.f32.xlu0 %v3383
    %v3385 = vpop.xlane.xlu0 %3384
    %v3386 = vsel %vm141, %v3340, 0.0
    %3387 = vadd.xlane.f32.xlu0 %v3386
    %v3388 = vpop.xlane.xlu0 %3387
    %v3389 = vmul.f32 %v3343, %v2457
    %v3390 = vmul.f32 %v3346, %v2457
    %v3391 = vmul.f32 %v3349, %v2457
    %v3392 = vmul.f32 %v3352, %v2457
    %v3393 = vmul.f32 %v3355, %v2457
    %v3394 = vmul.f32 %v3358, %v2457
    %v3395 = vmul.f32 %v3361, %v2457
    %v3396 = vmul.f32 %v3364, %v2457
    %v3397 = vmul.f32 %v3367, %v2457
    %v3398 = vmul.f32 %v3370, %v2457
    %v3399 = vmul.f32 %v3373, %v2457
    %v3400 = vmul.f32 %v3376, %v2457
    %v3401 = vmul.f32 %v3379, %v2457
    %v3402 = vmul.f32 %v3382, %v2457
    %v3403 = vmul.f32 %v3385, %v2457
    %v3404 = vmul.f32 %v3388, %v2457
    %v3405 = vadd.f32 %v3389, 1e-12
    %v3406 = vadd.f32 %v3390, 1e-12
    %v3407 = vadd.f32 %v3391, 1e-12
    %v3408 = vadd.f32 %v3392, 1e-12
    %v3409 = vadd.f32 %v3393, 1e-12
    %v3410 = vadd.f32 %v3394, 1e-12
    %v3411 = vadd.f32 %v3395, 1e-12
    %v3412 = vadd.f32 %v3396, 1e-12
    %v3413 = vadd.f32 %v3397, 1e-12
    %v3414 = vadd.f32 %v3398, 1e-12
    %v3415 = vadd.f32 %v3399, 1e-12
    %v3416 = vadd.f32 %v3400, 1e-12
    %v3417 = vadd.f32 %v3401, 1e-12
    %v3418 = vadd.f32 %v3402, 1e-12
    %v3419 = vadd.f32 %v3403, 1e-12
    %v3420 = vadd.f32 %v3404, 1e-12
    %v3421 = vrsqrt.pop %v3405
    %v3422 = vmul.f32 %v3421, %v3405
    %v3423 = vmul.f32 %v3422, %v3421
    %v3424 = vmul.f32 0.5, %v3423
    %v3425 = vsub.f32 1.5, %v3424
    %v3426 = vmul.f32 %v3421, %v3425
    %vm3427 = vweird.f32 %v3405
    %vm3428 = vweird.f32 %v3421
    %vm3429 = vmor %vm3427, %vm3428
    %v3430 = vsel %vm3429, %v3421, %v3426
    %v3431 = vrsqrt.pop %v3406
    %v3432 = vmul.f32 %v3431, %v3406
    %v3433 = vmul.f32 %v3432, %v3431
    %v3434 = vmul.f32 0.5, %v3433
    %v3435 = vsub.f32 1.5, %v3434
    %v3436 = vmul.f32 %v3431, %v3435
    %vm3437 = vweird.f32 %v3406
    %vm3438 = vweird.f32 %v3431
    %vm3439 = vmor %vm3437, %vm3438
    %v3440 = vsel %vm3439, %v3431, %v3436
    %v3441 = vrsqrt.pop %v3407
    %v3442 = vmul.f32 %v3441, %v3407
    %v3443 = vmul.f32 %v3442, %v3441
    %v3444 = vmul.f32 0.5, %v3443
    %v3445 = vsub.f32 1.5, %v3444
    %v3446 = vmul.f32 %v3441, %v3445
    %vm3447 = vweird.f32 %v3407
    %vm3448 = vweird.f32 %v3441
    %vm3449 = vmor %vm3447, %vm3448
    %v3450 = vsel %vm3449, %v3441, %v3446
    %v3451 = vrsqrt.pop %v3408
    %v3452 = vmul.f32 %v3451, %v3408
    %v3453 = vmul.f32 %v3452, %v3451
    %v3454 = vmul.f32 0.5, %v3453
    %v3455 = vsub.f32 1.5, %v3454
    %v3456 = vmul.f32 %v3451, %v3455
    %vm3457 = vweird.f32 %v3408
    %vm3458 = vweird.f32 %v3451
    %vm3459 = vmor %vm3457, %vm3458
    %v3460 = vsel %vm3459, %v3451, %v3456
    %v3461 = vrsqrt.pop %v3409
    %v3462 = vmul.f32 %v3461, %v3409
    %v3463 = vmul.f32 %v3462, %v3461
    %v3464 = vmul.f32 0.5, %v3463
    %v3465 = vsub.f32 1.5, %v3464
    %v3466 = vmul.f32 %v3461, %v3465
    %vm3467 = vweird.f32 %v3409
    %vm3468 = vweird.f32 %v3461
    %vm3469 = vmor %vm3467, %vm3468
    %v3470 = vsel %vm3469, %v3461, %v3466
    %v3471 = vrsqrt.pop %v3410
    %v3472 = vmul.f32 %v3471, %v3410
    %v3473 = vmul.f32 %v3472, %v3471
    %v3474 = vmul.f32 0.5, %v3473
    %v3475 = vsub.f32 1.5, %v3474
    %v3476 = vmul.f32 %v3471, %v3475
    %vm3477 = vweird.f32 %v3410
    %vm3478 = vweird.f32 %v3471
    %vm3479 = vmor %vm3477, %vm3478
    %v3480 = vsel %vm3479, %v3471, %v3476
    %v3481 = vrsqrt.pop %v3411
    %v3482 = vmul.f32 %v3481, %v3411
    %v3483 = vmul.f32 %v3482, %v3481
    %v3484 = vmul.f32 0.5, %v3483
    %v3485 = vsub.f32 1.5, %v3484
    %v3486 = vmul.f32 %v3481, %v3485
    %vm3487 = vweird.f32 %v3411
    %vm3488 = vweird.f32 %v3481
    %vm3489 = vmor %vm3487, %vm3488
    %v3490 = vsel %vm3489, %v3481, %v3486
    %v3491 = vrsqrt.pop %v3412
    %v3492 = vmul.f32 %v3491, %v3412
    %v3493 = vmul.f32 %v3492, %v3491
    %v3494 = vmul.f32 0.5, %v3493
    %v3495 = vsub.f32 1.5, %v3494
    %v3496 = vmul.f32 %v3491, %v3495
    %vm3497 = vweird.f32 %v3412
    %vm3498 = vweird.f32 %v3491
    %vm3499 = vmor %vm3497, %vm3498
    %v3500 = vsel %vm3499, %v3491, %v3496
    %v3501 = vrsqrt.pop %v3413
    %v3502 = vmul.f32 %v3501, %v3413
    %v3503 = vmul.f32 %v3502, %v3501
    %v3504 = vmul.f32 0.5, %v3503
    %v3505 = vsub.f32 1.5, %v3504
    %v3506 = vmul.f32 %v3501, %v3505
    %vm3507 = vweird.f32 %v3413
    %vm3508 = vweird.f32 %v3501
    %vm3509 = vmor %vm3507, %vm3508
    %v3510 = vsel %vm3509, %v3501, %v3506
    %v3511 = vrsqrt.pop %v3414
    %v3512 = vmul.f32 %v3511, %v3414
    %v3513 = vmul.f32 %v3512, %v3511
    %v3514 = vmul.f32 0.5, %v3513
    %v3515 = vsub.f32 1.5, %v3514
    %v3516 = vmul.f32 %v3511, %v3515
    %vm3517 = vweird.f32 %v3414
    %vm3518 = vweird.f32 %v3511
    %vm3519 = vmor %vm3517, %vm3518
    %v3520 = vsel %vm3519, %v3511, %v3516
    %v3521 = vrsqrt.pop %v3415
    %v3522 = vmul.f32 %v3521, %v3415
    %v3523 = vmul.f32 %v3522, %v3521
    %v3524 = vmul.f32 0.5, %v3523
    %v3525 = vsub.f32 1.5, %v3524
    %v3526 = vmul.f32 %v3521, %v3525
    %vm3527 = vweird.f32 %v3415
    %vm3528 = vweird.f32 %v3521
    %vm3529 = vmor %vm3527, %vm3528
    %v3530 = vsel %vm3529, %v3521, %v3526
    %v3531 = vrsqrt.pop %v3416
    %v3532 = vmul.f32 %v3531, %v3416
    %v3533 = vmul.f32 %v3532, %v3531
    %v3534 = vmul.f32 0.5, %v3533
    %v3535 = vsub.f32 1.5, %v3534
    %v3536 = vmul.f32 %v3531, %v3535
    %vm3537 = vweird.f32 %v3416
    %vm3538 = vweird.f32 %v3531
    %vm3539 = vmor %vm3537, %vm3538
    %v3540 = vsel %vm3539, %v3531, %v3536
    %v3541 = vrsqrt.pop %v3417
    %v3542 = vmul.f32 %v3541, %v3417
    %v3543 = vmul.f32 %v3542, %v3541
    %v3544 = vmul.f32 0.5, %v3543
    %v3545 = vsub.f32 1.5, %v3544
    %v3546 = vmul.f32 %v3541, %v3545
    %vm3547 = vweird.f32 %v3417
    %vm3548 = vweird.f32 %v3541
    %vm3549 = vmor %vm3547, %vm3548
    %v3550 = vsel %vm3549, %v3541, %v3546
    %v3551 = vrsqrt.pop %v3418
    %v3552 = vmul.f32 %v3551, %v3418
    %v3553 = vmul.f32 %v3552, %v3551
    %v3554 = vmul.f32 0.5, %v3553
    %v3555 = vsub.f32 1.5, %v3554
    %v3556 = vmul.f32 %v3551, %v3555
    %vm3557 = vweird.f32 %v3418
    %vm3558 = vweird.f32 %v3551
    %vm3559 = vmor %vm3557, %vm3558
    %v3560 = vsel %vm3559, %v3551, %v3556
    %v3561 = vrsqrt.pop %v3419
    %v3562 = vmul.f32 %v3561, %v3419
    %v3563 = vmul.f32 %v3562, %v3561
    %v3564 = vmul.f32 0.5, %v3563
    %v3565 = vsub.f32 1.5, %v3564
    %v3566 = vmul.f32 %v3561, %v3565
    %vm3567 = vweird.f32 %v3419
    %vm3568 = vweird.f32 %v3561
    %vm3569 = vmor %vm3567, %vm3568
    %v3570 = vsel %vm3569, %v3561, %v3566
    %v3571 = vrsqrt.pop %v3420
    %v3572 = vmul.f32 %v3571, %v3420
    %v3573 = vmul.f32 %v3572, %v3571
    %v3574 = vmul.f32 0.5, %v3573
    %v3575 = vsub.f32 1.5, %v3574
    %v3576 = vmul.f32 %v3571, %v3575
    %vm3577 = vweird.f32 %v3420
    %vm3578 = vweird.f32 %v3571
    %vm3579 = vmor %vm3577, %vm3578
    %v3580 = vsel %vm3579, %v3571, %v3576
    %v3581 = vmul.f32 %v3309, %v3430
    %v3582 = vmul.f32 %v3310, %v3440
    %v3583 = vmul.f32 %v3311, %v3450
    %v3584 = vmul.f32 %v3312, %v3460
    %v3585 = vmul.f32 %v3313, %v3470
    %v3586 = vmul.f32 %v3314, %v3480
    %v3587 = vmul.f32 %v3315, %v3490
    %v3588 = vmul.f32 %v3316, %v3500
    %v3589 = vmul.f32 %v3317, %v3510
    %v3590 = vmul.f32 %v3318, %v3520
    %v3591 = vmul.f32 %v3319, %v3530
    %v3592 = vmul.f32 %v3320, %v3540
    %v3593 = vmul.f32 %v3321, %v3550
    %v3594 = vmul.f32 %v3322, %v3560
    %v3595 = vmul.f32 %v3323, %v3570
    %v3596 = vmul.f32 %v3324, %v3580
    %v3598 = vperm.slane %v3243, 0
    %v3600 = vmul.f32 %v3581, %v3598
    %v3601 = vmul.f32 %v3582, %v3598
    %v3602 = vmul.f32 %v3583, %v3598
    %v3603 = vmul.f32 %v3584, %v3598
    %v3604 = vmul.f32 %v3585, %v3598
    %v3605 = vmul.f32 %v3586, %v3598
    %v3606 = vmul.f32 %v3587, %v3598
    %v3607 = vmul.f32 %v3588, %v3598
    %v3608 = vmul.f32 %v3589, %v3598
    %v3609 = vmul.f32 %v3590, %v3598
    %v3610 = vmul.f32 %v3591, %v3598
    %v3611 = vmul.f32 %v3592, %v3598
    %v3612 = vmul.f32 %v3593, %v3598
    %v3613 = vmul.f32 %v3594, %v3598
    %v3614 = vmul.f32 %v3595, %v3598
    %v3615 = vmul.f32 %v3596, %v3598
    %v3617 = vperm.slane %v3244, 0
    %v3619 = vadd.f32 %v3600, %v3617
    %v3620 = vadd.f32 %v3601, %v3617
    %v3621 = vadd.f32 %v3602, %v3617
    %v3622 = vadd.f32 %v3603, %v3617
    %v3623 = vadd.f32 %v3604, %v3617
    %v3624 = vadd.f32 %v3605, %v3617
    %v3625 = vadd.f32 %v3606, %v3617
    %v3626 = vadd.f32 %v3607, %v3617
    %v3627 = vadd.f32 %v3608, %v3617
    %v3628 = vadd.f32 %v3609, %v3617
    %v3629 = vadd.f32 %v3610, %v3617
    %v3630 = vadd.f32 %v3611, %v3617
    %v3631 = vadd.f32 %v3612, %v3617
    %v3632 = vadd.f32 %v3613, %v3617
    %v3633 = vadd.f32 %v3614, %v3617
    %v3634 = vadd.f32 %v3615, %v3617
    %v3635 = vsel %vm141, %v3619, -inf
    %v3636 = vrot.slane %v3635, 4
    %v3637 = vmax.f32 %v3635, %v3636
    %v3638 = vrot.slane %v3637, 2
    %v3639 = vmax.f32 %v3637, %v3638
    %v3640 = vrot.slane %v3639, 1
    %v3641 = vmax.f32 %v3639, %v3640
    %v3642 = vsel %vm141, %v3620, -inf
    %v3643 = vrot.slane %v3642, 4
    %v3644 = vmax.f32 %v3642, %v3643
    %v3645 = vrot.slane %v3644, 2
    %v3646 = vmax.f32 %v3644, %v3645
    %v3647 = vrot.slane %v3646, 1
    %v3648 = vmax.f32 %v3646, %v3647
    %v3649 = vsel %vm141, %v3621, -inf
    %v3650 = vrot.slane %v3649, 4
    %v3651 = vmax.f32 %v3649, %v3650
    %v3652 = vrot.slane %v3651, 2
    %v3653 = vmax.f32 %v3651, %v3652
    %v3654 = vrot.slane %v3653, 1
    %v3655 = vmax.f32 %v3653, %v3654
    %v3656 = vsel %vm141, %v3622, -inf
    %v3657 = vrot.slane %v3656, 4
    %v3658 = vmax.f32 %v3656, %v3657
    %v3659 = vrot.slane %v3658, 2
    %v3660 = vmax.f32 %v3658, %v3659
    %v3661 = vrot.slane %v3660, 1
    %v3662 = vmax.f32 %v3660, %v3661
    %v3663 = vsel %vm141, %v3623, -inf
    %v3664 = vrot.slane %v3663, 4
    %v3665 = vmax.f32 %v3663, %v3664
    %v3666 = vrot.slane %v3665, 2
    %v3667 = vmax.f32 %v3665, %v3666
    %v3668 = vrot.slane %v3667, 1
    %v3669 = vmax.f32 %v3667, %v3668
    %v3670 = vsel %vm141, %v3624, -inf
    %v3671 = vrot.slane %v3670, 4
    %v3672 = vmax.f32 %v3670, %v3671
    %v3673 = vrot.slane %v3672, 2
    %v3674 = vmax.f32 %v3672, %v3673
    %v3675 = vrot.slane %v3674, 1
    %v3676 = vmax.f32 %v3674, %v3675
    %v3677 = vsel %vm141, %v3625, -inf
    %v3678 = vrot.slane %v3677, 4
    %v3679 = vmax.f32 %v3677, %v3678
    %v3680 = vrot.slane %v3679, 2
    %v3681 = vmax.f32 %v3679, %v3680
    %v3682 = vrot.slane %v3681, 1
    %v3683 = vmax.f32 %v3681, %v3682
    %v3684 = vsel %vm141, %v3626, -inf
    %v3685 = vrot.slane %v3684, 4
    %v3686 = vmax.f32 %v3684, %v3685
    %v3687 = vrot.slane %v3686, 2
    %v3688 = vmax.f32 %v3686, %v3687
    %v3689 = vrot.slane %v3688, 1
    %v3690 = vmax.f32 %v3688, %v3689
    %v3691 = vsel %vm141, %v3627, -inf
    %v3692 = vrot.slane %v3691, 4
    %v3693 = vmax.f32 %v3691, %v3692
    %v3694 = vrot.slane %v3693, 2
    %v3695 = vmax.f32 %v3693, %v3694
    %v3696 = vrot.slane %v3695, 1
    %v3697 = vmax.f32 %v3695, %v3696
    %v3698 = vsel %vm141, %v3628, -inf
    %v3699 = vrot.slane %v3698, 4
    %v3700 = vmax.f32 %v3698, %v3699
    %v3701 = vrot.slane %v3700, 2
    %v3702 = vmax.f32 %v3700, %v3701
    %v3703 = vrot.slane %v3702, 1
    %v3704 = vmax.f32 %v3702, %v3703
    %v3705 = vsel %vm141, %v3629, -inf
    %v3706 = vrot.slane %v3705, 4
    %v3707 = vmax.f32 %v3705, %v3706
    %v3708 = vrot.slane %v3707, 2
    %v3709 = vmax.f32 %v3707, %v3708
    %v3710 = vrot.slane %v3709, 1
    %v3711 = vmax.f32 %v3709, %v3710
    %v3712 = vsel %vm141, %v3630, -inf
    %v3713 = vrot.slane %v3712, 4
    %v3714 = vmax.f32 %v3712, %v3713
    %v3715 = vrot.slane %v3714, 2
    %v3716 = vmax.f32 %v3714, %v3715
    %v3717 = vrot.slane %v3716, 1
    %v3718 = vmax.f32 %v3716, %v3717
    %v3719 = vsel %vm141, %v3631, -inf
    %v3720 = vrot.slane %v3719, 4
    %v3721 = vmax.f32 %v3719, %v3720
    %v3722 = vrot.slane %v3721, 2
    %v3723 = vmax.f32 %v3721, %v3722
    %v3724 = vrot.slane %v3723, 1
    %v3725 = vmax.f32 %v3723, %v3724
    %v3726 = vsel %vm141, %v3632, -inf
    %v3727 = vrot.slane %v3726, 4
    %v3728 = vmax.f32 %v3726, %v3727
    %v3729 = vrot.slane %v3728, 2
    %v3730 = vmax.f32 %v3728, %v3729
    %v3731 = vrot.slane %v3730, 1
    %v3732 = vmax.f32 %v3730, %v3731
    %v3733 = vsel %vm141, %v3633, -inf
    %v3734 = vrot.slane %v3733, 4
    %v3735 = vmax.f32 %v3733, %v3734
    %v3736 = vrot.slane %v3735, 2
    %v3737 = vmax.f32 %v3735, %v3736
    %v3738 = vrot.slane %v3737, 1
    %v3739 = vmax.f32 %v3737, %v3738
    %v3740 = vsel %vm141, %v3634, -inf
    %v3741 = vrot.slane %v3740, 4
    %v3742 = vmax.f32 %v3740, %v3741
    %v3743 = vrot.slane %v3742, 2
    %v3744 = vmax.f32 %v3742, %v3743
    %v3745 = vrot.slane %v3744, 1
    %v3746 = vmax.f32 %v3744, %v3745
    %vm3763 = vcmask 1041409
    %v3764 = vsel %vm3763, %v3648, %v3641
    %vm3765 = vcmask 1042434
    %v3766 = vsel %vm3765, %v3655, %v3764
    %vm3767 = vcmask 1043459
    %v3768 = vsel %vm3767, %v3662, %v3766
    %vm3769 = vcmask 1044484
    %v3770 = vsel %vm3769, %v3669, %v3768
    %vm3771 = vcmask 1045509
    %v3772 = vsel %vm3771, %v3676, %v3770
    %vm3773 = vcmask 1046534
    %v3774 = vsel %vm3773, %v3683, %v3772
    %vm3775 = vcmask 1047559
    %v3776 = vsel %vm3775, %v3690, %v3774
    %v3777 = vsel %vm3763, %v3704, %v3697
    %v3778 = vsel %vm3765, %v3711, %v3777
    %v3779 = vsel %vm3767, %v3718, %v3778
    %v3780 = vsel %vm3769, %v3725, %v3779
    %v3781 = vsel %vm3771, %v3732, %v3780
    %v3782 = vsel %vm3773, %v3739, %v3781
    %v3783 = vsel %vm3775, %v3746, %v3782
    %3786 = vst.msk [vmem:[#allocation5] sm:$0xff] %vm141, %v3776
    %3787 = vst.msk [vmem:[#allocation5 + $0x8] sm:$0xff] %vm141, %v3783
    // Predicated region
    $region62: #{tpu_custom_call.1} parent=1 // pred_check
      _
    $region63: #{tpu_custom_call.1} parent=1 // pred_check_branch
      %3789 = sbr.rel (0) target = $region65
    $region64: #{tpu_custom_call.1} parent=1 // pred_region
      %3791 = vsyncadd [#allocation4], 0
      %s3792 = sshll.u32 [#allocation5], 4
      %s3793 = int_to_ptr.vmem [resolvable:$true] %s3792
      %s3794 = sshll.u32 %s14, 4
      %s3795 = int_to_ptr.hbm [resolvable:$true] %s3794
      %3800 = dma.vmem_to_hbm [thread:$0]  %s3793, 256, %s3795, [#allocation4], 128, 128, 8
    $region65: #{tpu_custom_call.1} parent=1 // pred_fallthru
      _
    // Predicated region
    $region66: #{tpu_custom_call.1} parent=1 // pred_check
      _
    $region67: #{tpu_custom_call.1} parent=1 // pred_check_branch
      %3802 = sbr.rel (0) target = $region69
    $region68: #{tpu_custom_call.1} parent=1 // pred_region
      %3804 = dma.done [#allocation4], 256
    $region69: #{tpu_custom_call.1} parent=1 // pred_fallthru
      _
    %3805 = vsyncpa [#allocation3], 1
    %3806 = vsyncpa [#allocation4], 1

</llo_original>
